<compile_context>
chip_gen: v5e
topology: v5e:2x2
jax: 0.10.0
libtpu: 0.0.40
codegen_flags: <defaults>
</compile_context>

<pallas_src>
import jax
import jax.numpy as jnp
from jax.experimental import pallas as pl

# ---------------- hyperparameters (module defaults, small sizes) -------------
N_FEATURES = 4          # n_features
WINDOW = 8              # window_size
OUT_DIM = 4             # out_dim
H_DIM = 128             # h_dim
GRU_HID = 160           # gru_hid_dim (LSTM hidden size inside Encoder)
Z_DIM = 16              # z_dim
KERNEL_SIZE = 7         # ConvLayer kernel size
ALPHA = 0.2             # LeakyReLU negative slope in the GAT layer
PAD = (KERNEL_SIZE - 1) // 2


# -----------------------------------------------------------------------------
# Single fused kernel: conv + feature-GAT + LSTM + encode + decode + disc
# -----------------------------------------------------------------------------
def _vae_fused_kernel(
        # ---- inputs
        x_ref, eps_ref,
        convw_ref, convb_ref,
        gatl_ref, gatr_ref, gatbl_ref, gata_ref, gatbias_ref,
        wihx_ref, wihh_ref, whh_ref, lstmb_ref,
        fc1w_ref, fc1b_ref, fc2w_ref, fc2b_ref, fc3w_ref, fc3b_ref,
        w4dec_ref, b4t_ref, w5blk_ref, b5t_ref,
        d1w_ref, d1b_ref, d2w_ref, d2b_ref,
        # ---- outputs
        mu_ref, lv_ref, xrec_ref, xdisc_ref):
    B = x_ref.shape[0]
    H = GRU_HID

    convw = convw_ref[...]          # (K*F, F)   im2col conv weight
    convb = convb_ref[...]          # (1, F)
    gatl = gatl_ref[...]            # (W, 2W)    lin weight, left (v_i) half, pre-T
    gatr = gatr_ref[...]            # (W, 2W)    lin weight, right (v_j) half, pre-T
    gatbl = gatbl_ref[...]          # (1, 2W)    lin bias
    gata = gata_ref[...]            # (1, 2W)    attention vector a
    gatbias = gatbias_ref[...]      # (F, F)
    wihx = wihx_ref[...]            # (F, 4H)    W_ih^T rows multiplying conv part
    wihh = wihh_ref[...]            # (F, 4H)    W_ih^T rows multiplying GAT part

    pad_zeros = jnp.zeros((PAD, N_FEATURES), jnp.float32)

    # Whole batch handled in one kernel invocation (no grid); B is tiny and
    # static so the per-sample conv/GAT stage is a fully unrolled Python loop.
    xproj = []                      # hoisted LSTM input projections, each (W, 4H)
    for b in range(B):
        xb = x_ref[b]                                            # (W, F)

        # --- ConvLayer: Conv1d(F, F, K), 'same' padding + ReLU as ONE im2col matmul
        xp = jnp.concatenate([pad_zeros, xb, pad_zeros], axis=0)  # (W+K-1, F)
        cols = jnp.concatenate(
            [xp[k:k + WINDOW, :] for k in range(KERNEL_SIZE)], axis=1)  # (W, K*F)
        xc = jnp.maximum(
            jnp.dot(cols, convw, preferred_element_type=jnp.float32) + convb, 0.0)

        # --- FeatureAttentionLayer (GATv2 variant, use_bias=True)
        xT = xc.T                                                # (F, W)
        L = jnp.dot(xT, gatl, preferred_element_type=jnp.float32)   # (F, 2W)
        R = jnp.dot(xT, gatr, preferred_element_type=jnp.float32)   # (F, 2W)
        A = L[:, None, :] + R[None, :, :] + gatbl                # (F, F, 2W)
        A = jnp.where(A >= 0.0, A, ALPHA * A)                    # LeakyReLU
        e = jnp.sum(A * gata, axis=-1) + gatbias                 # (F, F)
        e = e - jnp.max(e, axis=-1, keepdims=True)
        pe = jnp.exp(e)
        attn = pe / jnp.sum(pe, axis=-1, keepdims=True)          # softmax(dim=-1)
        # TODO(synk): attention dropout / nn.Dropout are identity in eval mode.
        hfeat = jax.nn.sigmoid(
            jnp.dot(attn, xT, preferred_element_type=jnp.float32)).T   # (W, F)

        # --- LSTM input projection hoisted out of the time loop, 4 gates fused.
        # h_cat = concat([xc, hfeat], -1); x_proj = h_cat @ W_ih^T split into 2 dots.
        xproj.append(jnp.dot(xc, wihx, preferred_element_type=jnp.float32)
                     + jnp.dot(hfeat, wihh, preferred_element_type=jnp.float32))

    # --- LSTM recurrence: one fused (B,H) x (H,4H) matmul per timestep
    whh = whh_ref[...]              # (H, 4H)  pre-transposed, gate-concatenated
    bg = lstmb_ref[...]             # (1, 4H)  b_ih + b_hh, gate-concatenated
    h = jnp.zeros((B, H), jnp.float32)
    c = jnp.zeros((B, H), jnp.float32)
    for t in range(WINDOW):                                      # static unroll
        gx = jnp.concatenate([xproj[b][t:t + 1, :] for b in range(B)], axis=0)  # (B, 4H)
        gates = gx + jnp.dot(h, whh, preferred_element_type=jnp.float32) + bg
        i_g = jax.nn.sigmoid(gates[:, 0:H])                      # gate order i,f,g,o
        f_g = jax.nn.sigmoid(gates[:, H:2 * H])
        g_g = jnp.tanh(gates[:, 2 * H:3 * H])
        o_g = jax.nn.sigmoid(gates[:, 3 * H:4 * H])
        c = f_g * c + i_g * g_g
        h = o_g * jnp.tanh(c)                                    # h_end

    # --- VAE encode head + reparameterization (eps supplied from host)
    h1 = jnp.tanh(jnp.dot(h, fc1w_ref[...],
                          preferred_element_type=jnp.float32) + fc1b_ref[...])
    mu = jnp.dot(h1, fc2w_ref[...], preferred_element_type=jnp.float32) + fc2b_ref[...]
    lv = jnp.dot(h1, fc3w_ref[...], preferred_element_type=jnp.float32) + fc3b_ref[...]
    z = mu + jnp.exp(0.5 * lv) * eps_ref[...]
    mu_ref[...] = mu
    lv_ref[...] = lv

    # --- decoder: z.repeat_interleave(W,1).view(B,W,Z) @ fc4^T folded into w4dec,
    #     per-timestep fc5 folded into a block-diagonal matmul -> lane-dense (B, W*OUT)
    hdec = jnp.maximum(
        jnp.dot(z, w4dec_ref[...], preferred_element_type=jnp.float32) + b4t_ref[...],
        0.0)                                                     # (B, W*H_DIM)
    xrec_ref[...] = jnp.tanh(
        jnp.dot(hdec, w5blk_ref[...], preferred_element_type=jnp.float32) + b5t_ref[...])

    # --- discriminator: Linear, Dropout(=id in eval), ReLU, Linear, Sigmoid
    hd = jnp.maximum(
        jnp.dot(z, d1w_ref[...], preferred_element_type=jnp.float32) + d1b_ref[...], 0.0)
    xdisc_ref[...] = jax.nn.sigmoid(
        jnp.dot(hd, d2w_ref[...], preferred_element_type=jnp.float32) + d2b_ref[...])


# -----------------------------------------------------------------------------
# Parameter init (deterministic, synthetic — shapes follow the module __init__)
# -----------------------------------------------------------------------------
def init_params(key):
    ks = jax.random.split(key, 21)

    def w(k, shape, scale=0.1):
        return (scale * jax.random.normal(k, shape)).astype(jnp.float32)

    p = {}
    # ConvLayer: Conv1d(F, F, K)
    p["conv_w"] = w(ks[0], (N_FEATURES, N_FEATURES, KERNEL_SIZE))
    p["conv_b"] = w(ks[1], (N_FEATURES,))
    # FeatureAttentionLayer (GATv2): lin=Linear(2W, 2W), a=(2W,1), bias=(F,F) zeros
    p["gat_w"] = w(ks[2], (2 * WINDOW, 2 * WINDOW))
    p["gat_b"] = w(ks[3], (2 * WINDOW,))
    p["gat_a"] = w(ks[4], (2 * WINDOW,))
    p["gat_bias"] = jnp.zeros((N_FEATURES, N_FEATURES), jnp.float32)
    # LSTM(2F, GRU_HID): (4, H, in)/(4, H, H) == PyTorch (4H,in)/(4H,H) split by gate
    p["lstm_wih"] = w(ks[5], (4, GRU_HID, 2 * N_FEATURES))
    p["lstm_whh"] = w(ks[6], (4, GRU_HID, GRU_HID))
    p["lstm_b"] = w(ks[7], (4, GRU_HID))          # b_ih + b_hh combined
    # VAE heads
    p["fc1_w"] = w(ks[8], (H_DIM, GRU_HID)); p["fc1_b"] = w(ks[9], (H_DIM,))
    p["fc2_w"] = w(ks[10], (Z_DIM, H_DIM));  p["fc2_b"] = w(ks[11], (Z_DIM,))
    p["fc3_w"] = w(ks[12], (Z_DIM, H_DIM));  p["fc3_b"] = w(ks[13], (Z_DIM,))
    p["fc4_w"] = w(ks[14], (H_DIM, Z_DIM));  p["fc4_b"] = w(ks[15], (H_DIM,))
    p["fc5_w"] = w(ks[16], (OUT_DIM, H_DIM)); p["fc5_b"] = w(ks[17], (OUT_DIM,))
    # discriminator
    p["d1_w"] = w(ks[18], (H_DIM, Z_DIM)); p["d1_b"] = jnp.zeros((H_DIM,), jnp.float32)
    p["d2_w"] = w(ks[19], (N_FEATURES, H_DIM)); p["d2_b"] = w(ks[20], (N_FEATURES,))
    return p


# -----------------------------------------------------------------------------
# One-time host-side weight preparation (pre-transpose / gate-fuse / fold)
# -----------------------------------------------------------------------------
def prepare_params(p):
    prep = {}
    # ConvLayer: (F_out, F_in, K) -> im2col weight (K*F_in, F_out)
    prep["conv_w"] = jnp.transpose(p["conv_w"], (2, 1, 0)).reshape(
        KERNEL_SIZE * N_FEATURES, N_FEATURES)
    prep["conv_b"] = p["conv_b"].reshape(1, -1)
    # GAT: split Linear(2W,2W) along its input dim (v_i | v_j) and pre-transpose
    prep["gat_l"] = p["gat_w"][:, :WINDOW].T             # (W, 2W)
    prep["gat_r"] = p["gat_w"][:, WINDOW:].T             # (W, 2W)
    prep["gat_blin"] = p["gat_b"].reshape(1, -1)
    prep["gat_a"] = p["gat_a"].reshape(1, -1)
    prep["gat_bias"] = p["gat_bias"]
    # LSTM: pre-transpose + concatenate gates (i,f,g,o) along the output dim
    wih_t = jnp.concatenate([p["lstm_wih"][g].T for g in range(4)], axis=1)   # (2F, 4H)
    prep["wih_x"] = wih_t[:N_FEATURES]                   # rows hitting conv output
    prep["wih_h"] = wih_t[N_FEATURES:]                   # rows hitting GAT output
    prep["whh"] = jnp.concatenate([p["lstm_whh"][g].T for g in range(4)], axis=1)  # (H, 4H)
    prep["lstm_b"] = jnp.concatenate(
        [p["lstm_b"][g] for g in range(4)], axis=0).reshape(1, -1)            # (1, 4H)
    # VAE heads (pre-transposed so kernels do x @ W)
    prep["fc1_w"] = p["fc1_w"].T; prep["fc1_b"] = p["fc1_b"].reshape(1, -1)
    prep["fc2_w"] = p["fc2_w"].T; prep["fc2_b"] = p["fc2_b"].reshape(1, -1)
    prep["fc3_w"] = p["fc3_w"].T; prep["fc3_b"] = p["fc3_b"].reshape(1, -1)
    # decoder: fold z.repeat_interleave(window,1).view(B,W,Z) @ fc4^T into one matmul.
    # z_exp[b,t,d] = z[b, (t*Z + d)//W]  ->  w4dec[j, t*H+k] = sum_{d: idx=j} fc4^T[d,k]
    w4t = p["fc4_w"].T                                   # (Z, H_DIM)
    blocks = []
    for t in range(WINDOW):
        idx = (t * Z_DIM + jnp.arange(Z_DIM)) // WINDOW  # source z index per decoded dim
        onehot = (jnp.arange(Z_DIM)[:, None] == idx[None, :]).astype(jnp.float32)
        blocks.append(onehot @ w4t)                      # (Z, H_DIM)
    prep["w4dec"] = jnp.concatenate(blocks, axis=1)      # (Z, W*H_DIM)
    prep["b4t"] = jnp.tile(p["fc4_b"], WINDOW).reshape(1, -1)
    # fc5 applied independently per timestep -> block-diagonal weight (W*H, W*OUT)
    w5t = p["fc5_w"].T                                   # (H_DIM, OUT)
    w5blk = jnp.zeros((WINDOW * H_DIM, WINDOW * OUT_DIM), jnp.float32)
    for t in range(WINDOW):
        w5blk = w5blk.at[t * H_DIM:(t + 1) * H_DIM,
                         t * OUT_DIM:(t + 1) * OUT_DIM].set(w5t)
    prep["w5blk"] = w5blk
    prep["b5t"] = jnp.tile(p["fc5_b"], WINDOW).reshape(1, -1)
    # discriminator
    prep["d1_w"] = p["d1_w"].T; prep["d1_b"] = p["d1_b"].reshape(1, -1)
    prep["d2_w"] = p["d2_w"].T; prep["d2_b"] = p["d2_b"].reshape(1, -1)
    return prep


# -----------------------------------------------------------------------------
# Forward: one pallas_call, tiny reshape of x_rec outside the kernel
# -----------------------------------------------------------------------------
def vae_forward(prep, x_pos, eps):
    B = x_pos.shape[0]
    mu, log_var, xrec_flat, x_disc = pl.pallas_call(
        _vae_fused_kernel,
        out_shape=(
            jax.ShapeDtypeStruct((B, Z_DIM), jnp.float32),              # mu
            jax.ShapeDtypeStruct((B, Z_DIM), jnp.float32),              # log_var
            jax.ShapeDtypeStruct((B, WINDOW * OUT_DIM), jnp.float32),   # x_rec (flat)
            jax.ShapeDtypeStruct((B, N_FEATURES), jnp.float32),         # x_disc
        ),
    )(x_pos, eps,
      prep["conv_w"], prep["conv_b"],
      prep["gat_l"], prep["gat_r"], prep["gat_blin"], prep["gat_a"], prep["gat_bias"],
      prep["wih_x"], prep["wih_h"], prep["whh"], prep["lstm_b"],
      prep["fc1_w"], prep["fc1_b"], prep["fc2_w"], prep["fc2_b"],
      prep["fc3_w"], prep["fc3_b"],
      prep["w4dec"], prep["b4t"], prep["w5blk"], prep["b5t"],
      prep["d1_w"], prep["d1_b"], prep["d2_w"], prep["d2_b"])
    x_rec = xrec_flat.reshape(B, WINDOW, OUT_DIM)
    # x_neg is None -> (mu_pos, log_var_pos, x_pos_rec, x_disc_pos, None)
    return mu, log_var, x_rec, x_disc, None


if __name__ == "__main__":
    key = jax.random.PRNGKey(0)
    pkey, xkey, ekey = jax.random.split(key, 3)
    params = init_params(pkey)
    prepared = prepare_params(params)      # host-side weight prep, done once

    batch = 2
    x_pos = jax.random.normal(xkey, (batch, WINDOW, N_FEATURES), jnp.float32)
    # TODO(synk): PyTorch draws eps with randn_like inside forward; here it is
    # generated deterministically on the host and passed in.
    eps = jax.random.normal(ekey, (batch, Z_DIM), jnp.float32)

    fwd = jax.jit(vae_forward)
    mu, log_var, x_rec, x_disc, _ = fwd(prepared, x_pos, eps)
    jax.block_until_ready((mu, log_var, x_rec, x_disc))

    assert mu.shape == (batch, Z_DIM)
    assert log_var.shape == (batch, Z_DIM)
    assert x_rec.shape == (batch, WINDOW, OUT_DIM)
    assert x_disc.shape == (batch, N_FEATURES)
    print("KERNEL_OK")
</pallas_src>

<mosaic_0001>
module attributes {stable_mosaic.version = 11 : i64} {
  func.func @_vae_fused_kernel(%arg0: memref<2x8x4xf32, #tpu.memory_space<vmem>>, %arg1: memref<2x16xf32, #tpu.memory_space<vmem>>, %arg2: memref<28x4xf32, #tpu.memory_space<vmem>>, %arg3: memref<1x4xf32, #tpu.memory_space<vmem>>, %arg4: memref<8x16xf32, #tpu.memory_space<vmem>>, %arg5: memref<8x16xf32, #tpu.memory_space<vmem>>, %arg6: memref<1x16xf32, #tpu.memory_space<vmem>>, %arg7: memref<1x16xf32, #tpu.memory_space<vmem>>, %arg8: memref<4x4xf32, #tpu.memory_space<vmem>>, %arg9: memref<4x640xf32, #tpu.memory_space<vmem>>, %arg10: memref<4x640xf32, #tpu.memory_space<vmem>>, %arg11: memref<160x640xf32, #tpu.memory_space<vmem>>, %arg12: memref<1x640xf32, #tpu.memory_space<vmem>>, %arg13: memref<160x128xf32, #tpu.memory_space<vmem>>, %arg14: memref<1x128xf32, #tpu.memory_space<vmem>>, %arg15: memref<128x16xf32, #tpu.memory_space<vmem>>, %arg16: memref<1x16xf32, #tpu.memory_space<vmem>>, %arg17: memref<128x16xf32, #tpu.memory_space<vmem>>, %arg18: memref<1x16xf32, #tpu.memory_space<vmem>>, %arg19: memref<16x1024xf32, #tpu.memory_space<vmem>>, %arg20: memref<1x1024xf32, #tpu.memory_space<vmem>>, %arg21: memref<1024x32xf32, #tpu.memory_space<vmem>>, %arg22: memref<1x32xf32, #tpu.memory_space<vmem>>, %arg23: memref<16x128xf32, #tpu.memory_space<vmem>>, %arg24: memref<1x128xf32, #tpu.memory_space<vmem>>, %arg25: memref<128x4xf32, #tpu.memory_space<vmem>>, %arg26: memref<1x4xf32, #tpu.memory_space<vmem>>, %arg27: memref<2x16xf32, #tpu.memory_space<vmem>>, %arg28: memref<2x16xf32, #tpu.memory_space<vmem>>, %arg29: memref<2x32xf32, #tpu.memory_space<vmem>>, %arg30: memref<2x4xf32, #tpu.memory_space<vmem>>) attributes {dimension_semantics = [], scalar_prefetch = 0 : i64, scratch_operands = 0 : i64, tpu.core_type = #tpu.core_type<tc>} {
    %c0 = arith.constant 0 : index
    %c0_0 = arith.constant 0 : index
    %0 = vector.load %arg2[%c0, %c0_0] : memref<28x4xf32, #tpu.memory_space<vmem>>, vector<28x4xf32>
    %c0_1 = arith.constant 0 : index
    %c0_2 = arith.constant 0 : index
    %1 = vector.load %arg3[%c0_1, %c0_2] : memref<1x4xf32, #tpu.memory_space<vmem>>, vector<1x4xf32>
    %c0_3 = arith.constant 0 : index
    %c0_4 = arith.constant 0 : index
    %2 = vector.load %arg4[%c0_3, %c0_4] : memref<8x16xf32, #tpu.memory_space<vmem>>, vector<8x16xf32>
    %c0_5 = arith.constant 0 : index
    %c0_6 = arith.constant 0 : index
    %3 = vector.load %arg5[%c0_5, %c0_6] : memref<8x16xf32, #tpu.memory_space<vmem>>, vector<8x16xf32>
    %c0_7 = arith.constant 0 : index
    %c0_8 = arith.constant 0 : index
    %4 = vector.load %arg6[%c0_7, %c0_8] : memref<1x16xf32, #tpu.memory_space<vmem>>, vector<1x16xf32>
    %c0_9 = arith.constant 0 : index
    %c0_10 = arith.constant 0 : index
    %5 = vector.load %arg7[%c0_9, %c0_10] : memref<1x16xf32, #tpu.memory_space<vmem>>, vector<1x16xf32>
    %c0_11 = arith.constant 0 : index
    %c0_12 = arith.constant 0 : index
    %6 = vector.load %arg8[%c0_11, %c0_12] : memref<4x4xf32, #tpu.memory_space<vmem>>, vector<4x4xf32>
    %c0_13 = arith.constant 0 : index
    %c0_14 = arith.constant 0 : index
    %7 = vector.load %arg9[%c0_13, %c0_14] : memref<4x640xf32, #tpu.memory_space<vmem>>, vector<4x640xf32>
    %c0_15 = arith.constant 0 : index
    %c0_16 = arith.constant 0 : index
    %8 = vector.load %arg10[%c0_15, %c0_16] : memref<4x640xf32, #tpu.memory_space<vmem>>, vector<4x640xf32>
    %cst = arith.constant 0.000000e+00 : f32
    %9 = vector.broadcast %cst : f32 to vector<3x4xf32>
    %c0_17 = arith.constant 0 : index
    %c0_18 = arith.constant 0 : index
    %c0_19 = arith.constant 0 : index
    %10 = vector.load %arg0[%c0_17, %c0_18, %c0_19] : memref<2x8x4xf32, #tpu.memory_space<vmem>>, vector<1x8x4xf32>
    %11 = vector.shape_cast %10 : vector<1x8x4xf32> to vector<8x4xf32>
    %12 = tpu.concatenate %9, %11, %9 in 0 : vector<3x4xf32>, vector<8x4xf32>, vector<3x4xf32> -> vector<14x4xf32>
    %13 = vector.extract_strided_slice %12 {offsets = [0, 0], sizes = [8, 4], strides = [1, 1]} : vector<14x4xf32> to vector<8x4xf32>
    %14 = vector.extract_strided_slice %12 {offsets = [1, 0], sizes = [8, 4], strides = [1, 1]} : vector<14x4xf32> to vector<8x4xf32>
    %15 = vector.extract_strided_slice %12 {offsets = [2, 0], sizes = [8, 4], strides = [1, 1]} : vector<14x4xf32> to vector<8x4xf32>
    %16 = vector.extract_strided_slice %12 {offsets = [3, 0], sizes = [8, 4], strides = [1, 1]} : vector<14x4xf32> to vector<8x4xf32>
    %17 = vector.extract_strided_slice %12 {offsets = [4, 0], sizes = [8, 4], strides = [1, 1]} : vector<14x4xf32> to vector<8x4xf32>
    %18 = vector.extract_strided_slice %12 {offsets = [5, 0], sizes = [8, 4], strides = [1, 1]} : vector<14x4xf32> to vector<8x4xf32>
    %19 = vector.extract_strided_slice %12 {offsets = [6, 0], sizes = [8, 4], strides = [1, 1]} : vector<14x4xf32> to vector<8x4xf32>
    %20 = tpu.concatenate %13, %14, %15, %16, %17, %18, %19 in 1 : vector<8x4xf32>, vector<8x4xf32>, vector<8x4xf32>, vector<8x4xf32>, vector<8x4xf32>, vector<8x4xf32>, vector<8x4xf32> -> vector<8x28xf32>
    %cst_20 = arith.constant dense<0.000000e+00> : vector<8x4xf32>
    %21 = tpu.matmul %20, %0, %cst_20 {dimension_numbers = #tpu.dot_dimension_numbers<[1], [0], [0], [1], [0, 0, 1, 1], [], []>} : vector<8x28xf32>, vector<28x4xf32>, vector<8x4xf32> -> vector<8x4xf32>
    %22 = vector.broadcast %1 : vector<1x4xf32> to vector<8x4xf32>
    %23 = arith.addf %21, %22 : vector<8x4xf32>
    %cst_21 = arith.constant 0.000000e+00 : f32
    %24 = vector.broadcast %cst_21 : f32 to vector<8x4xf32>
    %25 = arith.maximumf %23, %24 : vector<8x4xf32>
    %26 = tpu.transpose %25, [1, 0] : vector<8x4xf32> -> vector<4x8xf32>
    %cst_22 = arith.constant dense<0.000000e+00> : vector<4x16xf32>
    %27 = tpu.matmul %26, %2, %cst_22 {dimension_numbers = #tpu.dot_dimension_numbers<[1], [0], [0], [1], [0, 0, 1, 1], [], []>} : vector<4x8xf32>, vector<8x16xf32>, vector<4x16xf32> -> vector<4x16xf32>
    %cst_23 = arith.constant dense<0.000000e+00> : vector<4x16xf32>
    %28 = tpu.matmul %26, %3, %cst_23 {dimension_numbers = #tpu.dot_dimension_numbers<[1], [0], [0], [1], [0, 0, 1, 1], [], []>} : vector<4x8xf32>, vector<8x16xf32>, vector<4x16xf32> -> vector<4x16xf32>
    %29 = vector.shape_cast %27 : vector<4x16xf32> to vector<4x1x16xf32>
    %30 = vector.shape_cast %28 : vector<4x16xf32> to vector<1x4x16xf32>
    %31 = vector.broadcast %29 : vector<4x1x16xf32> to vector<4x4x16xf32>
    %32 = vector.broadcast %30 : vector<1x4x16xf32> to vector<4x4x16xf32>
    %33 = arith.addf %31, %32 : vector<4x4x16xf32>
    %34 = vector.shape_cast %4 : vector<1x16xf32> to vector<1x1x16xf32>
    %35 = vector.broadcast %34 : vector<1x1x16xf32> to vector<4x4x16xf32>
    %36 = arith.addf %33, %35 : vector<4x4x16xf32>
    %cst_24 = arith.constant 0.000000e+00 : f32
    %37 = vector.broadcast %cst_24 : f32 to vector<4x4x16xf32>
    %38 = arith.cmpf oge, %36, %37 : vector<4x4x16xf32>
    %cst_25 = arith.constant 2.000000e-01 : f32
    %39 = vector.broadcast %cst_25 : f32 to vector<4x4x16xf32>
    %40 = arith.mulf %39, %36 : vector<4x4x16xf32>
    %41 = arith.select %38, %36, %40 : vector<4x4x16xi1>, vector<4x4x16xf32>
    %42 = vector.shape_cast %5 : vector<1x16xf32> to vector<1x1x16xf32>
    %43 = vector.broadcast %42 : vector<1x1x16xf32> to vector<4x4x16xf32>
    %44 = arith.mulf %41, %43 : vector<4x4x16xf32>
    %cst_26 = arith.constant dense<0.000000e+00> : vector<4x4xf32>
    %45 = vector.multi_reduction <add>, %44, %cst_26 [2] : vector<4x4x16xf32> to vector<4x4xf32>
    %46 = arith.addf %45, %6 : vector<4x4xf32>
    %cst_27 = arith.constant dense<0xFF800000> : vector<4xf32>
    %47 = vector.multi_reduction <maximumf>, %46, %cst_27 [1] : vector<4x4xf32> to vector<4xf32>
    %48 = vector.shape_cast %47 : vector<4xf32> to vector<4x1xf32>
    %49 = vector.broadcast %48 : vector<4x1xf32> to vector<4x4xf32>
    %50 = arith.subf %46, %49 : vector<4x4xf32>
    %51 = math.exp %50 : vector<4x4xf32>
    %cst_28 = arith.constant dense<0.000000e+00> : vector<4xf32>
    %52 = vector.multi_reduction <add>, %51, %cst_28 [1] : vector<4x4xf32> to vector<4xf32>
    %53 = vector.shape_cast %52 : vector<4xf32> to vector<4x1xf32>
    %54 = vector.broadcast %53 : vector<4x1xf32> to vector<4x4xf32>
    %55 = arith.divf %51, %54 : vector<4x4xf32>
    %cst_29 = arith.constant dense<0.000000e+00> : vector<4x8xf32>
    %56 = tpu.matmul %55, %26, %cst_29 {dimension_numbers = #tpu.dot_dimension_numbers<[1], [0], [0], [1], [0, 0, 1, 1], [], []>} : vector<4x4xf32>, vector<4x8xf32>, vector<4x8xf32> -> vector<4x8xf32>
    %57 = arith.negf %56 : vector<4x8xf32>
    %58 = math.exp %57 : vector<4x8xf32>
    %cst_30 = arith.constant 1.000000e+00 : f32
    %59 = vector.broadcast %cst_30 : f32 to vector<4x8xf32>
    %60 = arith.addf %59, %58 : vector<4x8xf32>
    %61 = arith.divf %59, %60 : vector<4x8xf32>
    %62 = tpu.transpose %61, [1, 0] : vector<4x8xf32> -> vector<8x4xf32>
    %cst_31 = arith.constant dense<0.000000e+00> : vector<8x640xf32>
    %63 = tpu.matmul %25, %7, %cst_31 {dimension_numbers = #tpu.dot_dimension_numbers<[1], [0], [0], [1], [0, 0, 1, 1], [], []>} : vector<8x4xf32>, vector<4x640xf32>, vector<8x640xf32> -> vector<8x640xf32>
    %cst_32 = arith.constant dense<0.000000e+00> : vector<8x640xf32>
    %64 = tpu.matmul %62, %8, %cst_32 {dimension_numbers = #tpu.dot_dimension_numbers<[1], [0], [0], [1], [0, 0, 1, 1], [], []>} : vector<8x4xf32>, vector<4x640xf32>, vector<8x640xf32> -> vector<8x640xf32>
    %65 = arith.addf %63, %64 : vector<8x640xf32>
    %c1 = arith.constant 1 : index
    %c0_33 = arith.constant 0 : index
    %c0_34 = arith.constant 0 : index
    %66 = vector.load %arg0[%c1, %c0_33, %c0_34] : memref<2x8x4xf32, #tpu.memory_space<vmem>>, vector<1x8x4xf32>
    %67 = vector.shape_cast %66 : vector<1x8x4xf32> to vector<8x4xf32>
    %68 = tpu.concatenate %9, %67, %9 in 0 : vector<3x4xf32>, vector<8x4xf32>, vector<3x4xf32> -> vector<14x4xf32>
    %69 = vector.extract_strided_slice %68 {offsets = [0, 0], sizes = [8, 4], strides = [1, 1]} : vector<14x4xf32> to vector<8x4xf32>
    %70 = vector.extract_strided_slice %68 {offsets = [1, 0], sizes = [8, 4], strides = [1, 1]} : vector<14x4xf32> to vector<8x4xf32>
    %71 = vector.extract_strided_slice %68 {offsets = [2, 0], sizes = [8, 4], strides = [1, 1]} : vector<14x4xf32> to vector<8x4xf32>
    %72 = vector.extract_strided_slice %68 {offsets = [3, 0], sizes = [8, 4], strides = [1, 1]} : vector<14x4xf32> to vector<8x4xf32>
    %73 = vector.extract_strided_slice %68 {offsets = [4, 0], sizes = [8, 4], strides = [1, 1]} : vector<14x4xf32> to vector<8x4xf32>
    %74 = vector.extract_strided_slice %68 {offsets = [5, 0], sizes = [8, 4], strides = [1, 1]} : vector<14x4xf32> to vector<8x4xf32>
    %75 = vector.extract_strided_slice %68 {offsets = [6, 0], sizes = [8, 4], strides = [1, 1]} : vector<14x4xf32> to vector<8x4xf32>
    %76 = tpu.concatenate %69, %70, %71, %72, %73, %74, %75 in 1 : vector<8x4xf32>, vector<8x4xf32>, vector<8x4xf32>, vector<8x4xf32>, vector<8x4xf32>, vector<8x4xf32>, vector<8x4xf32> -> vector<8x28xf32>
    %cst_35 = arith.constant dense<0.000000e+00> : vector<8x4xf32>
    %77 = tpu.matmul %76, %0, %cst_35 {dimension_numbers = #tpu.dot_dimension_numbers<[1], [0], [0], [1], [0, 0, 1, 1], [], []>} : vector<8x28xf32>, vector<28x4xf32>, vector<8x4xf32> -> vector<8x4xf32>
    %78 = vector.broadcast %1 : vector<1x4xf32> to vector<8x4xf32>
    %79 = arith.addf %77, %78 : vector<8x4xf32>
    %cst_36 = arith.constant 0.000000e+00 : f32
    %80 = vector.broadcast %cst_36 : f32 to vector<8x4xf32>
    %81 = arith.maximumf %79, %80 : vector<8x4xf32>
    %82 = tpu.transpose %81, [1, 0] : vector<8x4xf32> -> vector<4x8xf32>
    %cst_37 = arith.constant dense<0.000000e+00> : vector<4x16xf32>
    %83 = tpu.matmul %82, %2, %cst_37 {dimension_numbers = #tpu.dot_dimension_numbers<[1], [0], [0], [1], [0, 0, 1, 1], [], []>} : vector<4x8xf32>, vector<8x16xf32>, vector<4x16xf32> -> vector<4x16xf32>
    %cst_38 = arith.constant dense<0.000000e+00> : vector<4x16xf32>
    %84 = tpu.matmul %82, %3, %cst_38 {dimension_numbers = #tpu.dot_dimension_numbers<[1], [0], [0], [1], [0, 0, 1, 1], [], []>} : vector<4x8xf32>, vector<8x16xf32>, vector<4x16xf32> -> vector<4x16xf32>
    %85 = vector.shape_cast %83 : vector<4x16xf32> to vector<4x1x16xf32>
    %86 = vector.shape_cast %84 : vector<4x16xf32> to vector<1x4x16xf32>
    %87 = vector.broadcast %85 : vector<4x1x16xf32> to vector<4x4x16xf32>
    %88 = vector.broadcast %86 : vector<1x4x16xf32> to vector<4x4x16xf32>
    %89 = arith.addf %87, %88 : vector<4x4x16xf32>
    %90 = vector.shape_cast %4 : vector<1x16xf32> to vector<1x1x16xf32>
    %91 = vector.broadcast %90 : vector<1x1x16xf32> to vector<4x4x16xf32>
    %92 = arith.addf %89, %91 : vector<4x4x16xf32>
    %cst_39 = arith.constant 0.000000e+00 : f32
    %93 = vector.broadcast %cst_39 : f32 to vector<4x4x16xf32>
    %94 = arith.cmpf oge, %92, %93 : vector<4x4x16xf32>
    %cst_40 = arith.constant 2.000000e-01 : f32
    %95 = vector.broadcast %cst_40 : f32 to vector<4x4x16xf32>
    %96 = arith.mulf %95, %92 : vector<4x4x16xf32>
    %97 = arith.select %94, %92, %96 : vector<4x4x16xi1>, vector<4x4x16xf32>
    %98 = vector.shape_cast %5 : vector<1x16xf32> to vector<1x1x16xf32>
    %99 = vector.broadcast %98 : vector<1x1x16xf32> to vector<4x4x16xf32>
    %100 = arith.mulf %97, %99 : vector<4x4x16xf32>
    %cst_41 = arith.constant dense<0.000000e+00> : vector<4x4xf32>
    %101 = vector.multi_reduction <add>, %100, %cst_41 [2] : vector<4x4x16xf32> to vector<4x4xf32>
    %102 = arith.addf %101, %6 : vector<4x4xf32>
    %cst_42 = arith.constant dense<0xFF800000> : vector<4xf32>
    %103 = vector.multi_reduction <maximumf>, %102, %cst_42 [1] : vector<4x4xf32> to vector<4xf32>
    %104 = vector.shape_cast %103 : vector<4xf32> to vector<4x1xf32>
    %105 = vector.broadcast %104 : vector<4x1xf32> to vector<4x4xf32>
    %106 = arith.subf %102, %105 : vector<4x4xf32>
    %107 = math.exp %106 : vector<4x4xf32>
    %cst_43 = arith.constant dense<0.000000e+00> : vector<4xf32>
    %108 = vector.multi_reduction <add>, %107, %cst_43 [1] : vector<4x4xf32> to vector<4xf32>
    %109 = vector.shape_cast %108 : vector<4xf32> to vector<4x1xf32>
    %110 = vector.broadcast %109 : vector<4x1xf32> to vector<4x4xf32>
    %111 = arith.divf %107, %110 : vector<4x4xf32>
    %cst_44 = arith.constant dense<0.000000e+00> : vector<4x8xf32>
    %112 = tpu.matmul %111, %82, %cst_44 {dimension_numbers = #tpu.dot_dimension_numbers<[1], [0], [0], [1], [0, 0, 1, 1], [], []>} : vector<4x4xf32>, vector<4x8xf32>, vector<4x8xf32> -> vector<4x8xf32>
    %113 = arith.negf %112 : vector<4x8xf32>
    %114 = math.exp %113 : vector<4x8xf32>
    %cst_45 = arith.constant 1.000000e+00 : f32
    %115 = vector.broadcast %cst_45 : f32 to vector<4x8xf32>
    %116 = arith.addf %115, %114 : vector<4x8xf32>
    %117 = arith.divf %115, %116 : vector<4x8xf32>
    %118 = tpu.transpose %117, [1, 0] : vector<4x8xf32> -> vector<8x4xf32>
    %cst_46 = arith.constant dense<0.000000e+00> : vector<8x640xf32>
    %119 = tpu.matmul %81, %7, %cst_46 {dimension_numbers = #tpu.dot_dimension_numbers<[1], [0], [0], [1], [0, 0, 1, 1], [], []>} : vector<8x4xf32>, vector<4x640xf32>, vector<8x640xf32> -> vector<8x640xf32>
    %cst_47 = arith.constant dense<0.000000e+00> : vector<8x640xf32>
    %120 = tpu.matmul %118, %8, %cst_47 {dimension_numbers = #tpu.dot_dimension_numbers<[1], [0], [0], [1], [0, 0, 1, 1], [], []>} : vector<8x4xf32>, vector<4x640xf32>, vector<8x640xf32> -> vector<8x640xf32>
    %121 = arith.addf %119, %120 : vector<8x640xf32>
    %c0_48 = arith.constant 0 : index
    %c0_49 = arith.constant 0 : index
    %122 = vector.load %arg11[%c0_48, %c0_49] : memref<160x640xf32, #tpu.memory_space<vmem>>, vector<160x640xf32>
    %c0_50 = arith.constant 0 : index
    %c0_51 = arith.constant 0 : index
    %123 = vector.load %arg12[%c0_50, %c0_51] : memref<1x640xf32, #tpu.memory_space<vmem>>, vector<1x640xf32>
    %cst_52 = arith.constant 0.000000e+00 : f32
    %124 = vector.broadcast %cst_52 : f32 to vector<2x160xf32>
    %cst_53 = arith.constant 0.000000e+00 : f32
    %125 = vector.broadcast %cst_53 : f32 to vector<2x160xf32>
    %126 = vector.extract_strided_slice %65 {offsets = [0, 0], sizes = [1, 640], strides = [1, 1]} : vector<8x640xf32> to vector<1x640xf32>
    %127 = vector.extract_strided_slice %121 {offsets = [0, 0], sizes = [1, 640], strides = [1, 1]} : vector<8x640xf32> to vector<1x640xf32>
    %128 = tpu.concatenate %126, %127 in 0 : vector<1x640xf32>, vector<1x640xf32> -> vector<2x640xf32>
    %cst_54 = arith.constant dense<0.000000e+00> : vector<2x640xf32>
    %129 = tpu.matmul %124, %122, %cst_54 {dimension_numbers = #tpu.dot_dimension_numbers<[1], [0], [0], [1], [0, 0, 1, 1], [], []>} : vector<2x160xf32>, vector<160x640xf32>, vector<2x640xf32> -> vector<2x640xf32>
    %130 = arith.addf %128, %129 : vector<2x640xf32>
    %131 = vector.broadcast %123 : vector<1x640xf32> to vector<2x640xf32>
    %132 = arith.addf %130, %131 : vector<2x640xf32>
    %133 = vector.extract_strided_slice %132 {offsets = [0, 0], sizes = [2, 160], strides = [1, 1]} : vector<2x640xf32> to vector<2x160xf32>
    %134 = arith.negf %133 : vector<2x160xf32>
    %135 = math.exp %134 : vector<2x160xf32>
    %cst_55 = arith.constant 1.000000e+00 : f32
    %136 = vector.broadcast %cst_55 : f32 to vector<2x160xf32>
    %137 = arith.addf %136, %135 : vector<2x160xf32>
    %138 = arith.divf %136, %137 : vector<2x160xf32>
    %139 = vector.extract_strided_slice %132 {offsets = [0, 160], sizes = [2, 160], strides = [1, 1]} : vector<2x640xf32> to vector<2x160xf32>
    %140 = arith.negf %139 : vector<2x160xf32>
    %141 = math.exp %140 : vector<2x160xf32>
    %cst_56 = arith.constant 1.000000e+00 : f32
    %142 = vector.broadcast %cst_56 : f32 to vector<2x160xf32>
    %143 = arith.addf %142, %141 : vector<2x160xf32>
    %144 = arith.divf %142, %143 : vector<2x160xf32>
    %145 = vector.extract_strided_slice %132 {offsets = [0, 320], sizes = [2, 160], strides = [1, 1]} : vector<2x640xf32> to vector<2x160xf32>
    %146 = math.tanh %145 : vector<2x160xf32>
    %147 = vector.extract_strided_slice %132 {offsets = [0, 480], sizes = [2, 160], strides = [1, 1]} : vector<2x640xf32> to vector<2x160xf32>
    %148 = arith.negf %147 : vector<2x160xf32>
    %149 = math.exp %148 : vector<2x160xf32>
    %cst_57 = arith.constant 1.000000e+00 : f32
    %150 = vector.broadcast %cst_57 : f32 to vector<2x160xf32>
    %151 = arith.addf %150, %149 : vector<2x160xf32>
    %152 = arith.divf %150, %151 : vector<2x160xf32>
    %153 = arith.mulf %144, %125 : vector<2x160xf32>
    %154 = arith.mulf %138, %146 : vector<2x160xf32>
    %155 = arith.addf %153, %154 : vector<2x160xf32>
    %156 = math.tanh %155 : vector<2x160xf32>
    %157 = arith.mulf %152, %156 : vector<2x160xf32>
    %158 = vector.extract_strided_slice %65 {offsets = [1, 0], sizes = [1, 640], strides = [1, 1]} : vector<8x640xf32> to vector<1x640xf32>
    %159 = vector.extract_strided_slice %121 {offsets = [1, 0], sizes = [1, 640], strides = [1, 1]} : vector<8x640xf32> to vector<1x640xf32>
    %160 = tpu.concatenate %158, %159 in 0 : vector<1x640xf32>, vector<1x640xf32> -> vector<2x640xf32>
    %cst_58 = arith.constant dense<0.000000e+00> : vector<2x640xf32>
    %161 = tpu.matmul %157, %122, %cst_58 {dimension_numbers = #tpu.dot_dimension_numbers<[1], [0], [0], [1], [0, 0, 1, 1], [], []>} : vector<2x160xf32>, vector<160x640xf32>, vector<2x640xf32> -> vector<2x640xf32>
    %162 = arith.addf %160, %161 : vector<2x640xf32>
    %163 = vector.broadcast %123 : vector<1x640xf32> to vector<2x640xf32>
    %164 = arith.addf %162, %163 : vector<2x640xf32>
    %165 = vector.extract_strided_slice %164 {offsets = [0, 0], sizes = [2, 160], strides = [1, 1]} : vector<2x640xf32> to vector<2x160xf32>
    %166 = arith.negf %165 : vector<2x160xf32>
    %167 = math.exp %166 : vector<2x160xf32>
    %cst_59 = arith.constant 1.000000e+00 : f32
    %168 = vector.broadcast %cst_59 : f32 to vector<2x160xf32>
    %169 = arith.addf %168, %167 : vector<2x160xf32>
    %170 = arith.divf %168, %169 : vector<2x160xf32>
    %171 = vector.extract_strided_slice %164 {offsets = [0, 160], sizes = [2, 160], strides = [1, 1]} : vector<2x640xf32> to vector<2x160xf32>
    %172 = arith.negf %171 : vector<2x160xf32>
    %173 = math.exp %172 : vector<2x160xf32>
    %cst_60 = arith.constant 1.000000e+00 : f32
    %174 = vector.broadcast %cst_60 : f32 to vector<2x160xf32>
    %175 = arith.addf %174, %173 : vector<2x160xf32>
    %176 = arith.divf %174, %175 : vector<2x160xf32>
    %177 = vector.extract_strided_slice %164 {offsets = [0, 320], sizes = [2, 160], strides = [1, 1]} : vector<2x640xf32> to vector<2x160xf32>
    %178 = math.tanh %177 : vector<2x160xf32>
    %179 = vector.extract_strided_slice %164 {offsets = [0, 480], sizes = [2, 160], strides = [1, 1]} : vector<2x640xf32> to vector<2x160xf32>
    %180 = arith.negf %179 : vector<2x160xf32>
    %181 = math.exp %180 : vector<2x160xf32>
    %cst_61 = arith.constant 1.000000e+00 : f32
    %182 = vector.broadcast %cst_61 : f32 to vector<2x160xf32>
    %183 = arith.addf %182, %181 : vector<2x160xf32>
    %184 = arith.divf %182, %183 : vector<2x160xf32>
    %185 = arith.mulf %176, %155 : vector<2x160xf32>
    %186 = arith.mulf %170, %178 : vector<2x160xf32>
    %187 = arith.addf %185, %186 : vector<2x160xf32>
    %188 = math.tanh %187 : vector<2x160xf32>
    %189 = arith.mulf %184, %188 : vector<2x160xf32>
    %190 = vector.extract_strided_slice %65 {offsets = [2, 0], sizes = [1, 640], strides = [1, 1]} : vector<8x640xf32> to vector<1x640xf32>
    %191 = vector.extract_strided_slice %121 {offsets = [2, 0], sizes = [1, 640], strides = [1, 1]} : vector<8x640xf32> to vector<1x640xf32>
    %192 = tpu.concatenate %190, %191 in 0 : vector<1x640xf32>, vector<1x640xf32> -> vector<2x640xf32>
    %cst_62 = arith.constant dense<0.000000e+00> : vector<2x640xf32>
    %193 = tpu.matmul %189, %122, %cst_62 {dimension_numbers = #tpu.dot_dimension_numbers<[1], [0], [0], [1], [0, 0, 1, 1], [], []>} : vector<2x160xf32>, vector<160x640xf32>, vector<2x640xf32> -> vector<2x640xf32>
    %194 = arith.addf %192, %193 : vector<2x640xf32>
    %195 = vector.broadcast %123 : vector<1x640xf32> to vector<2x640xf32>
    %196 = arith.addf %194, %195 : vector<2x640xf32>
    %197 = vector.extract_strided_slice %196 {offsets = [0, 0], sizes = [2, 160], strides = [1, 1]} : vector<2x640xf32> to vector<2x160xf32>
    %198 = arith.negf %197 : vector<2x160xf32>
    %199 = math.exp %198 : vector<2x160xf32>
    %cst_63 = arith.constant 1.000000e+00 : f32
    %200 = vector.broadcast %cst_63 : f32 to vector<2x160xf32>
    %201 = arith.addf %200, %199 : vector<2x160xf32>
    %202 = arith.divf %200, %201 : vector<2x160xf32>
    %203 = vector.extract_strided_slice %196 {offsets = [0, 160], sizes = [2, 160], strides = [1, 1]} : vector<2x640xf32> to vector<2x160xf32>
    %204 = arith.negf %203 : vector<2x160xf32>
    %205 = math.exp %204 : vector<2x160xf32>
    %cst_64 = arith.constant 1.000000e+00 : f32
    %206 = vector.broadcast %cst_64 : f32 to vector<2x160xf32>
    %207 = arith.addf %206, %205 : vector<2x160xf32>
    %208 = arith.divf %206, %207 : vector<2x160xf32>
    %209 = vector.extract_strided_slice %196 {offsets = [0, 320], sizes = [2, 160], strides = [1, 1]} : vector<2x640xf32> to vector<2x160xf32>
    %210 = math.tanh %209 : vector<2x160xf32>
    %211 = vector.extract_strided_slice %196 {offsets = [0, 480], sizes = [2, 160], strides = [1, 1]} : vector<2x640xf32> to vector<2x160xf32>
    %212 = arith.negf %211 : vector<2x160xf32>
    %213 = math.exp %212 : vector<2x160xf32>
    %cst_65 = arith.constant 1.000000e+00 : f32
    %214 = vector.broadcast %cst_65 : f32 to vector<2x160xf32>
    %215 = arith.addf %214, %213 : vector<2x160xf32>
    %216 = arith.divf %214, %215 : vector<2x160xf32>
    %217 = arith.mulf %208, %187 : vector<2x160xf32>
    %218 = arith.mulf %202, %210 : vector<2x160xf32>
    %219 = arith.addf %217, %218 : vector<2x160xf32>
    %220 = math.tanh %219 : vector<2x160xf32>
    %221 = arith.mulf %216, %220 : vector<2x160xf32>
    %222 = vector.extract_strided_slice %65 {offsets = [3, 0], sizes = [1, 640], strides = [1, 1]} : vector<8x640xf32> to vector<1x640xf32>
    %223 = vector.extract_strided_slice %121 {offsets = [3, 0], sizes = [1, 640], strides = [1, 1]} : vector<8x640xf32> to vector<1x640xf32>
    %224 = tpu.concatenate %222, %223 in 0 : vector<1x640xf32>, vector<1x640xf32> -> vector<2x640xf32>
    %cst_66 = arith.constant dense<0.000000e+00> : vector<2x640xf32>
    %225 = tpu.matmul %221, %122, %cst_66 {dimension_numbers = #tpu.dot_dimension_numbers<[1], [0], [0], [1], [0, 0, 1, 1], [], []>} : vector<2x160xf32>, vector<160x640xf32>, vector<2x640xf32> -> vector<2x640xf32>
    %226 = arith.addf %224, %225 : vector<2x640xf32>
    %227 = vector.broadcast %123 : vector<1x640xf32> to vector<2x640xf32>
    %228 = arith.addf %226, %227 : vector<2x640xf32>
    %229 = vector.extract_strided_slice %228 {offsets = [0, 0], sizes = [2, 160], strides = [1, 1]} : vector<2x640xf32> to vector<2x160xf32>
    %230 = arith.negf %229 : vector<2x160xf32>
    %231 = math.exp %230 : vector<2x160xf32>
    %cst_67 = arith.constant 1.000000e+00 : f32
    %232 = vector.broadcast %cst_67 : f32 to vector<2x160xf32>
    %233 = arith.addf %232, %231 : vector<2x160xf32>
    %234 = arith.divf %232, %233 : vector<2x160xf32>
    %235 = vector.extract_strided_slice %228 {offsets = [0, 160], sizes = [2, 160], strides = [1, 1]} : vector<2x640xf32> to vector<2x160xf32>
    %236 = arith.negf %235 : vector<2x160xf32>
    %237 = math.exp %236 : vector<2x160xf32>
    %cst_68 = arith.constant 1.000000e+00 : f32
    %238 = vector.broadcast %cst_68 : f32 to vector<2x160xf32>
    %239 = arith.addf %238, %237 : vector<2x160xf32>
    %240 = arith.divf %238, %239 : vector<2x160xf32>
    %241 = vector.extract_strided_slice %228 {offsets = [0, 320], sizes = [2, 160], strides = [1, 1]} : vector<2x640xf32> to vector<2x160xf32>
    %242 = math.tanh %241 : vector<2x160xf32>
    %243 = vector.extract_strided_slice %228 {offsets = [0, 480], sizes = [2, 160], strides = [1, 1]} : vector<2x640xf32> to vector<2x160xf32>
    %244 = arith.negf %243 : vector<2x160xf32>
    %245 = math.exp %244 : vector<2x160xf32>
    %cst_69 = arith.constant 1.000000e+00 : f32
    %246 = vector.broadcast %cst_69 : f32 to vector<2x160xf32>
    %247 = arith.addf %246, %245 : vector<2x160xf32>
    %248 = arith.divf %246, %247 : vector<2x160xf32>
    %249 = arith.mulf %240, %219 : vector<2x160xf32>
    %250 = arith.mulf %234, %242 : vector<2x160xf32>
    %251 = arith.addf %249, %250 : vector<2x160xf32>
    %252 = math.tanh %251 : vector<2x160xf32>
    %253 = arith.mulf %248, %252 : vector<2x160xf32>
    %254 = vector.extract_strided_slice %65 {offsets = [4, 0], sizes = [1, 640], strides = [1, 1]} : vector<8x640xf32> to vector<1x640xf32>
    %255 = vector.extract_strided_slice %121 {offsets = [4, 0], sizes = [1, 640], strides = [1, 1]} : vector<8x640xf32> to vector<1x640xf32>
    %256 = tpu.concatenate %254, %255 in 0 : vector<1x640xf32>, vector<1x640xf32> -> vector<2x640xf32>
    %cst_70 = arith.constant dense<0.000000e+00> : vector<2x640xf32>
    %257 = tpu.matmul %253, %122, %cst_70 {dimension_numbers = #tpu.dot_dimension_numbers<[1], [0], [0], [1], [0, 0, 1, 1], [], []>} : vector<2x160xf32>, vector<160x640xf32>, vector<2x640xf32> -> vector<2x640xf32>
    %258 = arith.addf %256, %257 : vector<2x640xf32>
    %259 = vector.broadcast %123 : vector<1x640xf32> to vector<2x640xf32>
    %260 = arith.addf %258, %259 : vector<2x640xf32>
    %261 = vector.extract_strided_slice %260 {offsets = [0, 0], sizes = [2, 160], strides = [1, 1]} : vector<2x640xf32> to vector<2x160xf32>
    %262 = arith.negf %261 : vector<2x160xf32>
    %263 = math.exp %262 : vector<2x160xf32>
    %cst_71 = arith.constant 1.000000e+00 : f32
    %264 = vector.broadcast %cst_71 : f32 to vector<2x160xf32>
    %265 = arith.addf %264, %263 : vector<2x160xf32>
    %266 = arith.divf %264, %265 : vector<2x160xf32>
    %267 = vector.extract_strided_slice %260 {offsets = [0, 160], sizes = [2, 160], strides = [1, 1]} : vector<2x640xf32> to vector<2x160xf32>
    %268 = arith.negf %267 : vector<2x160xf32>
    %269 = math.exp %268 : vector<2x160xf32>
    %cst_72 = arith.constant 1.000000e+00 : f32
    %270 = vector.broadcast %cst_72 : f32 to vector<2x160xf32>
    %271 = arith.addf %270, %269 : vector<2x160xf32>
    %272 = arith.divf %270, %271 : vector<2x160xf32>
    %273 = vector.extract_strided_slice %260 {offsets = [0, 320], sizes = [2, 160], strides = [1, 1]} : vector<2x640xf32> to vector<2x160xf32>
    %274 = math.tanh %273 : vector<2x160xf32>
    %275 = vector.extract_strided_slice %260 {offsets = [0, 480], sizes = [2, 160], strides = [1, 1]} : vector<2x640xf32> to vector<2x160xf32>
    %276 = arith.negf %275 : vector<2x160xf32>
    %277 = math.exp %276 : vector<2x160xf32>
    %cst_73 = arith.constant 1.000000e+00 : f32
    %278 = vector.broadcast %cst_73 : f32 to vector<2x160xf32>
    %279 = arith.addf %278, %277 : vector<2x160xf32>
    %280 = arith.divf %278, %279 : vector<2x160xf32>
    %281 = arith.mulf %272, %251 : vector<2x160xf32>
    %282 = arith.mulf %266, %274 : vector<2x160xf32>
    %283 = arith.addf %281, %282 : vector<2x160xf32>
    %284 = math.tanh %283 : vector<2x160xf32>
    %285 = arith.mulf %280, %284 : vector<2x160xf32>
    %286 = vector.extract_strided_slice %65 {offsets = [5, 0], sizes = [1, 640], strides = [1, 1]} : vector<8x640xf32> to vector<1x640xf32>
    %287 = vector.extract_strided_slice %121 {offsets = [5, 0], sizes = [1, 640], strides = [1, 1]} : vector<8x640xf32> to vector<1x640xf32>
    %288 = tpu.concatenate %286, %287 in 0 : vector<1x640xf32>, vector<1x640xf32> -> vector<2x640xf32>
    %cst_74 = arith.constant dense<0.000000e+00> : vector<2x640xf32>
    %289 = tpu.matmul %285, %122, %cst_74 {dimension_numbers = #tpu.dot_dimension_numbers<[1], [0], [0], [1], [0, 0, 1, 1], [], []>} : vector<2x160xf32>, vector<160x640xf32>, vector<2x640xf32> -> vector<2x640xf32>
    %290 = arith.addf %288, %289 : vector<2x640xf32>
    %291 = vector.broadcast %123 : vector<1x640xf32> to vector<2x640xf32>
    %292 = arith.addf %290, %291 : vector<2x640xf32>
    %293 = vector.extract_strided_slice %292 {offsets = [0, 0], sizes = [2, 160], strides = [1, 1]} : vector<2x640xf32> to vector<2x160xf32>
    %294 = arith.negf %293 : vector<2x160xf32>
    %295 = math.exp %294 : vector<2x160xf32>
    %cst_75 = arith.constant 1.000000e+00 : f32
    %296 = vector.broadcast %cst_75 : f32 to vector<2x160xf32>
    %297 = arith.addf %296, %295 : vector<2x160xf32>
    %298 = arith.divf %296, %297 : vector<2x160xf32>
    %299 = vector.extract_strided_slice %292 {offsets = [0, 160], sizes = [2, 160], strides = [1, 1]} : vector<2x640xf32> to vector<2x160xf32>
    %300 = arith.negf %299 : vector<2x160xf32>
    %301 = math.exp %300 : vector<2x160xf32>
    %cst_76 = arith.constant 1.000000e+00 : f32
    %302 = vector.broadcast %cst_76 : f32 to vector<2x160xf32>
    %303 = arith.addf %302, %301 : vector<2x160xf32>
    %304 = arith.divf %302, %303 : vector<2x160xf32>
    %305 = vector.extract_strided_slice %292 {offsets = [0, 320], sizes = [2, 160], strides = [1, 1]} : vector<2x640xf32> to vector<2x160xf32>
    %306 = math.tanh %305 : vector<2x160xf32>
    %307 = vector.extract_strided_slice %292 {offsets = [0, 480], sizes = [2, 160], strides = [1, 1]} : vector<2x640xf32> to vector<2x160xf32>
    %308 = arith.negf %307 : vector<2x160xf32>
    %309 = math.exp %308 : vector<2x160xf32>
    %cst_77 = arith.constant 1.000000e+00 : f32
    %310 = vector.broadcast %cst_77 : f32 to vector<2x160xf32>
    %311 = arith.addf %310, %309 : vector<2x160xf32>
    %312 = arith.divf %310, %311 : vector<2x160xf32>
    %313 = arith.mulf %304, %283 : vector<2x160xf32>
    %314 = arith.mulf %298, %306 : vector<2x160xf32>
    %315 = arith.addf %313, %314 : vector<2x160xf32>
    %316 = math.tanh %315 : vector<2x160xf32>
    %317 = arith.mulf %312, %316 : vector<2x160xf32>
    %318 = vector.extract_strided_slice %65 {offsets = [6, 0], sizes = [1, 640], strides = [1, 1]} : vector<8x640xf32> to vector<1x640xf32>
    %319 = vector.extract_strided_slice %121 {offsets = [6, 0], sizes = [1, 640], strides = [1, 1]} : vector<8x640xf32> to vector<1x640xf32>
    %320 = tpu.concatenate %318, %319 in 0 : vector<1x640xf32>, vector<1x640xf32> -> vector<2x640xf32>
    %cst_78 = arith.constant dense<0.000000e+00> : vector<2x640xf32>
    %321 = tpu.matmul %317, %122, %cst_78 {dimension_numbers = #tpu.dot_dimension_numbers<[1], [0], [0], [1], [0, 0, 1, 1], [], []>} : vector<2x160xf32>, vector<160x640xf32>, vector<2x640xf32> -> vector<2x640xf32>
    %322 = arith.addf %320, %321 : vector<2x640xf32>
    %323 = vector.broadcast %123 : vector<1x640xf32> to vector<2x640xf32>
    %324 = arith.addf %322, %323 : vector<2x640xf32>
    %325 = vector.extract_strided_slice %324 {offsets = [0, 0], sizes = [2, 160], strides = [1, 1]} : vector<2x640xf32> to vector<2x160xf32>
    %326 = arith.negf %325 : vector<2x160xf32>
    %327 = math.exp %326 : vector<2x160xf32>
    %cst_79 = arith.constant 1.000000e+00 : f32
    %328 = vector.broadcast %cst_79 : f32 to vector<2x160xf32>
    %329 = arith.addf %328, %327 : vector<2x160xf32>
    %330 = arith.divf %328, %329 : vector<2x160xf32>
    %331 = vector.extract_strided_slice %324 {offsets = [0, 160], sizes = [2, 160], strides = [1, 1]} : vector<2x640xf32> to vector<2x160xf32>
    %332 = arith.negf %331 : vector<2x160xf32>
    %333 = math.exp %332 : vector<2x160xf32>
    %cst_80 = arith.constant 1.000000e+00 : f32
    %334 = vector.broadcast %cst_80 : f32 to vector<2x160xf32>
    %335 = arith.addf %334, %333 : vector<2x160xf32>
    %336 = arith.divf %334, %335 : vector<2x160xf32>
    %337 = vector.extract_strided_slice %324 {offsets = [0, 320], sizes = [2, 160], strides = [1, 1]} : vector<2x640xf32> to vector<2x160xf32>
    %338 = math.tanh %337 : vector<2x160xf32>
    %339 = vector.extract_strided_slice %324 {offsets = [0, 480], sizes = [2, 160], strides = [1, 1]} : vector<2x640xf32> to vector<2x160xf32>
    %340 = arith.negf %339 : vector<2x160xf32>
    %341 = math.exp %340 : vector<2x160xf32>
    %cst_81 = arith.constant 1.000000e+00 : f32
    %342 = vector.broadcast %cst_81 : f32 to vector<2x160xf32>
    %343 = arith.addf %342, %341 : vector<2x160xf32>
    %344 = arith.divf %342, %343 : vector<2x160xf32>
    %345 = arith.mulf %336, %315 : vector<2x160xf32>
    %346 = arith.mulf %330, %338 : vector<2x160xf32>
    %347 = arith.addf %345, %346 : vector<2x160xf32>
    %348 = math.tanh %347 : vector<2x160xf32>
    %349 = arith.mulf %344, %348 : vector<2x160xf32>
    %350 = vector.extract_strided_slice %65 {offsets = [7, 0], sizes = [1, 640], strides = [1, 1]} : vector<8x640xf32> to vector<1x640xf32>
    %351 = vector.extract_strided_slice %121 {offsets = [7, 0], sizes = [1, 640], strides = [1, 1]} : vector<8x640xf32> to vector<1x640xf32>
    %352 = tpu.concatenate %350, %351 in 0 : vector<1x640xf32>, vector<1x640xf32> -> vector<2x640xf32>
    %cst_82 = arith.constant dense<0.000000e+00> : vector<2x640xf32>
    %353 = tpu.matmul %349, %122, %cst_82 {dimension_numbers = #tpu.dot_dimension_numbers<[1], [0], [0], [1], [0, 0, 1, 1], [], []>} : vector<2x160xf32>, vector<160x640xf32>, vector<2x640xf32> -> vector<2x640xf32>
    %354 = arith.addf %352, %353 : vector<2x640xf32>
    %355 = vector.broadcast %123 : vector<1x640xf32> to vector<2x640xf32>
    %356 = arith.addf %354, %355 : vector<2x640xf32>
    %357 = vector.extract_strided_slice %356 {offsets = [0, 0], sizes = [2, 160], strides = [1, 1]} : vector<2x640xf32> to vector<2x160xf32>
    %358 = arith.negf %357 : vector<2x160xf32>
    %359 = math.exp %358 : vector<2x160xf32>
    %cst_83 = arith.constant 1.000000e+00 : f32
    %360 = vector.broadcast %cst_83 : f32 to vector<2x160xf32>
    %361 = arith.addf %360, %359 : vector<2x160xf32>
    %362 = arith.divf %360, %361 : vector<2x160xf32>
    %363 = vector.extract_strided_slice %356 {offsets = [0, 160], sizes = [2, 160], strides = [1, 1]} : vector<2x640xf32> to vector<2x160xf32>
    %364 = arith.negf %363 : vector<2x160xf32>
    %365 = math.exp %364 : vector<2x160xf32>
    %cst_84 = arith.constant 1.000000e+00 : f32
    %366 = vector.broadcast %cst_84 : f32 to vector<2x160xf32>
    %367 = arith.addf %366, %365 : vector<2x160xf32>
    %368 = arith.divf %366, %367 : vector<2x160xf32>
    %369 = vector.extract_strided_slice %356 {offsets = [0, 320], sizes = [2, 160], strides = [1, 1]} : vector<2x640xf32> to vector<2x160xf32>
    %370 = math.tanh %369 : vector<2x160xf32>
    %371 = vector.extract_strided_slice %356 {offsets = [0, 480], sizes = [2, 160], strides = [1, 1]} : vector<2x640xf32> to vector<2x160xf32>
    %372 = arith.negf %371 : vector<2x160xf32>
    %373 = math.exp %372 : vector<2x160xf32>
    %cst_85 = arith.constant 1.000000e+00 : f32
    %374 = vector.broadcast %cst_85 : f32 to vector<2x160xf32>
    %375 = arith.addf %374, %373 : vector<2x160xf32>
    %376 = arith.divf %374, %375 : vector<2x160xf32>
    %377 = arith.mulf %368, %347 : vector<2x160xf32>
    %378 = arith.mulf %362, %370 : vector<2x160xf32>
    %379 = arith.addf %377, %378 : vector<2x160xf32>
    %380 = math.tanh %379 : vector<2x160xf32>
    %381 = arith.mulf %376, %380 : vector<2x160xf32>
    %c0_86 = arith.constant 0 : index
    %c0_87 = arith.constant 0 : index
    %382 = vector.load %arg13[%c0_86, %c0_87] : memref<160x128xf32, #tpu.memory_space<vmem>>, vector<160x128xf32>
    %cst_88 = arith.constant dense<0.000000e+00> : vector<2x128xf32>
    %383 = tpu.matmul %381, %382, %cst_88 {dimension_numbers = #tpu.dot_dimension_numbers<[1], [0], [0], [1], [0, 0, 1, 1], [], []>} : vector<2x160xf32>, vector<160x128xf32>, vector<2x128xf32> -> vector<2x128xf32>
    %c0_89 = arith.constant 0 : index
    %c0_90 = arith.constant 0 : index
    %384 = vector.load %arg14[%c0_89, %c0_90] : memref<1x128xf32, #tpu.memory_space<vmem>>, vector<1x128xf32>
    %385 = vector.broadcast %384 : vector<1x128xf32> to vector<2x128xf32>
    %386 = arith.addf %383, %385 : vector<2x128xf32>
    %387 = math.tanh %386 : vector<2x128xf32>
    %c0_91 = arith.constant 0 : index
    %c0_92 = arith.constant 0 : index
    %388 = vector.load %arg15[%c0_91, %c0_92] : memref<128x16xf32, #tpu.memory_space<vmem>>, vector<128x16xf32>
    %cst_93 = arith.constant dense<0.000000e+00> : vector<2x16xf32>
    %389 = tpu.matmul %387, %388, %cst_93 {dimension_numbers = #tpu.dot_dimension_numbers<[1], [0], [0], [1], [0, 0, 1, 1], [], []>} : vector<2x128xf32>, vector<128x16xf32>, vector<2x16xf32> -> vector<2x16xf32>
    %c0_94 = arith.constant 0 : index
    %c0_95 = arith.constant 0 : index
    %390 = vector.load %arg16[%c0_94, %c0_95] : memref<1x16xf32, #tpu.memory_space<vmem>>, vector<1x16xf32>
    %391 = vector.broadcast %390 : vector<1x16xf32> to vector<2x16xf32>
    %392 = arith.addf %389, %391 : vector<2x16xf32>
    %c0_96 = arith.constant 0 : index
    %c0_97 = arith.constant 0 : index
    %393 = vector.load %arg17[%c0_96, %c0_97] : memref<128x16xf32, #tpu.memory_space<vmem>>, vector<128x16xf32>
    %cst_98 = arith.constant dense<0.000000e+00> : vector<2x16xf32>
    %394 = tpu.matmul %387, %393, %cst_98 {dimension_numbers = #tpu.dot_dimension_numbers<[1], [0], [0], [1], [0, 0, 1, 1], [], []>} : vector<2x128xf32>, vector<128x16xf32>, vector<2x16xf32> -> vector<2x16xf32>
    %c0_99 = arith.constant 0 : index
    %c0_100 = arith.constant 0 : index
    %395 = vector.load %arg18[%c0_99, %c0_100] : memref<1x16xf32, #tpu.memory_space<vmem>>, vector<1x16xf32>
    %396 = vector.broadcast %395 : vector<1x16xf32> to vector<2x16xf32>
    %397 = arith.addf %394, %396 : vector<2x16xf32>
    %cst_101 = arith.constant 5.000000e-01 : f32
    %398 = vector.broadcast %cst_101 : f32 to vector<2x16xf32>
    %399 = arith.mulf %398, %397 : vector<2x16xf32>
    %400 = math.exp %399 : vector<2x16xf32>
    %c0_102 = arith.constant 0 : index
    %c0_103 = arith.constant 0 : index
    %401 = vector.load %arg1[%c0_102, %c0_103] : memref<2x16xf32, #tpu.memory_space<vmem>>, vector<2x16xf32>
    %402 = arith.mulf %400, %401 : vector<2x16xf32>
    %403 = arith.addf %392, %402 : vector<2x16xf32>
    %c0_104 = arith.constant 0 : index
    %c0_105 = arith.constant 0 : index
    %404 = vector.load %arg27[%c0_104, %c0_105] : memref<2x16xf32, #tpu.memory_space<vmem>>, vector<2x16xf32>
    tpu.vector_store %arg27[%c0_104, %c0_105], %392 {strides = array<i32>} : memref<2x16xf32, #tpu.memory_space<vmem>>, vector<2x16xf32>,
    %c0_106 = arith.constant 0 : index
    %c0_107 = arith.constant 0 : index
    %405 = vector.load %arg28[%c0_106, %c0_107] : memref<2x16xf32, #tpu.memory_space<vmem>>, vector<2x16xf32>
    tpu.vector_store %arg28[%c0_106, %c0_107], %397 {strides = array<i32>} : memref<2x16xf32, #tpu.memory_space<vmem>>, vector<2x16xf32>,
    %c0_108 = arith.constant 0 : index
    %c0_109 = arith.constant 0 : index
    %406 = vector.load %arg19[%c0_108, %c0_109] : memref<16x1024xf32, #tpu.memory_space<vmem>>, vector<16x1024xf32>
    %cst_110 = arith.constant dense<0.000000e+00> : vector<2x1024xf32>
    %407 = tpu.matmul %403, %406, %cst_110 {dimension_numbers = #tpu.dot_dimension_numbers<[1], [0], [0], [1], [0, 0, 1, 1], [], []>} : vector<2x16xf32>, vector<16x1024xf32>, vector<2x1024xf32> -> vector<2x1024xf32>
    %c0_111 = arith.constant 0 : index
    %c0_112 = arith.constant 0 : index
    %408 = vector.load %arg20[%c0_111, %c0_112] : memref<1x1024xf32, #tpu.memory_space<vmem>>, vector<1x1024xf32>
    %409 = vector.broadcast %408 : vector<1x1024xf32> to vector<2x1024xf32>
    %410 = arith.addf %407, %409 : vector<2x1024xf32>
    %cst_113 = arith.constant 0.000000e+00 : f32
    %411 = vector.broadcast %cst_113 : f32 to vector<2x1024xf32>
    %412 = arith.maximumf %410, %411 : vector<2x1024xf32>
    %c0_114 = arith.constant 0 : index
    %c0_115 = arith.constant 0 : index
    %413 = vector.load %arg21[%c0_114, %c0_115] : memref<1024x32xf32, #tpu.memory_space<vmem>>, vector<1024x32xf32>
    %cst_116 = arith.constant dense<0.000000e+00> : vector<2x32xf32>
    %414 = tpu.matmul %412, %413, %cst_116 {dimension_numbers = #tpu.dot_dimension_numbers<[1], [0], [0], [1], [0, 0, 1, 1], [], []>} : vector<2x1024xf32>, vector<1024x32xf32>, vector<2x32xf32> -> vector<2x32xf32>
    %c0_117 = arith.constant 0 : index
    %c0_118 = arith.constant 0 : index
    %415 = vector.load %arg22[%c0_117, %c0_118] : memref<1x32xf32, #tpu.memory_space<vmem>>, vector<1x32xf32>
    %416 = vector.broadcast %415 : vector<1x32xf32> to vector<2x32xf32>
    %417 = arith.addf %414, %416 : vector<2x32xf32>
    %418 = math.tanh %417 : vector<2x32xf32>
    %c0_119 = arith.constant 0 : index
    %c0_120 = arith.constant 0 : index
    %419 = vector.load %arg29[%c0_119, %c0_120] : memref<2x32xf32, #tpu.memory_space<vmem>>, vector<2x32xf32>
    tpu.vector_store %arg29[%c0_119, %c0_120], %418 {strides = array<i32>} : memref<2x32xf32, #tpu.memory_space<vmem>>, vector<2x32xf32>,
    %c0_121 = arith.constant 0 : index
    %c0_122 = arith.constant 0 : index
    %420 = vector.load %arg23[%c0_121, %c0_122] : memref<16x128xf32, #tpu.memory_space<vmem>>, vector<16x128xf32>
    %cst_123 = arith.constant dense<0.000000e+00> : vector<2x128xf32>
    %421 = tpu.matmul %403, %420, %cst_123 {dimension_numbers = #tpu.dot_dimension_numbers<[1], [0], [0], [1], [0, 0, 1, 1], [], []>} : vector<2x16xf32>, vector<16x128xf32>, vector<2x128xf32> -> vector<2x128xf32>
    %c0_124 = arith.constant 0 : index
    %c0_125 = arith.constant 0 : index
    %422 = vector.load %arg24[%c0_124, %c0_125] : memref<1x128xf32, #tpu.memory_space<vmem>>, vector<1x128xf32>
    %423 = vector.broadcast %422 : vector<1x128xf32> to vector<2x128xf32>
    %424 = arith.addf %421, %423 : vector<2x128xf32>
    %cst_126 = arith.constant 0.000000e+00 : f32
    %425 = vector.broadcast %cst_126 : f32 to vector<2x128xf32>
    %426 = arith.maximumf %424, %425 : vector<2x128xf32>
    %c0_127 = arith.constant 0 : index
    %c0_128 = arith.constant 0 : index
    %427 = vector.load %arg25[%c0_127, %c0_128] : memref<128x4xf32, #tpu.memory_space<vmem>>, vector<128x4xf32>
    %cst_129 = arith.constant dense<0.000000e+00> : vector<2x4xf32>
    %428 = tpu.matmul %426, %427, %cst_129 {dimension_numbers = #tpu.dot_dimension_numbers<[1], [0], [0], [1], [0, 0, 1, 1], [], []>} : vector<2x128xf32>, vector<128x4xf32>, vector<2x4xf32> -> vector<2x4xf32>
    %c0_130 = arith.constant 0 : index
    %c0_131 = arith.constant 0 : index
    %429 = vector.load %arg26[%c0_130, %c0_131] : memref<1x4xf32, #tpu.memory_space<vmem>>, vector<1x4xf32>
    %430 = vector.broadcast %429 : vector<1x4xf32> to vector<2x4xf32>
    %431 = arith.addf %428, %430 : vector<2x4xf32>
    %432 = arith.negf %431 : vector<2x4xf32>
    %433 = math.exp %432 : vector<2x4xf32>
    %cst_132 = arith.constant 1.000000e+00 : f32
    %434 = vector.broadcast %cst_132 : f32 to vector<2x4xf32>
    %435 = arith.addf %434, %433 : vector<2x4xf32>
    %436 = arith.divf %434, %435 : vector<2x4xf32>
    %c0_133 = arith.constant 0 : index
    %c0_134 = arith.constant 0 : index
    %437 = vector.load %arg30[%c0_133, %c0_134] : memref<2x4xf32, #tpu.memory_space<vmem>>, vector<2x4xf32>
    tpu.vector_store %arg30[%c0_133, %c0_134], %436 {strides = array<i32>} : memref<2x4xf32, #tpu.memory_space<vmem>>, vector<2x4xf32>,
    return
  }
}

</mosaic_0001>

<llo_original>
// kernel: vae_forward.1
$region0: #{vae_forward.1}
  #allocation0 [shape = 'u32[]', space=smem, size = 0x4, offset = 0x4, fixed_abs, tag = 'smem constant byte address 0x4 - core index']
  #allocation1 [shape = 'u32[72,128]{1,0:T(1,128)}', space=vmem, size = 0x9000, scoped, tag = 'internal scratch']
  %s0 = inlined_call_operand.smem [shape: u32[31], index: -1, kind: input, shape index: {}]
  %s1 = sld [smem:[%s0]]
  %s2 = scalar_lea.smem %s0, 1
  %s3 = sld [smem:[%s2]]
  %s4 = scalar_lea.smem %s0, 2
  %s5 = sld [smem:[%s4]]
  %s6 = scalar_lea.smem %s0, 3
  %s7 = sld [smem:[%s6]]
  %s8 = scalar_lea.smem %s0, 4
  %s9 = sld [smem:[%s8]]
  %s10 = scalar_lea.smem %s0, 5
  %s11 = sld [smem:[%s10]]
  %s12 = scalar_lea.smem %s0, 6
  %s13 = sld [smem:[%s12]]
  %s14 = scalar_lea.smem %s0, 7
  %s15 = sld [smem:[%s14]]
  %s16 = scalar_lea.smem %s0, 8
  %s17 = sld [smem:[%s16]]
  %s18 = scalar_lea.smem %s0, 9
  %s19 = sld [smem:[%s18]]
  %s20 = scalar_lea.smem %s0, 10
  %s21 = sld [smem:[%s20]]
  %s22 = scalar_lea.smem %s0, 11
  %s23 = sld [smem:[%s22]]
  %s24 = scalar_lea.smem %s0, 12
  %s25 = sld [smem:[%s24]]
  %s26 = scalar_lea.smem %s0, 13
  %s27 = sld [smem:[%s26]]
  %s28 = scalar_lea.smem %s0, 14
  %s29 = sld [smem:[%s28]]
  %s30 = scalar_lea.smem %s0, 15
  %s31 = sld [smem:[%s30]]
  %s32 = scalar_lea.smem %s0, 16
  %s33 = sld [smem:[%s32]]
  %s34 = scalar_lea.smem %s0, 17
  %s35 = sld [smem:[%s34]]
  %s36 = scalar_lea.smem %s0, 18
  %s37 = sld [smem:[%s36]]
  %s38 = scalar_lea.smem %s0, 19
  %s39 = sld [smem:[%s38]]
  %s40 = scalar_lea.smem %s0, 20
  %s41 = sld [smem:[%s40]]
  %s42 = scalar_lea.smem %s0, 21
  %s43 = sld [smem:[%s42]]
  %s44 = scalar_lea.smem %s0, 22
  %s45 = sld [smem:[%s44]]
  %s46 = scalar_lea.smem %s0, 23
  %s47 = sld [smem:[%s46]]
  %s48 = scalar_lea.smem %s0, 24
  %s49 = sld [smem:[%s48]]
  %s50 = scalar_lea.smem %s0, 25
  %s51 = sld [smem:[%s50]]
  %s52 = scalar_lea.smem %s0, 26
  %s53 = sld [smem:[%s52]]
  %s54 = scalar_lea.smem %s0, 27
  %s55 = sld [smem:[%s54]]
  %s56 = scalar_lea.smem %s0, 28
  %s57 = sld [smem:[%s56]]
  %s58 = scalar_lea.smem %s0, 29
  %s59 = sld [smem:[%s58]]
  %s60 = scalar_lea.smem %s0, 30
  %s61 = sld [smem:[%s60]]
  %62 = xla_tuple %s55, %s57, %s59, %s61
  %s63 = sld [smem:[#allocation0]]
  $region142: #{vae_forward.1} parent=0
    _
  %s65 = ssub.s32 1, %s63
  %s66 = scalar_select 0, %s65, %s63
  $region1: #{vae_forward.1} parent=0
    #allocation2 [shape = 'u8[1024]{0}', space=vmem, size = 0x400, scoped, tag = 'output window, operand 0, single buffered']
    #allocation3 [shape = 's32[1]{0}', space=sflag, size = 0x4, scoped, tag = 'scoped memory for vae_forward.1']
    #allocation4 [shape = 'u8[1024]{0}', space=vmem, size = 0x400, scoped, tag = 'output window, operand 1, single buffered']
    #allocation5 [shape = 's32[1]{0}', space=sflag, size = 0x4, scoped, tag = 'scoped memory for vae_forward.1']
    #allocation6 [shape = 'u8[1024]{0}', space=vmem, size = 0x400, scoped, tag = 'output window, operand 3, single buffered']
    %67 = vsyncpa [#allocation3], 0
    %68 = vsyncpa [#allocation5], 0
    // Predicated region
    $region2: #{vae_forward.1} parent=1 // pred_check
      _
    $region3: #{vae_forward.1} parent=1 // pred_check_branch
      %70 = sbr.rel (0) target = $region5
    $region4: #{vae_forward.1} parent=1 // pred_region
      _
    $region5: #{vae_forward.1} parent=1 // pred_fallthru
      _
    // Predicated region
    $region6: #{vae_forward.1} parent=1 // pred_check
      _
    $region7: #{vae_forward.1} parent=1 // pred_check_branch
      %72 = sbr.rel (0) target = $region9
    $region8: #{vae_forward.1} parent=1 // pred_region
      _
    $region9: #{vae_forward.1} parent=1 // pred_fallthru
      _
    // Predicated region
    $region10: #{vae_forward.1} parent=1 // pred_check
      _
    $region11: #{vae_forward.1} parent=1 // pred_check_branch
      %74 = sbr.rel (0) target = $region13
    $region12: #{vae_forward.1} parent=1 // pred_region
      _
    $region13: #{vae_forward.1} parent=1 // pred_fallthru
      _
    // Predicated region
    $region14: #{vae_forward.1} parent=1 // pred_check
      _
    $region15: #{vae_forward.1} parent=1 // pred_check_branch
      %76 = sbr.rel (0) target = $region17
    $region16: #{vae_forward.1} parent=1 // pred_region
      _
    $region17: #{vae_forward.1} parent=1 // pred_fallthru
      _
    // Predicated region
    $region18: #{vae_forward.1} parent=1 // pred_check
      _
    $region19: #{vae_forward.1} parent=1 // pred_check_branch
      %78 = sbr.rel (0) target = $region21
    $region20: #{vae_forward.1} parent=1 // pred_region
      _
    $region21: #{vae_forward.1} parent=1 // pred_fallthru
      _
    // Predicated region
    $region22: #{vae_forward.1} parent=1 // pred_check
      _
    $region23: #{vae_forward.1} parent=1 // pred_check_branch
      %80 = sbr.rel (0) target = $region25
    $region24: #{vae_forward.1} parent=1 // pred_region
      _
    $region25: #{vae_forward.1} parent=1 // pred_fallthru
      _
    // Predicated region
    $region26: #{vae_forward.1} parent=1 // pred_check
      _
    $region27: #{vae_forward.1} parent=1 // pred_check_branch
      %82 = sbr.rel (0) target = $region29
    $region28: #{vae_forward.1} parent=1 // pred_region
      _
    $region29: #{vae_forward.1} parent=1 // pred_fallthru
      _
    // Predicated region
    $region30: #{vae_forward.1} parent=1 // pred_check
      _
    $region31: #{vae_forward.1} parent=1 // pred_check_branch
      %84 = sbr.rel (0) target = $region33
    $region32: #{vae_forward.1} parent=1 // pred_region
      _
    $region33: #{vae_forward.1} parent=1 // pred_fallthru
      _
    // Predicated region
    $region34: #{vae_forward.1} parent=1 // pred_check
      _
    $region35: #{vae_forward.1} parent=1 // pred_check_branch
      %86 = sbr.rel (0) target = $region37
    $region36: #{vae_forward.1} parent=1 // pred_region
      _
    $region37: #{vae_forward.1} parent=1 // pred_fallthru
      _
    // Predicated region
    $region38: #{vae_forward.1} parent=1 // pred_check
      _
    $region39: #{vae_forward.1} parent=1 // pred_check_branch
      %88 = sbr.rel (0) target = $region41
    $region40: #{vae_forward.1} parent=1 // pred_region
      _
    $region41: #{vae_forward.1} parent=1 // pred_fallthru
      _
    // Predicated region
    $region42: #{vae_forward.1} parent=1 // pred_check
      _
    $region43: #{vae_forward.1} parent=1 // pred_check_branch
      %90 = sbr.rel (0) target = $region45
    $region44: #{vae_forward.1} parent=1 // pred_region
      _
    $region45: #{vae_forward.1} parent=1 // pred_fallthru
      _
    // Predicated region
    $region46: #{vae_forward.1} parent=1 // pred_check
      _
    $region47: #{vae_forward.1} parent=1 // pred_check_branch
      %92 = sbr.rel (0) target = $region49
    $region48: #{vae_forward.1} parent=1 // pred_region
      _
    $region49: #{vae_forward.1} parent=1 // pred_fallthru
      _
    // Predicated region
    $region50: #{vae_forward.1} parent=1 // pred_check
      _
    $region51: #{vae_forward.1} parent=1 // pred_check_branch
      %94 = sbr.rel (0) target = $region53
    $region52: #{vae_forward.1} parent=1 // pred_region
      _
    $region53: #{vae_forward.1} parent=1 // pred_fallthru
      _
    // Predicated region
    $region54: #{vae_forward.1} parent=1 // pred_check
      _
    $region55: #{vae_forward.1} parent=1 // pred_check_branch
      %96 = sbr.rel (0) target = $region57
    $region56: #{vae_forward.1} parent=1 // pred_region
      _
    $region57: #{vae_forward.1} parent=1 // pred_fallthru
      _
    // Predicated region
    $region58: #{vae_forward.1} parent=1 // pred_check
      _
    $region59: #{vae_forward.1} parent=1 // pred_check_branch
      %98 = sbr.rel (0) target = $region61
    $region60: #{vae_forward.1} parent=1 // pred_region
      _
    $region61: #{vae_forward.1} parent=1 // pred_fallthru
      _
    // Predicated region
    $region62: #{vae_forward.1} parent=1 // pred_check
      _
    $region63: #{vae_forward.1} parent=1 // pred_check_branch
      %100 = sbr.rel (0) target = $region65
    $region64: #{vae_forward.1} parent=1 // pred_region
      _
    $region65: #{vae_forward.1} parent=1 // pred_fallthru
      _
    // Predicated region
    $region66: #{vae_forward.1} parent=1 // pred_check
      _
    $region67: #{vae_forward.1} parent=1 // pred_check_branch
      %102 = sbr.rel (0) target = $region69
    $region68: #{vae_forward.1} parent=1 // pred_region
      _
    $region69: #{vae_forward.1} parent=1 // pred_fallthru
      _
    // Predicated region
    $region70: #{vae_forward.1} parent=1 // pred_check
      _
    $region71: #{vae_forward.1} parent=1 // pred_check_branch
      %104 = sbr.rel (0) target = $region73
    $region72: #{vae_forward.1} parent=1 // pred_region
      _
    $region73: #{vae_forward.1} parent=1 // pred_fallthru
      _
    // Predicated region
    $region74: #{vae_forward.1} parent=1 // pred_check
      _
    $region75: #{vae_forward.1} parent=1 // pred_check_branch
      %106 = sbr.rel (0) target = $region77
    $region76: #{vae_forward.1} parent=1 // pred_region
      _
    $region77: #{vae_forward.1} parent=1 // pred_fallthru
      _
    // Predicated region
    $region78: #{vae_forward.1} parent=1 // pred_check
      _
    $region79: #{vae_forward.1} parent=1 // pred_check_branch
      %108 = sbr.rel (0) target = $region81
    $region80: #{vae_forward.1} parent=1 // pred_region
      _
    $region81: #{vae_forward.1} parent=1 // pred_fallthru
      _
    // Predicated region
    $region82: #{vae_forward.1} parent=1 // pred_check
      _
    $region83: #{vae_forward.1} parent=1 // pred_check_branch
      %110 = sbr.rel (0) target = $region85
    $region84: #{vae_forward.1} parent=1 // pred_region
      _
    $region85: #{vae_forward.1} parent=1 // pred_fallthru
      _
    // Predicated region
    $region86: #{vae_forward.1} parent=1 // pred_check
      _
    $region87: #{vae_forward.1} parent=1 // pred_check_branch
      %112 = sbr.rel (0) target = $region89
    $region88: #{vae_forward.1} parent=1 // pred_region
      _
    $region89: #{vae_forward.1} parent=1 // pred_fallthru
      _
    // Predicated region
    $region90: #{vae_forward.1} parent=1 // pred_check
      _
    $region91: #{vae_forward.1} parent=1 // pred_check_branch
      %114 = sbr.rel (0) target = $region93
    $region92: #{vae_forward.1} parent=1 // pred_region
      _
    $region93: #{vae_forward.1} parent=1 // pred_fallthru
      _
    // Predicated region
    $region94: #{vae_forward.1} parent=1 // pred_check
      _
    $region95: #{vae_forward.1} parent=1 // pred_check_branch
      %116 = sbr.rel (0) target = $region97
    $region96: #{vae_forward.1} parent=1 // pred_region
      _
    $region97: #{vae_forward.1} parent=1 // pred_fallthru
      _
    // Predicated region
    $region98: #{vae_forward.1} parent=1 // pred_check
      _
    $region99: #{vae_forward.1} parent=1 // pred_check_branch
      %118 = sbr.rel (0) target = $region101
    $region100: #{vae_forward.1} parent=1 // pred_region
      _
    $region101: #{vae_forward.1} parent=1 // pred_fallthru
      _
    // Predicated region
    $region102: #{vae_forward.1} parent=1 // pred_check
      _
    $region103: #{vae_forward.1} parent=1 // pred_check_branch
      %120 = sbr.rel (0) target = $region105
    $region104: #{vae_forward.1} parent=1 // pred_region
      _
    $region105: #{vae_forward.1} parent=1 // pred_fallthru
      _
    // Predicated region
    $region106: #{vae_forward.1} parent=1 // pred_check
      _
    $region107: #{vae_forward.1} parent=1 // pred_check_branch
      %122 = sbr.rel (0) target = $region109
    $region108: #{vae_forward.1} parent=1 // pred_region
      _
    $region109: #{vae_forward.1} parent=1 // pred_fallthru
      _
    %v123 = vld [vmem:[%s5] sm:$0xff]
    %v124 = vld [vmem:[%s5 + $0x8] sm:$0xff]
    %v125 = vld [vmem:[%s5 + $0x10] sm:$0xff]
    %v126 = vld [vmem:[%s5 + $0x18] sm:$0xf]
    %v127 = vld [vmem:[%s7] sm:$0x1]
    %v128 = vld [vmem:[%s9] sm:$0xff]
    %v129 = vld [vmem:[%s11] sm:$0xff]
    %v130 = vld [vmem:[%s13] sm:$0x1]
    %v131 = vld [vmem:[%s15] sm:$0x1]
    %v132 = vld [vmem:[%s17] sm:$0xf]
    %v133 = vld [vmem:[%s19] sm:$0xff]
    %v134 = vld [vmem:[%s19 + $0x8] sm:$0xff]
    %v135 = vld [vmem:[%s19 + $0x10] sm:$0xf]
    %v136 = vld [vmem:[%s21] sm:$0xff]
    %v137 = vld [vmem:[%s21 + $0x8] sm:$0xff]
    %v138 = vld [vmem:[%s21 + $0x10] sm:$0xf]
    %v139 = vld [vmem:[%s1] sm:$0xff]
    %v141 = vrot.slane %v139, 5
    %vm143 = vcmask 1042432
    %v144 = vsel %vm143, 0.0, %v141
    %v145 = vsel %vm143, %v141, 0.0
    %vm148 = vcmask 1046528
    %v149 = vrot.slane %v144, 1
    %v150 = vrot.slane %v145, 1
    %v151 = vsel %vm148, %v149, %v150
    %152 = vrot.lane.b32.xlu0 %v151, 4
    %v153 = vpop.permute.xlu0 %152
    %vm155 = vcmask 1045504
    %v156 = vrot.slane %v144, 2
    %v157 = vrot.slane %v145, 2
    %v158 = vsel %vm155, %v156, %v157
    %159 = vrot.lane.b32.xlu0 %v158, 8
    %v160 = vpop.permute.xlu0 %159
    %vm162 = vcmask 1044480
    %v163 = vrot.slane %v144, 3
    %v164 = vrot.slane %v145, 3
    %v165 = vsel %vm162, %v163, %v164
    %166 = vrot.lane.b32.xlu0 %v165, 12
    %v167 = vpop.permute.xlu0 %166
    %vm169 = vcmask 1043456
    %v170 = vrot.slane %v144, 4
    %v171 = vrot.slane %v145, 4
    %v172 = vsel %vm169, %v170, %v171
    %173 = vrot.lane.b32.xlu0 %v172, 16
    %v174 = vpop.permute.xlu0 %173
    %v176 = vrot.slane %v144, 5
    %v177 = vrot.slane %v145, 5
    %v178 = vsel %vm143, %v176, %v177
    %179 = vrot.lane.b32.xlu0 %v178, 20
    %v180 = vpop.permute.xlu0 %179
    %vm182 = vcmask 1041408
    %v183 = vrot.slane %v144, 6
    %v184 = vrot.slane %v145, 6
    %v185 = vsel %vm182, %v183, %v184
    %186 = vrot.lane.b32.xlu0 %v185, 24
    %v187 = vpop.permute.xlu0 %186
    %vm189 = vcmask 31744
    %v190 = vsel %vm189, %v144, %v153
    %vm191 = vcmask 64512
    %v192 = vsel %vm191, %v190, %v160
    %vm193 = vcmask 97280
    %v194 = vsel %vm193, %v192, %v167
    %vm195 = vcmask 130048
    %v196 = vsel %vm195, %v194, %v174
    %vm197 = vcmask 162816
    %v198 = vsel %vm197, %v196, %v180
    %vm199 = vcmask 195584
    %v200 = vsel %vm199, %v198, %v187
    %v202 = vperm.slane %v127, 0
    %vm204 = vcmask 228352
    %v206 = vsel %vm204, %v200, 0
    %v209 = vsel %vm169, %v126, 0
    %211 = vmatpush.msra.mxu0 0.0
    %212 = vmatpush.msra.mxu0 0.0
    %213 = vmatpush.msra.mxu0 0.0
    %214 = vmatpush.msra.mxu0 0.0
    %215 = vmatpush.msra.mxu0 0.0
    %216 = vmatpush.msra.mxu0 0.0
    %217 = vmatpush.msra.mxu0 0.0
    %218 = vmatpush.msra.mxu0 0.0
    %219 = vmatpush.msra.mxu0 0.0
    %220 = vmatpush.msra.mxu0 0.0
    %221 = vmatpush.msra.mxu0 0.0
    %222 = vmatpush.msra.mxu0 0.0
    %223 = vmatpush.msra.mxu0 %v209
    %224 = vmatpush.msra.mxu0 %v125
    %225 = vmatpush.msra.mxu0 %v124
    %226 = vmatpush.msra.mxu0 %v123
    %227 = vmatmul.f32.gmra.mxu0 %v206
    %v228 = vpop.f32.mrf.mxu0
    %v229 = vadd.f32 %v202, %v228
    %230 = vdwg.mxu0
    %v231 = vmax.f32 %v229, 0.0
    %232 = vxpose.xlu0.b32.start [1/16] %v231, 128
    %233 = vxpose.xlu0.b32.cont [2/16] 0.0, 128
    %234 = vxpose.xlu0.b32.cont [3/16] 0.0, 128
    %235 = vxpose.xlu0.b32.cont [4/16] 0.0, 128
    %236 = vxpose.xlu0.b32.cont [5/16] 0.0, 128
    %237 = vxpose.xlu0.b32.cont [6/16] 0.0, 128
    %238 = vxpose.xlu0.b32.cont [7/16] 0.0, 128
    %239 = vxpose.xlu0.b32.cont [8/16] 0.0, 128
    %240 = vxpose.xlu0.b32.cont [9/16] 0.0, 128
    %241 = vxpose.xlu0.b32.cont [10/16] 0.0, 128
    %242 = vxpose.xlu0.b32.cont [11/16] 0.0, 128
    %243 = vxpose.xlu0.b32.cont [12/16] 0.0, 128
    %244 = vxpose.xlu0.b32.cont [13/16] 0.0, 128
    %245 = vxpose.xlu0.b32.cont [14/16] 0.0, 128
    %246 = vxpose.xlu0.b32.cont [15/16] 0.0, 128
    %247 = vxpose.xlu0.b32.end [16/16] 0.0, 128
    %v248 = vpop.trf.xlu0
    %v249 = vpop.trf.xlu0
    %v250 = vpop.trf.xlu0
    %v251 = vpop.trf.xlu0
    %v252 = vpop.trf.xlu0
    %v253 = vpop.trf.xlu0
    %v254 = vpop.trf.xlu0
    %v255 = vpop.trf.xlu0
    %v256 = vpop.trf.xlu0
    %v257 = vpop.trf.xlu0
    %v258 = vpop.trf.xlu0
    %v259 = vpop.trf.xlu0
    %v260 = vpop.trf.xlu0
    %v261 = vpop.trf.xlu0
    %v262 = vpop.trf.xlu0
    %v263 = vpop.trf.xlu0
    %v265 = vsel %vm191, %v248, 0
    %267 = vmatpush.msra.mxu0 0.0
    %268 = vmatpush.msra.mxu0 0.0
    %269 = vmatpush.msra.mxu0 0.0
    %270 = vmatpush.msra.mxu0 0.0
    %271 = vmatpush.msra.mxu0 0.0
    %272 = vmatpush.msra.mxu0 0.0
    %273 = vmatpush.msra.mxu0 0.0
    %274 = vmatpush.msra.mxu0 0.0
    %275 = vmatpush.msra.mxu0 0.0
    %276 = vmatpush.msra.mxu0 0.0
    %277 = vmatpush.msra.mxu0 0.0
    %278 = vmatpush.msra.mxu0 0.0
    %279 = vmatpush.msra.mxu0 0.0
    %280 = vmatpush.msra.mxu0 0.0
    %281 = vmatpush.msra.mxu0 0.0
    %282 = vmatpush.msra.mxu0 %v128
    %283 = vmatmul.f32.gmra.mxu0 %v265
    %v284 = vpop.f32.mrf.mxu0
    %v285 = vadd.f32 0.0, %v284
    %286 = vdwg.mxu0
    %287 = vmatpush.msra.mxu0 0.0
    %288 = vmatpush.msra.mxu0 0.0
    %289 = vmatpush.msra.mxu0 0.0
    %290 = vmatpush.msra.mxu0 0.0
    %291 = vmatpush.msra.mxu0 0.0
    %292 = vmatpush.msra.mxu0 0.0
    %293 = vmatpush.msra.mxu0 0.0
    %294 = vmatpush.msra.mxu0 0.0
    %295 = vmatpush.msra.mxu0 0.0
    %296 = vmatpush.msra.mxu0 0.0
    %297 = vmatpush.msra.mxu0 0.0
    %298 = vmatpush.msra.mxu0 0.0
    %299 = vmatpush.msra.mxu0 0.0
    %300 = vmatpush.msra.mxu0 0.0
    %301 = vmatpush.msra.mxu0 0.0
    %302 = vmatpush.msra.mxu0 %v129
    %303 = vmatmul.f32.gmra.mxu0 %v265
    %v304 = vpop.f32.mrf.mxu0
    %v305 = vadd.f32 0.0, %v304
    %306 = vdwg.mxu0
    %v308 = vrot.slane %v285, 1
    %v309 = vrot.slane %v285, 2
    %v310 = vrot.slane %v285, 3
    %v311 = vperm.slane %v285, 0
    %v312 = vperm.slane %v308, 0
    %v313 = vperm.slane %v309, 0
    %v314 = vperm.slane %v310, 0
    %v319 = vadd.f32 %v311, %v305
    %v320 = vadd.f32 %v312, %v305
    %v321 = vadd.f32 %v313, %v305
    %v322 = vadd.f32 %v314, %v305
    %v324 = vperm.slane %v130, 0
    %v326 = vadd.f32 %v319, %v324
    %v327 = vadd.f32 %v320, %v324
    %v328 = vadd.f32 %v321, %v324
    %v329 = vadd.f32 %v322, %v324
    %vm330 = vcmp.ge.f32.partialorder %v326, 0.0
    %vm331 = vcmp.ge.f32.partialorder %v327, 0.0
    %vm332 = vcmp.ge.f32.partialorder %v328, 0.0
    %vm333 = vcmp.ge.f32.partialorder %v329, 0.0
    %v334 = vmul.f32 %v326, 0.2
    %v335 = vmul.f32 %v327, 0.2
    %v336 = vmul.f32 %v328, 0.2
    %v337 = vmul.f32 %v329, 0.2
    %v338 = vsel %vm330, %v326, %v334
    %v339 = vsel %vm331, %v327, %v335
    %v340 = vsel %vm332, %v328, %v336
    %v341 = vsel %vm333, %v329, %v337
    %v343 = vperm.slane %v131, 0
    %v345 = vmul.f32 %v338, %v343
    %v346 = vmul.f32 %v339, %v343
    %v347 = vmul.f32 %v340, %v343
    %v348 = vmul.f32 %v341, %v343
    %vm349 = vcmask 125952
    %v350 = vsel %vm349, %v345, 0.0
    %351 = vadd.xlane.f32.xlu0 %v350
    %v352 = vpop.xlane.xlu0 %351
    %v353 = vsel %vm349, %v346, 0.0
    %354 = vadd.xlane.f32.xlu0 %v353
    %v355 = vpop.xlane.xlu0 %354
    %v356 = vsel %vm349, %v347, 0.0
    %357 = vadd.xlane.f32.xlu0 %v356
    %v358 = vpop.xlane.xlu0 %357
    %v359 = vsel %vm349, %v348, 0.0
    %360 = vadd.xlane.f32.xlu0 %v359
    %v361 = vpop.xlane.xlu0 %360
    %v363 = vperm.slane %v132, 0
    %v364 = vlaneseq
    %v365 = vshrl.u32 %v364, 7
    %367 = vset.pattern.permute.xlu0 %v365
    %368 = vperm.xlu0 %367, %v363
    %v369 = vpop.permute.xlu0 %368
    %v370 = vperm.slane %v132, 1
    %v371 = vlaneseq
    %v372 = vshrl.u32 %v371, 7
    %374 = vset.pattern.permute.xlu0 %v372
    %375 = vperm.xlu0 %374, %v370
    %v376 = vpop.permute.xlu0 %375
    %v377 = vperm.slane %v132, 2
    %v378 = vlaneseq
    %v379 = vshrl.u32 %v378, 7
    %381 = vset.pattern.permute.xlu0 %v379
    %382 = vperm.xlu0 %381, %v377
    %v383 = vpop.permute.xlu0 %382
    %v384 = vperm.slane %v132, 3
    %v385 = vlaneseq
    %v386 = vshrl.u32 %v385, 7
    %388 = vset.pattern.permute.xlu0 %v386
    %389 = vperm.xlu0 %388, %v384
    %v390 = vpop.permute.xlu0 %389
    %v395 = vadd.f32 %v352, %v369
    %v396 = vadd.f32 %v355, %v376
    %v397 = vadd.f32 %v358, %v383
    %v398 = vadd.f32 %v361, %v390
    %403 = vset.pattern.permute.xlu0 0
    %404 = vperm.xlu0 %403, %v395
    %v405 = vpop.permute.xlu0 %404
    %406 = vset.pattern.permute.xlu0 0
    %407 = vperm.xlu0 %406, %v396
    %v408 = vpop.permute.xlu0 %407
    %409 = vset.pattern.permute.xlu0 0
    %410 = vperm.xlu0 %409, %v397
    %v411 = vpop.permute.xlu0 %410
    %412 = vset.pattern.permute.xlu0 0
    %413 = vperm.xlu0 %412, %v398
    %v414 = vpop.permute.xlu0 %413
    %v415 = vlaneseq
    %v416 = vand.u32 %v415, 127
    %v417 = vperm.slane %v405, %v416
    %v418 = vperm.slane %v408, %v416
    %v419 = vperm.slane %v411, %v416
    %v420 = vperm.slane %v414, %v416
    %vm421 = vcmask 1041409
    %v422 = vsel %vm421, %v418, %v417
    %vm423 = vcmask 1042434
    %v424 = vsel %vm423, %v419, %v422
    %vm425 = vcmask 1043459
    %v426 = vsel %vm425, %v420, %v424
    %vm428 = vcmask 27648
    %v429 = vsel %vm428, %v426, -inf
    %430 = vmax.xlane.f32.xlu0 %v429
    %v431 = vpop.xlane.xlu0 %430
    %v433 = vperm.slane %v431, 0
    %v434 = vperm.slane %v431, 1
    %v435 = vperm.slane %v431, 2
    %v436 = vperm.slane %v431, 3
    %v441 = vsub.f32 %v395, %v433
    %v442 = vsub.f32 %v396, %v434
    %v443 = vsub.f32 %v397, %v435
    %v444 = vsub.f32 %v398, %v436
    %v445 = vmul.f32 %v441, 1.442695
    %v446 = vpow.pop %v445
    %v447 = vmul.f32 %v442, 1.442695
    %v448 = vpow.pop %v447
    %v449 = vmul.f32 %v443, 1.442695
    %v450 = vpow.pop %v449
    %v451 = vmul.f32 %v444, 1.442695
    %v452 = vpow.pop %v451
    %457 = vset.pattern.permute.xlu0 0
    %458 = vperm.xlu0 %457, %v446
    %v459 = vpop.permute.xlu0 %458
    %460 = vset.pattern.permute.xlu0 0
    %461 = vperm.xlu0 %460, %v448
    %v462 = vpop.permute.xlu0 %461
    %463 = vset.pattern.permute.xlu0 0
    %464 = vperm.xlu0 %463, %v450
    %v465 = vpop.permute.xlu0 %464
    %466 = vset.pattern.permute.xlu0 0
    %467 = vperm.xlu0 %466, %v452
    %v468 = vpop.permute.xlu0 %467
    %v469 = vperm.slane %v459, %v416
    %v470 = vperm.slane %v462, %v416
    %v471 = vperm.slane %v465, %v416
    %v472 = vperm.slane %v468, %v416
    %v473 = vsel %vm421, %v470, %v469
    %v474 = vsel %vm423, %v471, %v473
    %v475 = vsel %vm425, %v472, %v474
    %v477 = vsel %vm428, %v475, 0.0
    %478 = vadd.xlane.f32.xlu0 %v477
    %v479 = vpop.xlane.xlu0 %478
    %v481 = vperm.slane %v479, 0
    %v482 = vperm.slane %v479, 1
    %v483 = vperm.slane %v479, 2
    %v484 = vperm.slane %v479, 3
    %v489 = vrcp.pop %v481
    %v490 = vmul.f32 %v481, %v489
    %v491 = vsub.f32 1.0, %v490
    %v492 = vmul.f32 %v489, %v491
    %v493 = vadd.f32 %v489, %v492
    %vm494 = vweird.f32 %v481
    %vm495 = vweird.f32 %v489
    %vm496 = vmor %vm494, %vm495
    %v497 = vsel %vm496, %v489, %v493
    %v498 = vand.u32 2147483647, %v481
    %vm499 = vcmp.eq.f32.partialorder %v498, 8.507059e+37
    %v500 = vand.u32 %v481, 2147483648
    %v501 = vor.u32 1.1754944e-38, %v500
    %v502 = vsel %vm499, %v501, %v497
    %v503 = vmul.f32 %v446, %v502
    %v504 = vrcp.pop %v482
    %v505 = vmul.f32 %v482, %v504
    %v506 = vsub.f32 1.0, %v505
    %v507 = vmul.f32 %v504, %v506
    %v508 = vadd.f32 %v504, %v507
    %vm509 = vweird.f32 %v482
    %vm510 = vweird.f32 %v504
    %vm511 = vmor %vm509, %vm510
    %v512 = vsel %vm511, %v504, %v508
    %v513 = vand.u32 2147483647, %v482
    %vm514 = vcmp.eq.f32.partialorder %v513, 8.507059e+37
    %v515 = vand.u32 %v482, 2147483648
    %v516 = vor.u32 1.1754944e-38, %v515
    %v517 = vsel %vm514, %v516, %v512
    %v518 = vmul.f32 %v448, %v517
    %v519 = vrcp.pop %v483
    %v520 = vmul.f32 %v483, %v519
    %v521 = vsub.f32 1.0, %v520
    %v522 = vmul.f32 %v519, %v521
    %v523 = vadd.f32 %v519, %v522
    %vm524 = vweird.f32 %v483
    %vm525 = vweird.f32 %v519
    %vm526 = vmor %vm524, %vm525
    %v527 = vsel %vm526, %v519, %v523
    %v528 = vand.u32 2147483647, %v483
    %vm529 = vcmp.eq.f32.partialorder %v528, 8.507059e+37
    %v530 = vand.u32 %v483, 2147483648
    %v531 = vor.u32 1.1754944e-38, %v530
    %v532 = vsel %vm529, %v531, %v527
    %v533 = vmul.f32 %v450, %v532
    %v534 = vrcp.pop %v484
    %v535 = vmul.f32 %v484, %v534
    %v536 = vsub.f32 1.0, %v535
    %v537 = vmul.f32 %v534, %v536
    %v538 = vadd.f32 %v534, %v537
    %vm539 = vweird.f32 %v484
    %vm540 = vweird.f32 %v534
    %vm541 = vmor %vm539, %vm540
    %v542 = vsel %vm541, %v534, %v538
    %v543 = vand.u32 2147483647, %v484
    %vm544 = vcmp.eq.f32.partialorder %v543, 8.507059e+37
    %v545 = vand.u32 %v484, 2147483648
    %v546 = vor.u32 1.1754944e-38, %v545
    %v547 = vsel %vm544, %v546, %v542
    %v548 = vmul.f32 %v452, %v547
    %553 = vset.pattern.permute.xlu0 0
    %554 = vperm.xlu0 %553, %v503
    %v555 = vpop.permute.xlu0 %554
    %556 = vset.pattern.permute.xlu0 0
    %557 = vperm.xlu0 %556, %v518
    %v558 = vpop.permute.xlu0 %557
    %559 = vset.pattern.permute.xlu0 0
    %560 = vperm.xlu0 %559, %v533
    %v561 = vpop.permute.xlu0 %560
    %562 = vset.pattern.permute.xlu0 0
    %563 = vperm.xlu0 %562, %v548
    %v564 = vpop.permute.xlu0 %563
    %v565 = vperm.slane %v555, %v416
    %v566 = vperm.slane %v558, %v416
    %v567 = vperm.slane %v561, %v416
    %v568 = vperm.slane %v564, %v416
    %v569 = vsel %vm421, %v566, %v565
    %v570 = vsel %vm423, %v567, %v569
    %v571 = vsel %vm425, %v568, %v570
    %v572 = vsel %vm189, %v571, 0
    %v574 = vsel %vm169, %v248, 0
    %576 = vmatpush.msra.mxu0 0.0
    %577 = vmatpush.msra.mxu0 0.0
    %578 = vmatpush.msra.mxu0 0.0
    %579 = vmatpush.msra.mxu0 0.0
    %580 = vmatpush.msra.mxu0 0.0
    %581 = vmatpush.msra.mxu0 0.0
    %582 = vmatpush.msra.mxu0 0.0
    %583 = vmatpush.msra.mxu0 0.0
    %584 = vmatpush.msra.mxu0 0.0
    %585 = vmatpush.msra.mxu0 0.0
    %586 = vmatpush.msra.mxu0 0.0
    %587 = vmatpush.msra.mxu0 0.0
    %588 = vmatpush.msra.mxu0 0.0
    %589 = vmatpush.msra.mxu0 0.0
    %590 = vmatpush.msra.mxu0 0.0
    %591 = vmatpush.msra.mxu0 %v574
    %592 = vmatmul.f32.gmra.mxu0 %v572
    %v593 = vpop.f32.mrf.mxu0
    %v594 = vadd.f32 0.0, %v593
    %595 = vdwg.mxu0
    %v596 = vxor.u32 %v594, 2147483648
    %v597 = vmul.f32 %v596, 1.442695
    %v598 = vpow.pop %v597
    %v599 = vadd.f32 %v598, 1.0
    %v600 = vrcp.pop %v599
    %v601 = vmul.f32 %v599, %v600
    %v602 = vsub.f32 1.0, %v601
    %v603 = vmul.f32 %v600, %v602
    %v604 = vadd.f32 %v600, %v603
    %vm605 = vweird.f32 %v599
    %vm606 = vweird.f32 %v600
    %vm607 = vmor %vm605, %vm606
    %v608 = vsel %vm607, %v600, %v604
    %v609 = vand.u32 2147483647, %v599
    %vm610 = vcmp.eq.f32.partialorder %v609, 8.507059e+37
    %v611 = vand.u32 %v599, 2147483648
    %v612 = vor.u32 1.1754944e-38, %v611
    %v613 = vsel %vm610, %v612, %v608
    %v614 = vmul.f32 1.0, %v613
    %615 = vxpose.xlu0.b32.start [1/16] %v614, 128
    %616 = vxpose.xlu0.b32.cont [2/16] 0.0, 128
    %617 = vxpose.xlu0.b32.cont [3/16] 0.0, 128
    %618 = vxpose.xlu0.b32.cont [4/16] 0.0, 128
    %619 = vxpose.xlu0.b32.cont [5/16] 0.0, 128
    %620 = vxpose.xlu0.b32.cont [6/16] 0.0, 128
    %621 = vxpose.xlu0.b32.cont [7/16] 0.0, 128
    %622 = vxpose.xlu0.b32.cont [8/16] 0.0, 128
    %623 = vxpose.xlu0.b32.cont [9/16] 0.0, 128
    %624 = vxpose.xlu0.b32.cont [10/16] 0.0, 128
    %625 = vxpose.xlu0.b32.cont [11/16] 0.0, 128
    %626 = vxpose.xlu0.b32.cont [12/16] 0.0, 128
    %627 = vxpose.xlu0.b32.cont [13/16] 0.0, 128
    %628 = vxpose.xlu0.b32.cont [14/16] 0.0, 128
    %629 = vxpose.xlu0.b32.cont [15/16] 0.0, 128
    %630 = vxpose.xlu0.b32.end [16/16] 0.0, 128
    %v631 = vpop.trf.xlu0
    %v632 = vpop.trf.xlu0
    %v633 = vpop.trf.xlu0
    %v634 = vpop.trf.xlu0
    %v635 = vpop.trf.xlu0
    %v636 = vpop.trf.xlu0
    %v637 = vpop.trf.xlu0
    %v638 = vpop.trf.xlu0
    %v639 = vpop.trf.xlu0
    %v640 = vpop.trf.xlu0
    %v641 = vpop.trf.xlu0
    %v642 = vpop.trf.xlu0
    %v643 = vpop.trf.xlu0
    %v644 = vpop.trf.xlu0
    %v645 = vpop.trf.xlu0
    %v646 = vpop.trf.xlu0
    %650 = vst [vmem:[#allocation1] ss:$2 sm:$0xff] %v136
    %s651 = scalar_lea.vmem [#allocation1], 16
    %652 = vst [vmem:[%s651] ss:$2 sm:$0xff] %v137
    %s653 = scalar_lea.vmem [#allocation1], 32
    %654 = vst [vmem:[%s653] ss:$2 sm:$0xff] %v138
    %v655 = vld.sshfl [vmem:[#allocation1] sm:$0xff pattern:$0x75316420]
    %v656 = vld.sshfl [vmem:[#allocation1 + $0x8] sm:$0xff pattern:$0x75316420]
    %v657 = vld.sshfl [vmem:[#allocation1 + $0x10] sm:$0xff pattern:$0x75316420]
    %v658 = vld.sshfl [vmem:[#allocation1 + $0x18] sm:$0xff pattern:$0x75316420]
    %v659 = vld.sshfl [vmem:[#allocation1 + $0x20] sm:$0xff pattern:$0x75316420]
    %v661 = vsel %vm189, %v631, 0
    %v663 = vsel %vm169, %v655, 0
    %v665 = vsel %vm169, %v656, 0
    %v667 = vsel %vm169, %v657, 0
    %v669 = vsel %vm169, %v658, 0
    %v671 = vsel %vm169, %v659, 0
    %673 = vmatpush.msra.mxu0 0.0
    %674 = vmatpush.msra.mxu0 0.0
    %675 = vmatpush.msra.mxu0 0.0
    %676 = vmatpush.msra.mxu0 0.0
    %677 = vmatpush.msra.mxu0 0.0
    %678 = vmatpush.msra.mxu0 0.0
    %679 = vmatpush.msra.mxu0 0.0
    %680 = vmatpush.msra.mxu0 0.0
    %681 = vmatpush.msra.mxu0 0.0
    %682 = vmatpush.msra.mxu0 0.0
    %683 = vmatpush.msra.mxu0 0.0
    %684 = vmatpush.msra.mxu0 0.0
    %685 = vmatpush.msra.mxu0 0.0
    %686 = vmatpush.msra.mxu0 0.0
    %687 = vmatpush.msra.mxu0 0.0
    %688 = vmatpush.msra.mxu0 %v663
    %689 = vmatmul.f32.gmra.mxu0 %v661
    %v690 = vpop.f32.mrf.mxu0
    %v691 = vadd.f32 0.0, %v690
    %692 = vdwg.mxu0
    %693 = vmatpush.msra.mxu0 0.0
    %694 = vmatpush.msra.mxu0 0.0
    %695 = vmatpush.msra.mxu0 0.0
    %696 = vmatpush.msra.mxu0 0.0
    %697 = vmatpush.msra.mxu0 0.0
    %698 = vmatpush.msra.mxu0 0.0
    %699 = vmatpush.msra.mxu0 0.0
    %700 = vmatpush.msra.mxu0 0.0
    %701 = vmatpush.msra.mxu0 0.0
    %702 = vmatpush.msra.mxu0 0.0
    %703 = vmatpush.msra.mxu0 0.0
    %704 = vmatpush.msra.mxu0 0.0
    %705 = vmatpush.msra.mxu0 0.0
    %706 = vmatpush.msra.mxu0 0.0
    %707 = vmatpush.msra.mxu0 0.0
    %708 = vmatpush.msra.mxu0 %v665
    %709 = vmatmul.f32.gmra.mxu0 %v661
    %v710 = vpop.f32.mrf.mxu0
    %v711 = vadd.f32 0.0, %v710
    %712 = vdwg.mxu0
    %713 = vmatpush.msra.mxu0 0.0
    %714 = vmatpush.msra.mxu0 0.0
    %715 = vmatpush.msra.mxu0 0.0
    %716 = vmatpush.msra.mxu0 0.0
    %717 = vmatpush.msra.mxu0 0.0
    %718 = vmatpush.msra.mxu0 0.0
    %719 = vmatpush.msra.mxu0 0.0
    %720 = vmatpush.msra.mxu0 0.0
    %721 = vmatpush.msra.mxu0 0.0
    %722 = vmatpush.msra.mxu0 0.0
    %723 = vmatpush.msra.mxu0 0.0
    %724 = vmatpush.msra.mxu0 0.0
    %725 = vmatpush.msra.mxu0 0.0
    %726 = vmatpush.msra.mxu0 0.0
    %727 = vmatpush.msra.mxu0 0.0
    %728 = vmatpush.msra.mxu0 %v667
    %729 = vmatmul.f32.gmra.mxu0 %v661
    %v730 = vpop.f32.mrf.mxu0
    %v731 = vadd.f32 0.0, %v730
    %732 = vdwg.mxu0
    %733 = vmatpush.msra.mxu0 0.0
    %734 = vmatpush.msra.mxu0 0.0
    %735 = vmatpush.msra.mxu0 0.0
    %736 = vmatpush.msra.mxu0 0.0
    %737 = vmatpush.msra.mxu0 0.0
    %738 = vmatpush.msra.mxu0 0.0
    %739 = vmatpush.msra.mxu0 0.0
    %740 = vmatpush.msra.mxu0 0.0
    %741 = vmatpush.msra.mxu0 0.0
    %742 = vmatpush.msra.mxu0 0.0
    %743 = vmatpush.msra.mxu0 0.0
    %744 = vmatpush.msra.mxu0 0.0
    %745 = vmatpush.msra.mxu0 0.0
    %746 = vmatpush.msra.mxu0 0.0
    %747 = vmatpush.msra.mxu0 0.0
    %748 = vmatpush.msra.mxu0 %v669
    %749 = vmatmul.f32.gmra.mxu0 %v661
    %v750 = vpop.f32.mrf.mxu0
    %v751 = vadd.f32 0.0, %v750
    %752 = vdwg.mxu0
    %753 = vmatpush.msra.mxu0 0.0
    %754 = vmatpush.msra.mxu0 0.0
    %755 = vmatpush.msra.mxu0 0.0
    %756 = vmatpush.msra.mxu0 0.0
    %757 = vmatpush.msra.mxu0 0.0
    %758 = vmatpush.msra.mxu0 0.0
    %759 = vmatpush.msra.mxu0 0.0
    %760 = vmatpush.msra.mxu0 0.0
    %761 = vmatpush.msra.mxu0 0.0
    %762 = vmatpush.msra.mxu0 0.0
    %763 = vmatpush.msra.mxu0 0.0
    %764 = vmatpush.msra.mxu0 0.0
    %765 = vmatpush.msra.mxu0 0.0
    %766 = vmatpush.msra.mxu0 0.0
    %767 = vmatpush.msra.mxu0 0.0
    %768 = vmatpush.msra.mxu0 %v671
    %769 = vmatmul.f32.gmra.mxu0 %v661
    %v770 = vpop.f32.mrf.mxu0
    %v771 = vadd.f32 0.0, %v770
    %772 = vdwg.mxu0
    %776 = vst [vmem:[#allocation1] ss:$2 sm:$0xff] %v133
    %s777 = scalar_lea.vmem [#allocation1], 16
    %778 = vst [vmem:[%s777] ss:$2 sm:$0xff] %v134
    %s779 = scalar_lea.vmem [#allocation1], 32
    %780 = vst [vmem:[%s779] ss:$2 sm:$0xff] %v135
    %v781 = vld.sshfl [vmem:[#allocation1] sm:$0xff pattern:$0x75316420]
    %v782 = vld.sshfl [vmem:[#allocation1 + $0x8] sm:$0xff pattern:$0x75316420]
    %v783 = vld.sshfl [vmem:[#allocation1 + $0x10] sm:$0xff pattern:$0x75316420]
    %v784 = vld.sshfl [vmem:[#allocation1 + $0x18] sm:$0xff pattern:$0x75316420]
    %v785 = vld.sshfl [vmem:[#allocation1 + $0x20] sm:$0xff pattern:$0x75316420]
    %v787 = vsel %vm189, %v231, 0
    %v789 = vsel %vm169, %v781, 0
    %v791 = vsel %vm169, %v782, 0
    %v793 = vsel %vm169, %v783, 0
    %v795 = vsel %vm169, %v784, 0
    %v797 = vsel %vm169, %v785, 0
    %799 = vmatpush.msra.mxu0 0.0
    %800 = vmatpush.msra.mxu0 0.0
    %801 = vmatpush.msra.mxu0 0.0
    %802 = vmatpush.msra.mxu0 0.0
    %803 = vmatpush.msra.mxu0 0.0
    %804 = vmatpush.msra.mxu0 0.0
    %805 = vmatpush.msra.mxu0 0.0
    %806 = vmatpush.msra.mxu0 0.0
    %807 = vmatpush.msra.mxu0 0.0
    %808 = vmatpush.msra.mxu0 0.0
    %809 = vmatpush.msra.mxu0 0.0
    %810 = vmatpush.msra.mxu0 0.0
    %811 = vmatpush.msra.mxu0 0.0
    %812 = vmatpush.msra.mxu0 0.0
    %813 = vmatpush.msra.mxu0 0.0
    %814 = vmatpush.msra.mxu0 %v789
    %815 = vmatmul.f32.gmra.mxu0 %v787
    %v816 = vpop.f32.mrf.mxu0
    %v817 = vadd.f32 %v691, %v816
    %818 = vdwg.mxu0
    %819 = vmatpush.msra.mxu0 0.0
    %820 = vmatpush.msra.mxu0 0.0
    %821 = vmatpush.msra.mxu0 0.0
    %822 = vmatpush.msra.mxu0 0.0
    %823 = vmatpush.msra.mxu0 0.0
    %824 = vmatpush.msra.mxu0 0.0
    %825 = vmatpush.msra.mxu0 0.0
    %826 = vmatpush.msra.mxu0 0.0
    %827 = vmatpush.msra.mxu0 0.0
    %828 = vmatpush.msra.mxu0 0.0
    %829 = vmatpush.msra.mxu0 0.0
    %830 = vmatpush.msra.mxu0 0.0
    %831 = vmatpush.msra.mxu0 0.0
    %832 = vmatpush.msra.mxu0 0.0
    %833 = vmatpush.msra.mxu0 0.0
    %834 = vmatpush.msra.mxu0 %v791
    %835 = vmatmul.f32.gmra.mxu0 %v787
    %v836 = vpop.f32.mrf.mxu0
    %v837 = vadd.f32 %v711, %v836
    %838 = vdwg.mxu0
    %839 = vmatpush.msra.mxu0 0.0
    %840 = vmatpush.msra.mxu0 0.0
    %841 = vmatpush.msra.mxu0 0.0
    %842 = vmatpush.msra.mxu0 0.0
    %843 = vmatpush.msra.mxu0 0.0
    %844 = vmatpush.msra.mxu0 0.0
    %845 = vmatpush.msra.mxu0 0.0
    %846 = vmatpush.msra.mxu0 0.0
    %847 = vmatpush.msra.mxu0 0.0
    %848 = vmatpush.msra.mxu0 0.0
    %849 = vmatpush.msra.mxu0 0.0
    %850 = vmatpush.msra.mxu0 0.0
    %851 = vmatpush.msra.mxu0 0.0
    %852 = vmatpush.msra.mxu0 0.0
    %853 = vmatpush.msra.mxu0 0.0
    %854 = vmatpush.msra.mxu0 %v793
    %855 = vmatmul.f32.gmra.mxu0 %v787
    %v856 = vpop.f32.mrf.mxu0
    %v857 = vadd.f32 %v731, %v856
    %858 = vdwg.mxu0
    %859 = vmatpush.msra.mxu0 0.0
    %860 = vmatpush.msra.mxu0 0.0
    %861 = vmatpush.msra.mxu0 0.0
    %862 = vmatpush.msra.mxu0 0.0
    %863 = vmatpush.msra.mxu0 0.0
    %864 = vmatpush.msra.mxu0 0.0
    %865 = vmatpush.msra.mxu0 0.0
    %866 = vmatpush.msra.mxu0 0.0
    %867 = vmatpush.msra.mxu0 0.0
    %868 = vmatpush.msra.mxu0 0.0
    %869 = vmatpush.msra.mxu0 0.0
    %870 = vmatpush.msra.mxu0 0.0
    %871 = vmatpush.msra.mxu0 0.0
    %872 = vmatpush.msra.mxu0 0.0
    %873 = vmatpush.msra.mxu0 0.0
    %874 = vmatpush.msra.mxu0 %v795
    %875 = vmatmul.f32.gmra.mxu0 %v787
    %v876 = vpop.f32.mrf.mxu0
    %v877 = vadd.f32 %v751, %v876
    %878 = vdwg.mxu0
    %879 = vmatpush.msra.mxu0 0.0
    %880 = vmatpush.msra.mxu0 0.0
    %881 = vmatpush.msra.mxu0 0.0
    %882 = vmatpush.msra.mxu0 0.0
    %883 = vmatpush.msra.mxu0 0.0
    %884 = vmatpush.msra.mxu0 0.0
    %885 = vmatpush.msra.mxu0 0.0
    %886 = vmatpush.msra.mxu0 0.0
    %887 = vmatpush.msra.mxu0 0.0
    %888 = vmatpush.msra.mxu0 0.0
    %889 = vmatpush.msra.mxu0 0.0
    %890 = vmatpush.msra.mxu0 0.0
    %891 = vmatpush.msra.mxu0 0.0
    %892 = vmatpush.msra.mxu0 0.0
    %893 = vmatpush.msra.mxu0 0.0
    %894 = vmatpush.msra.mxu0 %v797
    %895 = vmatmul.f32.gmra.mxu0 %v787
    %v896 = vpop.f32.mrf.mxu0
    %v897 = vadd.f32 %v771, %v896
    %898 = vdwg.mxu0
    %s899 = scalar_lea.vmem %s1, 8
    %v900 = vld [vmem:[%s899] sm:$0xff]
    %v902 = vrot.slane %v900, 5
    %v904 = vsel %vm143, 0.0, %v902
    %v905 = vsel %vm143, %v902, 0.0
    %v908 = vrot.slane %v904, 1
    %v909 = vrot.slane %v905, 1
    %v910 = vsel %vm148, %v908, %v909
    %911 = vrot.lane.b32.xlu0 %v910, 4
    %v912 = vpop.permute.xlu0 %911
    %v914 = vrot.slane %v904, 2
    %v915 = vrot.slane %v905, 2
    %v916 = vsel %vm155, %v914, %v915
    %917 = vrot.lane.b32.xlu0 %v916, 8
    %v918 = vpop.permute.xlu0 %917
    %v920 = vrot.slane %v904, 3
    %v921 = vrot.slane %v905, 3
    %v922 = vsel %vm162, %v920, %v921
    %923 = vrot.lane.b32.xlu0 %v922, 12
    %v924 = vpop.permute.xlu0 %923
    %v926 = vrot.slane %v904, 4
    %v927 = vrot.slane %v905, 4
    %v928 = vsel %vm169, %v926, %v927
    %929 = vrot.lane.b32.xlu0 %v928, 16
    %v930 = vpop.permute.xlu0 %929
    %v932 = vrot.slane %v904, 5
    %v933 = vrot.slane %v905, 5
    %v934 = vsel %vm143, %v932, %v933
    %935 = vrot.lane.b32.xlu0 %v934, 20
    %v936 = vpop.permute.xlu0 %935
    %v938 = vrot.slane %v904, 6
    %v939 = vrot.slane %v905, 6
    %v940 = vsel %vm182, %v938, %v939
    %941 = vrot.lane.b32.xlu0 %v940, 24
    %v942 = vpop.permute.xlu0 %941
    %v944 = vsel %vm189, %v904, %v912
    %v945 = vsel %vm191, %v944, %v918
    %v946 = vsel %vm193, %v945, %v924
    %v947 = vsel %vm195, %v946, %v930
    %v948 = vsel %vm197, %v947, %v936
    %v949 = vsel %vm199, %v948, %v942
    %v951 = vsel %vm204, %v949, 0
    %953 = vmatpush.msra.mxu0 0.0
    %954 = vmatpush.msra.mxu0 0.0
    %955 = vmatpush.msra.mxu0 0.0
    %956 = vmatpush.msra.mxu0 0.0
    %957 = vmatpush.msra.mxu0 0.0
    %958 = vmatpush.msra.mxu0 0.0
    %959 = vmatpush.msra.mxu0 0.0
    %960 = vmatpush.msra.mxu0 0.0
    %961 = vmatpush.msra.mxu0 0.0
    %962 = vmatpush.msra.mxu0 0.0
    %963 = vmatpush.msra.mxu0 0.0
    %964 = vmatpush.msra.mxu0 0.0
    %965 = vmatpush.msra.mxu0 %v209
    %966 = vmatpush.msra.mxu0 %v125
    %967 = vmatpush.msra.mxu0 %v124
    %968 = vmatpush.msra.mxu0 %v123
    %969 = vmatmul.f32.gmra.mxu0 %v951
    %v970 = vpop.f32.mrf.mxu0
    %v971 = vadd.f32 %v202, %v970
    %972 = vdwg.mxu0
    %v973 = vmax.f32 %v971, 0.0
    %974 = vxpose.xlu0.b32.start [1/16] %v973, 128
    %975 = vxpose.xlu0.b32.cont [2/16] 0.0, 128
    %976 = vxpose.xlu0.b32.cont [3/16] 0.0, 128
    %977 = vxpose.xlu0.b32.cont [4/16] 0.0, 128
    %978 = vxpose.xlu0.b32.cont [5/16] 0.0, 128
    %979 = vxpose.xlu0.b32.cont [6/16] 0.0, 128
    %980 = vxpose.xlu0.b32.cont [7/16] 0.0, 128
    %981 = vxpose.xlu0.b32.cont [8/16] 0.0, 128
    %982 = vxpose.xlu0.b32.cont [9/16] 0.0, 128
    %983 = vxpose.xlu0.b32.cont [10/16] 0.0, 128
    %984 = vxpose.xlu0.b32.cont [11/16] 0.0, 128
    %985 = vxpose.xlu0.b32.cont [12/16] 0.0, 128
    %986 = vxpose.xlu0.b32.cont [13/16] 0.0, 128
    %987 = vxpose.xlu0.b32.cont [14/16] 0.0, 128
    %988 = vxpose.xlu0.b32.cont [15/16] 0.0, 128
    %989 = vxpose.xlu0.b32.end [16/16] 0.0, 128
    %v990 = vpop.trf.xlu0
    %v991 = vpop.trf.xlu0
    %v992 = vpop.trf.xlu0
    %v993 = vpop.trf.xlu0
    %v994 = vpop.trf.xlu0
    %v995 = vpop.trf.xlu0
    %v996 = vpop.trf.xlu0
    %v997 = vpop.trf.xlu0
    %v998 = vpop.trf.xlu0
    %v999 = vpop.trf.xlu0
    %v1000 = vpop.trf.xlu0
    %v1001 = vpop.trf.xlu0
    %v1002 = vpop.trf.xlu0
    %v1003 = vpop.trf.xlu0
    %v1004 = vpop.trf.xlu0
    %v1005 = vpop.trf.xlu0
    %v1007 = vsel %vm191, %v990, 0
    %1009 = vmatpush.msra.mxu0 0.0
    %1010 = vmatpush.msra.mxu0 0.0
    %1011 = vmatpush.msra.mxu0 0.0
    %1012 = vmatpush.msra.mxu0 0.0
    %1013 = vmatpush.msra.mxu0 0.0
    %1014 = vmatpush.msra.mxu0 0.0
    %1015 = vmatpush.msra.mxu0 0.0
    %1016 = vmatpush.msra.mxu0 0.0
    %1017 = vmatpush.msra.mxu0 0.0
    %1018 = vmatpush.msra.mxu0 0.0
    %1019 = vmatpush.msra.mxu0 0.0
    %1020 = vmatpush.msra.mxu0 0.0
    %1021 = vmatpush.msra.mxu0 0.0
    %1022 = vmatpush.msra.mxu0 0.0
    %1023 = vmatpush.msra.mxu0 0.0
    %1024 = vmatpush.msra.mxu0 %v128
    %1025 = vmatmul.f32.gmra.mxu0 %v1007
    %v1026 = vpop.f32.mrf.mxu0
    %v1027 = vadd.f32 0.0, %v1026
    %1028 = vdwg.mxu0
    %1029 = vmatpush.msra.mxu0 0.0
    %1030 = vmatpush.msra.mxu0 0.0
    %1031 = vmatpush.msra.mxu0 0.0
    %1032 = vmatpush.msra.mxu0 0.0
    %1033 = vmatpush.msra.mxu0 0.0
    %1034 = vmatpush.msra.mxu0 0.0
    %1035 = vmatpush.msra.mxu0 0.0
    %1036 = vmatpush.msra.mxu0 0.0
    %1037 = vmatpush.msra.mxu0 0.0
    %1038 = vmatpush.msra.mxu0 0.0
    %1039 = vmatpush.msra.mxu0 0.0
    %1040 = vmatpush.msra.mxu0 0.0
    %1041 = vmatpush.msra.mxu0 0.0
    %1042 = vmatpush.msra.mxu0 0.0
    %1043 = vmatpush.msra.mxu0 0.0
    %1044 = vmatpush.msra.mxu0 %v129
    %1045 = vmatmul.f32.gmra.mxu0 %v1007
    %v1046 = vpop.f32.mrf.mxu0
    %v1047 = vadd.f32 0.0, %v1046
    %1048 = vdwg.mxu0
    %v1050 = vrot.slane %v1027, 1
    %v1051 = vrot.slane %v1027, 2
    %v1052 = vrot.slane %v1027, 3
    %v1053 = vperm.slane %v1027, 0
    %v1054 = vperm.slane %v1050, 0
    %v1055 = vperm.slane %v1051, 0
    %v1056 = vperm.slane %v1052, 0
    %v1061 = vadd.f32 %v1053, %v1047
    %v1062 = vadd.f32 %v1054, %v1047
    %v1063 = vadd.f32 %v1055, %v1047
    %v1064 = vadd.f32 %v1056, %v1047
    %v1065 = vadd.f32 %v1061, %v324
    %v1066 = vadd.f32 %v1062, %v324
    %v1067 = vadd.f32 %v1063, %v324
    %v1068 = vadd.f32 %v1064, %v324
    %vm1069 = vcmp.ge.f32.partialorder %v1065, 0.0
    %vm1070 = vcmp.ge.f32.partialorder %v1066, 0.0
    %vm1071 = vcmp.ge.f32.partialorder %v1067, 0.0
    %vm1072 = vcmp.ge.f32.partialorder %v1068, 0.0
    %v1073 = vmul.f32 %v1065, 0.2
    %v1074 = vmul.f32 %v1066, 0.2
    %v1075 = vmul.f32 %v1067, 0.2
    %v1076 = vmul.f32 %v1068, 0.2
    %v1077 = vsel %vm1069, %v1065, %v1073
    %v1078 = vsel %vm1070, %v1066, %v1074
    %v1079 = vsel %vm1071, %v1067, %v1075
    %v1080 = vsel %vm1072, %v1068, %v1076
    %v1081 = vmul.f32 %v1077, %v343
    %v1082 = vmul.f32 %v1078, %v343
    %v1083 = vmul.f32 %v1079, %v343
    %v1084 = vmul.f32 %v1080, %v343
    %v1085 = vsel %vm349, %v1081, 0.0
    %1086 = vadd.xlane.f32.xlu0 %v1085
    %v1087 = vpop.xlane.xlu0 %1086
    %v1088 = vsel %vm349, %v1082, 0.0
    %1089 = vadd.xlane.f32.xlu0 %v1088
    %v1090 = vpop.xlane.xlu0 %1089
    %v1091 = vsel %vm349, %v1083, 0.0
    %1092 = vadd.xlane.f32.xlu0 %v1091
    %v1093 = vpop.xlane.xlu0 %1092
    %v1094 = vsel %vm349, %v1084, 0.0
    %1095 = vadd.xlane.f32.xlu0 %v1094
    %v1096 = vpop.xlane.xlu0 %1095
    %v1097 = vadd.f32 %v1087, %v369
    %v1098 = vadd.f32 %v1090, %v376
    %v1099 = vadd.f32 %v1093, %v383
    %v1100 = vadd.f32 %v1096, %v390
    %1105 = vset.pattern.permute.xlu0 0
    %1106 = vperm.xlu0 %1105, %v1097
    %v1107 = vpop.permute.xlu0 %1106
    %1108 = vset.pattern.permute.xlu0 0
    %1109 = vperm.xlu0 %1108, %v1098
    %v1110 = vpop.permute.xlu0 %1109
    %1111 = vset.pattern.permute.xlu0 0
    %1112 = vperm.xlu0 %1111, %v1099
    %v1113 = vpop.permute.xlu0 %1112
    %1114 = vset.pattern.permute.xlu0 0
    %1115 = vperm.xlu0 %1114, %v1100
    %v1116 = vpop.permute.xlu0 %1115
    %v1117 = vperm.slane %v1107, %v416
    %v1118 = vperm.slane %v1110, %v416
    %v1119 = vperm.slane %v1113, %v416
    %v1120 = vperm.slane %v1116, %v416
    %v1121 = vsel %vm421, %v1118, %v1117
    %v1122 = vsel %vm423, %v1119, %v1121
    %v1123 = vsel %vm425, %v1120, %v1122
    %v1125 = vsel %vm428, %v1123, -inf
    %1126 = vmax.xlane.f32.xlu0 %v1125
    %v1127 = vpop.xlane.xlu0 %1126
    %v1129 = vperm.slane %v1127, 0
    %v1130 = vperm.slane %v1127, 1
    %v1131 = vperm.slane %v1127, 2
    %v1132 = vperm.slane %v1127, 3
    %v1137 = vsub.f32 %v1097, %v1129
    %v1138 = vsub.f32 %v1098, %v1130
    %v1139 = vsub.f32 %v1099, %v1131
    %v1140 = vsub.f32 %v1100, %v1132
    %v1141 = vmul.f32 %v1137, 1.442695
    %v1142 = vpow.pop %v1141
    %v1143 = vmul.f32 %v1138, 1.442695
    %v1144 = vpow.pop %v1143
    %v1145 = vmul.f32 %v1139, 1.442695
    %v1146 = vpow.pop %v1145
    %v1147 = vmul.f32 %v1140, 1.442695
    %v1148 = vpow.pop %v1147
    %1153 = vset.pattern.permute.xlu0 0
    %1154 = vperm.xlu0 %1153, %v1142
    %v1155 = vpop.permute.xlu0 %1154
    %1156 = vset.pattern.permute.xlu0 0
    %1157 = vperm.xlu0 %1156, %v1144
    %v1158 = vpop.permute.xlu0 %1157
    %1159 = vset.pattern.permute.xlu0 0
    %1160 = vperm.xlu0 %1159, %v1146
    %v1161 = vpop.permute.xlu0 %1160
    %1162 = vset.pattern.permute.xlu0 0
    %1163 = vperm.xlu0 %1162, %v1148
    %v1164 = vpop.permute.xlu0 %1163
    %v1165 = vperm.slane %v1155, %v416
    %v1166 = vperm.slane %v1158, %v416
    %v1167 = vperm.slane %v1161, %v416
    %v1168 = vperm.slane %v1164, %v416
    %v1169 = vsel %vm421, %v1166, %v1165
    %v1170 = vsel %vm423, %v1167, %v1169
    %v1171 = vsel %vm425, %v1168, %v1170
    %v1173 = vsel %vm428, %v1171, 0.0
    %1174 = vadd.xlane.f32.xlu0 %v1173
    %v1175 = vpop.xlane.xlu0 %1174
    %v1177 = vperm.slane %v1175, 0
    %v1178 = vperm.slane %v1175, 1
    %v1179 = vperm.slane %v1175, 2
    %v1180 = vperm.slane %v1175, 3
    %v1185 = vrcp.pop %v1177
    %v1186 = vmul.f32 %v1177, %v1185
    %v1187 = vsub.f32 1.0, %v1186
    %v1188 = vmul.f32 %v1185, %v1187
    %v1189 = vadd.f32 %v1185, %v1188
    %vm1190 = vweird.f32 %v1177
    %vm1191 = vweird.f32 %v1185
    %vm1192 = vmor %vm1190, %vm1191
    %v1193 = vsel %vm1192, %v1185, %v1189
    %v1194 = vand.u32 2147483647, %v1177
    %vm1195 = vcmp.eq.f32.partialorder %v1194, 8.507059e+37
    %v1196 = vand.u32 %v1177, 2147483648
    %v1197 = vor.u32 1.1754944e-38, %v1196
    %v1198 = vsel %vm1195, %v1197, %v1193
    %v1199 = vmul.f32 %v1142, %v1198
    %v1200 = vrcp.pop %v1178
    %v1201 = vmul.f32 %v1178, %v1200
    %v1202 = vsub.f32 1.0, %v1201
    %v1203 = vmul.f32 %v1200, %v1202
    %v1204 = vadd.f32 %v1200, %v1203
    %vm1205 = vweird.f32 %v1178
    %vm1206 = vweird.f32 %v1200
    %vm1207 = vmor %vm1205, %vm1206
    %v1208 = vsel %vm1207, %v1200, %v1204
    %v1209 = vand.u32 2147483647, %v1178
    %vm1210 = vcmp.eq.f32.partialorder %v1209, 8.507059e+37
    %v1211 = vand.u32 %v1178, 2147483648
    %v1212 = vor.u32 1.1754944e-38, %v1211
    %v1213 = vsel %vm1210, %v1212, %v1208
    %v1214 = vmul.f32 %v1144, %v1213
    %v1215 = vrcp.pop %v1179
    %v1216 = vmul.f32 %v1179, %v1215
    %v1217 = vsub.f32 1.0, %v1216
    %v1218 = vmul.f32 %v1215, %v1217
    %v1219 = vadd.f32 %v1215, %v1218
    %vm1220 = vweird.f32 %v1179
    %vm1221 = vweird.f32 %v1215
    %vm1222 = vmor %vm1220, %vm1221
    %v1223 = vsel %vm1222, %v1215, %v1219
    %v1224 = vand.u32 2147483647, %v1179
    %vm1225 = vcmp.eq.f32.partialorder %v1224, 8.507059e+37
    %v1226 = vand.u32 %v1179, 2147483648
    %v1227 = vor.u32 1.1754944e-38, %v1226
    %v1228 = vsel %vm1225, %v1227, %v1223
    %v1229 = vmul.f32 %v1146, %v1228
    %v1230 = vrcp.pop %v1180
    %v1231 = vmul.f32 %v1180, %v1230
    %v1232 = vsub.f32 1.0, %v1231
    %v1233 = vmul.f32 %v1230, %v1232
    %v1234 = vadd.f32 %v1230, %v1233
    %vm1235 = vweird.f32 %v1180
    %vm1236 = vweird.f32 %v1230
    %vm1237 = vmor %vm1235, %vm1236
    %v1238 = vsel %vm1237, %v1230, %v1234
    %v1239 = vand.u32 2147483647, %v1180
    %vm1240 = vcmp.eq.f32.partialorder %v1239, 8.507059e+37
    %v1241 = vand.u32 %v1180, 2147483648
    %v1242 = vor.u32 1.1754944e-38, %v1241
    %v1243 = vsel %vm1240, %v1242, %v1238
    %v1244 = vmul.f32 %v1148, %v1243
    %1249 = vset.pattern.permute.xlu0 0
    %1250 = vperm.xlu0 %1249, %v1199
    %v1251 = vpop.permute.xlu0 %1250
    %1252 = vset.pattern.permute.xlu0 0
    %1253 = vperm.xlu0 %1252, %v1214
    %v1254 = vpop.permute.xlu0 %1253
    %1255 = vset.pattern.permute.xlu0 0
    %1256 = vperm.xlu0 %1255, %v1229
    %v1257 = vpop.permute.xlu0 %1256
    %1258 = vset.pattern.permute.xlu0 0
    %1259 = vperm.xlu0 %1258, %v1244
    %v1260 = vpop.permute.xlu0 %1259
    %v1261 = vperm.slane %v1251, %v416
    %v1262 = vperm.slane %v1254, %v416
    %v1263 = vperm.slane %v1257, %v416
    %v1264 = vperm.slane %v1260, %v416
    %v1265 = vsel %vm421, %v1262, %v1261
    %v1266 = vsel %vm423, %v1263, %v1265
    %v1267 = vsel %vm425, %v1264, %v1266
    %v1268 = vsel %vm189, %v1267, 0
    %v1270 = vsel %vm169, %v990, 0
    %1272 = vmatpush.msra.mxu0 0.0
    %1273 = vmatpush.msra.mxu0 0.0
    %1274 = vmatpush.msra.mxu0 0.0
    %1275 = vmatpush.msra.mxu0 0.0
    %1276 = vmatpush.msra.mxu0 0.0
    %1277 = vmatpush.msra.mxu0 0.0
    %1278 = vmatpush.msra.mxu0 0.0
    %1279 = vmatpush.msra.mxu0 0.0
    %1280 = vmatpush.msra.mxu0 0.0
    %1281 = vmatpush.msra.mxu0 0.0
    %1282 = vmatpush.msra.mxu0 0.0
    %1283 = vmatpush.msra.mxu0 0.0
    %1284 = vmatpush.msra.mxu0 0.0
    %1285 = vmatpush.msra.mxu0 0.0
    %1286 = vmatpush.msra.mxu0 0.0
    %1287 = vmatpush.msra.mxu0 %v1270
    %1288 = vmatmul.f32.gmra.mxu0 %v1268
    %v1289 = vpop.f32.mrf.mxu0
    %v1290 = vadd.f32 0.0, %v1289
    %1291 = vdwg.mxu0
    %v1292 = vxor.u32 %v1290, 2147483648
    %v1293 = vmul.f32 %v1292, 1.442695
    %v1294 = vpow.pop %v1293
    %v1295 = vadd.f32 %v1294, 1.0
    %v1296 = vrcp.pop %v1295
    %v1297 = vmul.f32 %v1295, %v1296
    %v1298 = vsub.f32 1.0, %v1297
    %v1299 = vmul.f32 %v1296, %v1298
    %v1300 = vadd.f32 %v1296, %v1299
    %vm1301 = vweird.f32 %v1295
    %vm1302 = vweird.f32 %v1296
    %vm1303 = vmor %vm1301, %vm1302
    %v1304 = vsel %vm1303, %v1296, %v1300
    %v1305 = vand.u32 2147483647, %v1295
    %vm1306 = vcmp.eq.f32.partialorder %v1305, 8.507059e+37
    %v1307 = vand.u32 %v1295, 2147483648
    %v1308 = vor.u32 1.1754944e-38, %v1307
    %v1309 = vsel %vm1306, %v1308, %v1304
    %v1310 = vmul.f32 1.0, %v1309
    %1311 = vxpose.xlu0.b32.start [1/16] %v1310, 128
    %1312 = vxpose.xlu0.b32.cont [2/16] 0.0, 128
    %1313 = vxpose.xlu0.b32.cont [3/16] 0.0, 128
    %1314 = vxpose.xlu0.b32.cont [4/16] 0.0, 128
    %1315 = vxpose.xlu0.b32.cont [5/16] 0.0, 128
    %1316 = vxpose.xlu0.b32.cont [6/16] 0.0, 128
    %1317 = vxpose.xlu0.b32.cont [7/16] 0.0, 128
    %1318 = vxpose.xlu0.b32.cont [8/16] 0.0, 128
    %1319 = vxpose.xlu0.b32.cont [9/16] 0.0, 128
    %1320 = vxpose.xlu0.b32.cont [10/16] 0.0, 128
    %1321 = vxpose.xlu0.b32.cont [11/16] 0.0, 128
    %1322 = vxpose.xlu0.b32.cont [12/16] 0.0, 128
    %1323 = vxpose.xlu0.b32.cont [13/16] 0.0, 128
    %1324 = vxpose.xlu0.b32.cont [14/16] 0.0, 128
    %1325 = vxpose.xlu0.b32.cont [15/16] 0.0, 128
    %1326 = vxpose.xlu0.b32.end [16/16] 0.0, 128
    %v1327 = vpop.trf.xlu0
    %v1328 = vpop.trf.xlu0
    %v1329 = vpop.trf.xlu0
    %v1330 = vpop.trf.xlu0
    %v1331 = vpop.trf.xlu0
    %v1332 = vpop.trf.xlu0
    %v1333 = vpop.trf.xlu0
    %v1334 = vpop.trf.xlu0
    %v1335 = vpop.trf.xlu0
    %v1336 = vpop.trf.xlu0
    %v1337 = vpop.trf.xlu0
    %v1338 = vpop.trf.xlu0
    %v1339 = vpop.trf.xlu0
    %v1340 = vpop.trf.xlu0
    %v1341 = vpop.trf.xlu0
    %v1342 = vpop.trf.xlu0
    %1343 = vst [vmem:[#allocation1] ss:$2 sm:$0xff] %v136
    %s1344 = scalar_lea.vmem [#allocation1], 16
    %1345 = vst [vmem:[%s1344] ss:$2 sm:$0xff] %v137
    %s1346 = scalar_lea.vmem [#allocation1], 32
    %1347 = vst [vmem:[%s1346] ss:$2 sm:$0xff] %v138
    %v1348 = vld.sshfl [vmem:[#allocation1] sm:$0xff pattern:$0x75316420]
    %v1349 = vld.sshfl [vmem:[#allocation1 + $0x8] sm:$0xff pattern:$0x75316420]
    %v1350 = vld.sshfl [vmem:[#allocation1 + $0x10] sm:$0xff pattern:$0x75316420]
    %v1351 = vld.sshfl [vmem:[#allocation1 + $0x18] sm:$0xff pattern:$0x75316420]
    %v1352 = vld.sshfl [vmem:[#allocation1 + $0x20] sm:$0xff pattern:$0x75316420]
    %v1354 = vsel %vm189, %v1327, 0
    %v1356 = vsel %vm169, %v1348, 0
    %v1358 = vsel %vm169, %v1349, 0
    %v1360 = vsel %vm169, %v1350, 0
    %v1362 = vsel %vm169, %v1351, 0
    %v1364 = vsel %vm169, %v1352, 0
    %1366 = vmatpush.msra.mxu0 0.0
    %1367 = vmatpush.msra.mxu0 0.0
    %1368 = vmatpush.msra.mxu0 0.0
    %1369 = vmatpush.msra.mxu0 0.0
    %1370 = vmatpush.msra.mxu0 0.0
    %1371 = vmatpush.msra.mxu0 0.0
    %1372 = vmatpush.msra.mxu0 0.0
    %1373 = vmatpush.msra.mxu0 0.0
    %1374 = vmatpush.msra.mxu0 0.0
    %1375 = vmatpush.msra.mxu0 0.0
    %1376 = vmatpush.msra.mxu0 0.0
    %1377 = vmatpush.msra.mxu0 0.0
    %1378 = vmatpush.msra.mxu0 0.0
    %1379 = vmatpush.msra.mxu0 0.0
    %1380 = vmatpush.msra.mxu0 0.0
    %1381 = vmatpush.msra.mxu0 %v1356
    %1382 = vmatmul.f32.gmra.mxu0 %v1354
    %v1383 = vpop.f32.mrf.mxu0
    %v1384 = vadd.f32 0.0, %v1383
    %1385 = vdwg.mxu0
    %1386 = vmatpush.msra.mxu0 0.0
    %1387 = vmatpush.msra.mxu0 0.0
    %1388 = vmatpush.msra.mxu0 0.0
    %1389 = vmatpush.msra.mxu0 0.0
    %1390 = vmatpush.msra.mxu0 0.0
    %1391 = vmatpush.msra.mxu0 0.0
    %1392 = vmatpush.msra.mxu0 0.0
    %1393 = vmatpush.msra.mxu0 0.0
    %1394 = vmatpush.msra.mxu0 0.0
    %1395 = vmatpush.msra.mxu0 0.0
    %1396 = vmatpush.msra.mxu0 0.0
    %1397 = vmatpush.msra.mxu0 0.0
    %1398 = vmatpush.msra.mxu0 0.0
    %1399 = vmatpush.msra.mxu0 0.0
    %1400 = vmatpush.msra.mxu0 0.0
    %1401 = vmatpush.msra.mxu0 %v1358
    %1402 = vmatmul.f32.gmra.mxu0 %v1354
    %v1403 = vpop.f32.mrf.mxu0
    %v1404 = vadd.f32 0.0, %v1403
    %1405 = vdwg.mxu0
    %1406 = vmatpush.msra.mxu0 0.0
    %1407 = vmatpush.msra.mxu0 0.0
    %1408 = vmatpush.msra.mxu0 0.0
    %1409 = vmatpush.msra.mxu0 0.0
    %1410 = vmatpush.msra.mxu0 0.0
    %1411 = vmatpush.msra.mxu0 0.0
    %1412 = vmatpush.msra.mxu0 0.0
    %1413 = vmatpush.msra.mxu0 0.0
    %1414 = vmatpush.msra.mxu0 0.0
    %1415 = vmatpush.msra.mxu0 0.0
    %1416 = vmatpush.msra.mxu0 0.0
    %1417 = vmatpush.msra.mxu0 0.0
    %1418 = vmatpush.msra.mxu0 0.0
    %1419 = vmatpush.msra.mxu0 0.0
    %1420 = vmatpush.msra.mxu0 0.0
    %1421 = vmatpush.msra.mxu0 %v1360
    %1422 = vmatmul.f32.gmra.mxu0 %v1354
    %v1423 = vpop.f32.mrf.mxu0
    %v1424 = vadd.f32 0.0, %v1423
    %1425 = vdwg.mxu0
    %1426 = vmatpush.msra.mxu0 0.0
    %1427 = vmatpush.msra.mxu0 0.0
    %1428 = vmatpush.msra.mxu0 0.0
    %1429 = vmatpush.msra.mxu0 0.0
    %1430 = vmatpush.msra.mxu0 0.0
    %1431 = vmatpush.msra.mxu0 0.0
    %1432 = vmatpush.msra.mxu0 0.0
    %1433 = vmatpush.msra.mxu0 0.0
    %1434 = vmatpush.msra.mxu0 0.0
    %1435 = vmatpush.msra.mxu0 0.0
    %1436 = vmatpush.msra.mxu0 0.0
    %1437 = vmatpush.msra.mxu0 0.0
    %1438 = vmatpush.msra.mxu0 0.0
    %1439 = vmatpush.msra.mxu0 0.0
    %1440 = vmatpush.msra.mxu0 0.0
    %1441 = vmatpush.msra.mxu0 %v1362
    %1442 = vmatmul.f32.gmra.mxu0 %v1354
    %v1443 = vpop.f32.mrf.mxu0
    %v1444 = vadd.f32 0.0, %v1443
    %1445 = vdwg.mxu0
    %1446 = vmatpush.msra.mxu0 0.0
    %1447 = vmatpush.msra.mxu0 0.0
    %1448 = vmatpush.msra.mxu0 0.0
    %1449 = vmatpush.msra.mxu0 0.0
    %1450 = vmatpush.msra.mxu0 0.0
    %1451 = vmatpush.msra.mxu0 0.0
    %1452 = vmatpush.msra.mxu0 0.0
    %1453 = vmatpush.msra.mxu0 0.0
    %1454 = vmatpush.msra.mxu0 0.0
    %1455 = vmatpush.msra.mxu0 0.0
    %1456 = vmatpush.msra.mxu0 0.0
    %1457 = vmatpush.msra.mxu0 0.0
    %1458 = vmatpush.msra.mxu0 0.0
    %1459 = vmatpush.msra.mxu0 0.0
    %1460 = vmatpush.msra.mxu0 0.0
    %1461 = vmatpush.msra.mxu0 %v1364
    %1462 = vmatmul.f32.gmra.mxu0 %v1354
    %v1463 = vpop.f32.mrf.mxu0
    %v1464 = vadd.f32 0.0, %v1463
    %1465 = vdwg.mxu0
    %1466 = vst [vmem:[#allocation1] ss:$2 sm:$0xff] %v133
    %s1467 = scalar_lea.vmem [#allocation1], 16
    %1468 = vst [vmem:[%s1467] ss:$2 sm:$0xff] %v134
    %s1469 = scalar_lea.vmem [#allocation1], 32
    %1470 = vst [vmem:[%s1469] ss:$2 sm:$0xff] %v135
    %v1471 = vld.sshfl [vmem:[#allocation1] sm:$0xff pattern:$0x75316420]
    %v1472 = vld.sshfl [vmem:[#allocation1 + $0x8] sm:$0xff pattern:$0x75316420]
    %v1473 = vld.sshfl [vmem:[#allocation1 + $0x10] sm:$0xff pattern:$0x75316420]
    %v1474 = vld.sshfl [vmem:[#allocation1 + $0x18] sm:$0xff pattern:$0x75316420]
    %v1475 = vld.sshfl [vmem:[#allocation1 + $0x20] sm:$0xff pattern:$0x75316420]
    %v1477 = vsel %vm189, %v973, 0
    %v1479 = vsel %vm169, %v1471, 0
    %v1481 = vsel %vm169, %v1472, 0
    %v1483 = vsel %vm169, %v1473, 0
    %v1485 = vsel %vm169, %v1474, 0
    %v1487 = vsel %vm169, %v1475, 0
    %1489 = vmatpush.msra.mxu0 0.0
    %1490 = vmatpush.msra.mxu0 0.0
    %1491 = vmatpush.msra.mxu0 0.0
    %1492 = vmatpush.msra.mxu0 0.0
    %1493 = vmatpush.msra.mxu0 0.0
    %1494 = vmatpush.msra.mxu0 0.0
    %1495 = vmatpush.msra.mxu0 0.0
    %1496 = vmatpush.msra.mxu0 0.0
    %1497 = vmatpush.msra.mxu0 0.0
    %1498 = vmatpush.msra.mxu0 0.0
    %1499 = vmatpush.msra.mxu0 0.0
    %1500 = vmatpush.msra.mxu0 0.0
    %1501 = vmatpush.msra.mxu0 0.0
    %1502 = vmatpush.msra.mxu0 0.0
    %1503 = vmatpush.msra.mxu0 0.0
    %1504 = vmatpush.msra.mxu0 %v1479
    %1505 = vmatmul.f32.gmra.mxu0 %v1477
    %v1506 = vpop.f32.mrf.mxu0
    %v1507 = vadd.f32 %v1384, %v1506
    %1508 = vdwg.mxu0
    %1509 = vmatpush.msra.mxu0 0.0
    %1510 = vmatpush.msra.mxu0 0.0
    %1511 = vmatpush.msra.mxu0 0.0
    %1512 = vmatpush.msra.mxu0 0.0
    %1513 = vmatpush.msra.mxu0 0.0
    %1514 = vmatpush.msra.mxu0 0.0
    %1515 = vmatpush.msra.mxu0 0.0
    %1516 = vmatpush.msra.mxu0 0.0
    %1517 = vmatpush.msra.mxu0 0.0
    %1518 = vmatpush.msra.mxu0 0.0
    %1519 = vmatpush.msra.mxu0 0.0
    %1520 = vmatpush.msra.mxu0 0.0
    %1521 = vmatpush.msra.mxu0 0.0
    %1522 = vmatpush.msra.mxu0 0.0
    %1523 = vmatpush.msra.mxu0 0.0
    %1524 = vmatpush.msra.mxu0 %v1481
    %1525 = vmatmul.f32.gmra.mxu0 %v1477
    %v1526 = vpop.f32.mrf.mxu0
    %v1527 = vadd.f32 %v1404, %v1526
    %1528 = vdwg.mxu0
    %1529 = vmatpush.msra.mxu0 0.0
    %1530 = vmatpush.msra.mxu0 0.0
    %1531 = vmatpush.msra.mxu0 0.0
    %1532 = vmatpush.msra.mxu0 0.0
    %1533 = vmatpush.msra.mxu0 0.0
    %1534 = vmatpush.msra.mxu0 0.0
    %1535 = vmatpush.msra.mxu0 0.0
    %1536 = vmatpush.msra.mxu0 0.0
    %1537 = vmatpush.msra.mxu0 0.0
    %1538 = vmatpush.msra.mxu0 0.0
    %1539 = vmatpush.msra.mxu0 0.0
    %1540 = vmatpush.msra.mxu0 0.0
    %1541 = vmatpush.msra.mxu0 0.0
    %1542 = vmatpush.msra.mxu0 0.0
    %1543 = vmatpush.msra.mxu0 0.0
    %1544 = vmatpush.msra.mxu0 %v1483
    %1545 = vmatmul.f32.gmra.mxu0 %v1477
    %v1546 = vpop.f32.mrf.mxu0
    %v1547 = vadd.f32 %v1424, %v1546
    %1548 = vdwg.mxu0
    %1549 = vmatpush.msra.mxu0 0.0
    %1550 = vmatpush.msra.mxu0 0.0
    %1551 = vmatpush.msra.mxu0 0.0
    %1552 = vmatpush.msra.mxu0 0.0
    %1553 = vmatpush.msra.mxu0 0.0
    %1554 = vmatpush.msra.mxu0 0.0
    %1555 = vmatpush.msra.mxu0 0.0
    %1556 = vmatpush.msra.mxu0 0.0
    %1557 = vmatpush.msra.mxu0 0.0
    %1558 = vmatpush.msra.mxu0 0.0
    %1559 = vmatpush.msra.mxu0 0.0
    %1560 = vmatpush.msra.mxu0 0.0
    %1561 = vmatpush.msra.mxu0 0.0
    %1562 = vmatpush.msra.mxu0 0.0
    %1563 = vmatpush.msra.mxu0 0.0
    %1564 = vmatpush.msra.mxu0 %v1485
    %1565 = vmatmul.f32.gmra.mxu0 %v1477
    %v1566 = vpop.f32.mrf.mxu0
    %v1567 = vadd.f32 %v1444, %v1566
    %1568 = vdwg.mxu0
    %1569 = vmatpush.msra.mxu0 0.0
    %1570 = vmatpush.msra.mxu0 0.0
    %1571 = vmatpush.msra.mxu0 0.0
    %1572 = vmatpush.msra.mxu0 0.0
    %1573 = vmatpush.msra.mxu0 0.0
    %1574 = vmatpush.msra.mxu0 0.0
    %1575 = vmatpush.msra.mxu0 0.0
    %1576 = vmatpush.msra.mxu0 0.0
    %1577 = vmatpush.msra.mxu0 0.0
    %1578 = vmatpush.msra.mxu0 0.0
    %1579 = vmatpush.msra.mxu0 0.0
    %1580 = vmatpush.msra.mxu0 0.0
    %1581 = vmatpush.msra.mxu0 0.0
    %1582 = vmatpush.msra.mxu0 0.0
    %1583 = vmatpush.msra.mxu0 0.0
    %1584 = vmatpush.msra.mxu0 %v1487
    %1585 = vmatmul.f32.gmra.mxu0 %v1477
    %v1586 = vpop.f32.mrf.mxu0
    %v1587 = vadd.f32 %v1464, %v1586
    %1588 = vdwg.mxu0
    %v1589 = vld [vmem:[%s23] sm:$0xff]
    %v1590 = vld [vmem:[%s23 + $0x8] sm:$0xff]
    %v1591 = vld [vmem:[%s23 + $0x10] sm:$0xff]
    %v1592 = vld [vmem:[%s23 + $0x18] sm:$0xff]
    %v1593 = vld [vmem:[%s23 + $0x20] sm:$0xff]
    %v1594 = vld [vmem:[%s23 + $0x28] sm:$0xff]
    %v1595 = vld [vmem:[%s23 + $0x30] sm:$0xff]
    %v1596 = vld [vmem:[%s23 + $0x38] sm:$0xff]
    %v1597 = vld [vmem:[%s23 + $0x40] sm:$0xff]
    %v1598 = vld [vmem:[%s23 + $0x48] sm:$0xff]
    %v1599 = vld [vmem:[%s23 + $0x50] sm:$0xff]
    %v1600 = vld [vmem:[%s23 + $0x58] sm:$0xff]
    %v1601 = vld [vmem:[%s23 + $0x60] sm:$0xff]
    %v1602 = vld [vmem:[%s23 + $0x68] sm:$0xff]
    %v1603 = vld [vmem:[%s23 + $0x70] sm:$0xff]
    %v1604 = vld [vmem:[%s23 + $0x78] sm:$0xff]
    %v1605 = vld [vmem:[%s23 + $0x80] sm:$0xff]
    %v1606 = vld [vmem:[%s23 + $0x88] sm:$0xff]
    %v1607 = vld [vmem:[%s23 + $0x90] sm:$0xff]
    %v1608 = vld [vmem:[%s23 + $0x98] sm:$0xff]
    %v1609 = vld [vmem:[%s23 + $0xa0] sm:$0xff]
    %v1610 = vld [vmem:[%s23 + $0xa8] sm:$0xff]
    %v1611 = vld [vmem:[%s23 + $0xb0] sm:$0xff]
    %v1612 = vld [vmem:[%s23 + $0xb8] sm:$0xff]
    %v1613 = vld [vmem:[%s23 + $0xc0] sm:$0xff]
    %v1614 = vld [vmem:[%s23 + $0xc8] sm:$0xff]
    %v1615 = vld [vmem:[%s23 + $0xd0] sm:$0xff]
    %v1616 = vld [vmem:[%s23 + $0xd8] sm:$0xff]
    %v1617 = vld [vmem:[%s23 + $0xe0] sm:$0xff]
    %v1618 = vld [vmem:[%s23 + $0xe8] sm:$0xff]
    %v1619 = vld [vmem:[%s23 + $0xf0] sm:$0xff]
    %v1620 = vld [vmem:[%s23 + $0xf8] sm:$0xff]
    %v1621 = vld [vmem:[%s23 + $0x100] sm:$0xff]
    %v1622 = vld [vmem:[%s23 + $0x108] sm:$0xff]
    %v1623 = vld [vmem:[%s23 + $0x110] sm:$0xff]
    %v1624 = vld [vmem:[%s23 + $0x118] sm:$0xff]
    %v1625 = vld [vmem:[%s23 + $0x120] sm:$0xff]
    %v1626 = vld [vmem:[%s23 + $0x128] sm:$0xff]
    %v1627 = vld [vmem:[%s23 + $0x130] sm:$0xff]
    %v1628 = vld [vmem:[%s23 + $0x138] sm:$0xff]
    %v1629 = vld [vmem:[%s23 + $0x140] sm:$0xff]
    %v1630 = vld [vmem:[%s23 + $0x148] sm:$0xff]
    %v1631 = vld [vmem:[%s23 + $0x150] sm:$0xff]
    %v1632 = vld [vmem:[%s23 + $0x158] sm:$0xff]
    %v1633 = vld [vmem:[%s23 + $0x160] sm:$0xff]
    %v1634 = vld [vmem:[%s23 + $0x168] sm:$0xff]
    %v1635 = vld [vmem:[%s23 + $0x170] sm:$0xff]
    %v1636 = vld [vmem:[%s23 + $0x178] sm:$0xff]
    %v1637 = vld [vmem:[%s23 + $0x180] sm:$0xff]
    %v1638 = vld [vmem:[%s23 + $0x188] sm:$0xff]
    %v1639 = vld [vmem:[%s23 + $0x190] sm:$0xff]
    %v1640 = vld [vmem:[%s23 + $0x198] sm:$0xff]
    %v1641 = vld [vmem:[%s23 + $0x1a0] sm:$0xff]
    %v1642 = vld [vmem:[%s23 + $0x1a8] sm:$0xff]
    %v1643 = vld [vmem:[%s23 + $0x1b0] sm:$0xff]
    %v1644 = vld [vmem:[%s23 + $0x1b8] sm:$0xff]
    %v1645 = vld [vmem:[%s23 + $0x1c0] sm:$0xff]
    %v1646 = vld [vmem:[%s23 + $0x1c8] sm:$0xff]
    %v1647 = vld [vmem:[%s23 + $0x1d0] sm:$0xff]
    %v1648 = vld [vmem:[%s23 + $0x1d8] sm:$0xff]
    %v1649 = vld [vmem:[%s23 + $0x1e0] sm:$0xff]
    %v1650 = vld [vmem:[%s23 + $0x1e8] sm:$0xff]
    %v1651 = vld [vmem:[%s23 + $0x1f0] sm:$0xff]
    %v1652 = vld [vmem:[%s23 + $0x1f8] sm:$0xff]
    %v1653 = vld [vmem:[%s23 + $0x200] sm:$0xff]
    %v1654 = vld [vmem:[%s23 + $0x208] sm:$0xff]
    %v1655 = vld [vmem:[%s23 + $0x210] sm:$0xff]
    %v1656 = vld [vmem:[%s23 + $0x218] sm:$0xff]
    %v1657 = vld [vmem:[%s23 + $0x220] sm:$0xff]
    %v1658 = vld [vmem:[%s23 + $0x228] sm:$0xff]
    %v1659 = vld [vmem:[%s23 + $0x230] sm:$0xff]
    %v1660 = vld [vmem:[%s23 + $0x238] sm:$0xff]
    %v1661 = vld [vmem:[%s23 + $0x240] sm:$0xff]
    %v1662 = vld [vmem:[%s23 + $0x248] sm:$0xff]
    %v1663 = vld [vmem:[%s23 + $0x250] sm:$0xff]
    %v1664 = vld [vmem:[%s23 + $0x258] sm:$0xff]
    %v1665 = vld [vmem:[%s23 + $0x260] sm:$0xff]
    %v1666 = vld [vmem:[%s23 + $0x268] sm:$0xff]
    %v1667 = vld [vmem:[%s23 + $0x270] sm:$0xff]
    %v1668 = vld [vmem:[%s23 + $0x278] sm:$0xff]
    %v1669 = vld [vmem:[%s23 + $0x280] sm:$0xff]
    %v1670 = vld [vmem:[%s23 + $0x288] sm:$0xff]
    %v1671 = vld [vmem:[%s23 + $0x290] sm:$0xff]
    %v1672 = vld [vmem:[%s23 + $0x298] sm:$0xff]
    %v1673 = vld [vmem:[%s23 + $0x2a0] sm:$0xff]
    %v1674 = vld [vmem:[%s23 + $0x2a8] sm:$0xff]
    %v1675 = vld [vmem:[%s23 + $0x2b0] sm:$0xff]
    %v1676 = vld [vmem:[%s23 + $0x2b8] sm:$0xff]
    %v1677 = vld [vmem:[%s23 + $0x2c0] sm:$0xff]
    %v1678 = vld [vmem:[%s23 + $0x2c8] sm:$0xff]
    %v1679 = vld [vmem:[%s23 + $0x2d0] sm:$0xff]
    %v1680 = vld [vmem:[%s23 + $0x2d8] sm:$0xff]
    %v1681 = vld [vmem:[%s23 + $0x2e0] sm:$0xff]
    %v1682 = vld [vmem:[%s23 + $0x2e8] sm:$0xff]
    %v1683 = vld [vmem:[%s23 + $0x2f0] sm:$0xff]
    %v1684 = vld [vmem:[%s23 + $0x2f8] sm:$0xff]
    %v1685 = vld [vmem:[%s23 + $0x300] sm:$0xff]
    %v1686 = vld [vmem:[%s23 + $0x308] sm:$0xff]
    %v1687 = vld [vmem:[%s23 + $0x310] sm:$0xff]
    %v1688 = vld [vmem:[%s23 + $0x318] sm:$0xff]
    %v1689 = vld [vmem:[%s25] sm:$0x1f]
    %v1695 = vrot.slane %v1507, 7
    %v1696 = vrot.slane %v1527, 7
    %v1697 = vrot.slane %v1547, 7
    %v1698 = vrot.slane %v1567, 7
    %v1699 = vrot.slane %v1587, 7
    %vm1705 = vcmask 1040384
    %v1706 = vsel %vm1705, %v817, %v1695
    %v1707 = vsel %vm1705, %v837, %v1696
    %v1708 = vsel %vm1705, %v857, %v1697
    %v1709 = vsel %vm1705, %v877, %v1698
    %v1710 = vsel %vm1705, %v897, %v1699
    %vm1711 = vcmask 261120
    %v1713 = vsel %vm1711, 0.0, 0
    %1715 = vmatpush.msra.mxu0 %v1664
    %1716 = vmatpush.msra.mxu0 %v1659
    %1717 = vmatpush.msra.mxu0 %v1654
    %1718 = vmatpush.msra.mxu0 %v1649
    %1719 = vmatpush.msra.mxu0 %v1644
    %1720 = vmatpush.msra.mxu0 %v1639
    %1721 = vmatpush.msra.mxu0 %v1634
    %1722 = vmatpush.msra.mxu0 %v1629
    %1723 = vmatpush.msra.mxu0 %v1624
    %1724 = vmatpush.msra.mxu0 %v1619
    %1725 = vmatpush.msra.mxu0 %v1614
    %1726 = vmatpush.msra.mxu0 %v1609
    %1727 = vmatpush.msra.mxu0 %v1604
    %1728 = vmatpush.msra.mxu0 %v1599
    %1729 = vmatpush.msra.mxu0 %v1594
    %1730 = vmatpush.msra.mxu0 %v1589
    %1731 = vmatmul.f32.gmra.mxu0 0.0
    %v1732 = vpop.f32.mrf.mxu0
    %v1733 = vadd.f32 0.0, %v1732
    %1734 = vdwg.mxu0
    %1735 = vmatpush.msra.mxu0 0.0
    %1736 = vmatpush.msra.mxu0 0.0
    %1737 = vmatpush.msra.mxu0 0.0
    %1738 = vmatpush.msra.mxu0 0.0
    %1739 = vmatpush.msra.mxu0 0.0
    %1740 = vmatpush.msra.mxu0 0.0
    %1741 = vmatpush.msra.mxu0 0.0
    %1742 = vmatpush.msra.mxu0 0.0
    %1743 = vmatpush.msra.mxu0 0.0
    %1744 = vmatpush.msra.mxu0 0.0
    %1745 = vmatpush.msra.mxu0 0.0
    %1746 = vmatpush.msra.mxu0 0.0
    %1747 = vmatpush.msra.mxu0 %v1684
    %1748 = vmatpush.msra.mxu0 %v1679
    %1749 = vmatpush.msra.mxu0 %v1674
    %1750 = vmatpush.msra.mxu0 %v1669
    %1751 = vmatmul.f32.gmra.mxu0 %v1713
    %v1752 = vpop.f32.mrf.mxu0
    %v1753 = vadd.f32 %v1733, %v1752
    %1754 = vdwg.mxu0
    %1755 = vmatpush.msra.mxu0 %v1665
    %1756 = vmatpush.msra.mxu0 %v1660
    %1757 = vmatpush.msra.mxu0 %v1655
    %1758 = vmatpush.msra.mxu0 %v1650
    %1759 = vmatpush.msra.mxu0 %v1645
    %1760 = vmatpush.msra.mxu0 %v1640
    %1761 = vmatpush.msra.mxu0 %v1635
    %1762 = vmatpush.msra.mxu0 %v1630
    %1763 = vmatpush.msra.mxu0 %v1625
    %1764 = vmatpush.msra.mxu0 %v1620
    %1765 = vmatpush.msra.mxu0 %v1615
    %1766 = vmatpush.msra.mxu0 %v1610
    %1767 = vmatpush.msra.mxu0 %v1605
    %1768 = vmatpush.msra.mxu0 %v1600
    %1769 = vmatpush.msra.mxu0 %v1595
    %1770 = vmatpush.msra.mxu0 %v1590
    %1771 = vmatmul.f32.gmra.mxu0 0.0
    %v1772 = vpop.f32.mrf.mxu0
    %v1773 = vadd.f32 0.0, %v1772
    %1774 = vdwg.mxu0
    %1775 = vmatpush.msra.mxu0 0.0
    %1776 = vmatpush.msra.mxu0 0.0
    %1777 = vmatpush.msra.mxu0 0.0
    %1778 = vmatpush.msra.mxu0 0.0
    %1779 = vmatpush.msra.mxu0 0.0
    %1780 = vmatpush.msra.mxu0 0.0
    %1781 = vmatpush.msra.mxu0 0.0
    %1782 = vmatpush.msra.mxu0 0.0
    %1783 = vmatpush.msra.mxu0 0.0
    %1784 = vmatpush.msra.mxu0 0.0
    %1785 = vmatpush.msra.mxu0 0.0
    %1786 = vmatpush.msra.mxu0 0.0
    %1787 = vmatpush.msra.mxu0 %v1685
    %1788 = vmatpush.msra.mxu0 %v1680
    %1789 = vmatpush.msra.mxu0 %v1675
    %1790 = vmatpush.msra.mxu0 %v1670
    %1791 = vmatmul.f32.gmra.mxu0 %v1713
    %v1792 = vpop.f32.mrf.mxu0
    %v1793 = vadd.f32 %v1773, %v1792
    %1794 = vdwg.mxu0
    %1795 = vmatpush.msra.mxu0 %v1666
    %1796 = vmatpush.msra.mxu0 %v1661
    %1797 = vmatpush.msra.mxu0 %v1656
    %1798 = vmatpush.msra.mxu0 %v1651
    %1799 = vmatpush.msra.mxu0 %v1646
    %1800 = vmatpush.msra.mxu0 %v1641
    %1801 = vmatpush.msra.mxu0 %v1636
    %1802 = vmatpush.msra.mxu0 %v1631
    %1803 = vmatpush.msra.mxu0 %v1626
    %1804 = vmatpush.msra.mxu0 %v1621
    %1805 = vmatpush.msra.mxu0 %v1616
    %1806 = vmatpush.msra.mxu0 %v1611
    %1807 = vmatpush.msra.mxu0 %v1606
    %1808 = vmatpush.msra.mxu0 %v1601
    %1809 = vmatpush.msra.mxu0 %v1596
    %1810 = vmatpush.msra.mxu0 %v1591
    %1811 = vmatmul.f32.gmra.mxu0 0.0
    %v1812 = vpop.f32.mrf.mxu0
    %v1813 = vadd.f32 0.0, %v1812
    %1814 = vdwg.mxu0
    %1815 = vmatpush.msra.mxu0 0.0
    %1816 = vmatpush.msra.mxu0 0.0
    %1817 = vmatpush.msra.mxu0 0.0
    %1818 = vmatpush.msra.mxu0 0.0
    %1819 = vmatpush.msra.mxu0 0.0
    %1820 = vmatpush.msra.mxu0 0.0
    %1821 = vmatpush.msra.mxu0 0.0
    %1822 = vmatpush.msra.mxu0 0.0
    %1823 = vmatpush.msra.mxu0 0.0
    %1824 = vmatpush.msra.mxu0 0.0
    %1825 = vmatpush.msra.mxu0 0.0
    %1826 = vmatpush.msra.mxu0 0.0
    %1827 = vmatpush.msra.mxu0 %v1686
    %1828 = vmatpush.msra.mxu0 %v1681
    %1829 = vmatpush.msra.mxu0 %v1676
    %1830 = vmatpush.msra.mxu0 %v1671
    %1831 = vmatmul.f32.gmra.mxu0 %v1713
    %v1832 = vpop.f32.mrf.mxu0
    %v1833 = vadd.f32 %v1813, %v1832
    %1834 = vdwg.mxu0
    %1835 = vmatpush.msra.mxu0 %v1667
    %1836 = vmatpush.msra.mxu0 %v1662
    %1837 = vmatpush.msra.mxu0 %v1657
    %1838 = vmatpush.msra.mxu0 %v1652
    %1839 = vmatpush.msra.mxu0 %v1647
    %1840 = vmatpush.msra.mxu0 %v1642
    %1841 = vmatpush.msra.mxu0 %v1637
    %1842 = vmatpush.msra.mxu0 %v1632
    %1843 = vmatpush.msra.mxu0 %v1627
    %1844 = vmatpush.msra.mxu0 %v1622
    %1845 = vmatpush.msra.mxu0 %v1617
    %1846 = vmatpush.msra.mxu0 %v1612
    %1847 = vmatpush.msra.mxu0 %v1607
    %1848 = vmatpush.msra.mxu0 %v1602
    %1849 = vmatpush.msra.mxu0 %v1597
    %1850 = vmatpush.msra.mxu0 %v1592
    %1851 = vmatmul.f32.gmra.mxu0 0.0
    %v1852 = vpop.f32.mrf.mxu0
    %v1853 = vadd.f32 0.0, %v1852
    %1854 = vdwg.mxu0
    %1855 = vmatpush.msra.mxu0 0.0
    %1856 = vmatpush.msra.mxu0 0.0
    %1857 = vmatpush.msra.mxu0 0.0
    %1858 = vmatpush.msra.mxu0 0.0
    %1859 = vmatpush.msra.mxu0 0.0
    %1860 = vmatpush.msra.mxu0 0.0
    %1861 = vmatpush.msra.mxu0 0.0
    %1862 = vmatpush.msra.mxu0 0.0
    %1863 = vmatpush.msra.mxu0 0.0
    %1864 = vmatpush.msra.mxu0 0.0
    %1865 = vmatpush.msra.mxu0 0.0
    %1866 = vmatpush.msra.mxu0 0.0
    %1867 = vmatpush.msra.mxu0 %v1687
    %1868 = vmatpush.msra.mxu0 %v1682
    %1869 = vmatpush.msra.mxu0 %v1677
    %1870 = vmatpush.msra.mxu0 %v1672
    %1871 = vmatmul.f32.gmra.mxu0 %v1713
    %v1872 = vpop.f32.mrf.mxu0
    %v1873 = vadd.f32 %v1853, %v1872
    %1874 = vdwg.mxu0
    %1875 = vmatpush.msra.mxu0 %v1668
    %1876 = vmatpush.msra.mxu0 %v1663
    %1877 = vmatpush.msra.mxu0 %v1658
    %1878 = vmatpush.msra.mxu0 %v1653
    %1879 = vmatpush.msra.mxu0 %v1648
    %1880 = vmatpush.msra.mxu0 %v1643
    %1881 = vmatpush.msra.mxu0 %v1638
    %1882 = vmatpush.msra.mxu0 %v1633
    %1883 = vmatpush.msra.mxu0 %v1628
    %1884 = vmatpush.msra.mxu0 %v1623
    %1885 = vmatpush.msra.mxu0 %v1618
    %1886 = vmatpush.msra.mxu0 %v1613
    %1887 = vmatpush.msra.mxu0 %v1608
    %1888 = vmatpush.msra.mxu0 %v1603
    %1889 = vmatpush.msra.mxu0 %v1598
    %1890 = vmatpush.msra.mxu0 %v1593
    %1891 = vmatmul.f32.gmra.mxu0 0.0
    %v1892 = vpop.f32.mrf.mxu0
    %v1893 = vadd.f32 0.0, %v1892
    %1894 = vdwg.mxu0
    %1895 = vmatpush.msra.mxu0 0.0
    %1896 = vmatpush.msra.mxu0 0.0
    %1897 = vmatpush.msra.mxu0 0.0
    %1898 = vmatpush.msra.mxu0 0.0
    %1899 = vmatpush.msra.mxu0 0.0
    %1900 = vmatpush.msra.mxu0 0.0
    %1901 = vmatpush.msra.mxu0 0.0
    %1902 = vmatpush.msra.mxu0 0.0
    %1903 = vmatpush.msra.mxu0 0.0
    %1904 = vmatpush.msra.mxu0 0.0
    %1905 = vmatpush.msra.mxu0 0.0
    %1906 = vmatpush.msra.mxu0 0.0
    %1907 = vmatpush.msra.mxu0 %v1688
    %1908 = vmatpush.msra.mxu0 %v1683
    %1909 = vmatpush.msra.mxu0 %v1678
    %1910 = vmatpush.msra.mxu0 %v1673
    %1911 = vmatmul.f32.gmra.mxu0 %v1713
    %v1912 = vpop.f32.mrf.mxu0
    %v1913 = vadd.f32 %v1893, %v1912
    %1914 = vdwg.mxu0
    %v1915 = vadd.f32 %v1706, %v1753
    %v1916 = vadd.f32 %v1707, %v1793
    %v1917 = vadd.f32 %v1708, %v1833
    %v1918 = vadd.f32 %v1709, %v1873
    %v1919 = vadd.f32 %v1710, %v1913
    %v1921 = vperm.slane %v1689, 0
    %v1922 = vperm.slane %v1689, 1
    %v1923 = vperm.slane %v1689, 2
    %v1924 = vperm.slane %v1689, 3
    %v1925 = vperm.slane %v1689, 4
    %v1931 = vadd.f32 %v1915, %v1921
    %v1932 = vadd.f32 %v1916, %v1922
    %v1933 = vadd.f32 %v1917, %v1923
    %v1934 = vadd.f32 %v1918, %v1924
    %v1935 = vadd.f32 %v1919, %v1925
    %v1936 = vxor.u32 %v1931, 2147483648
    %v1937 = vxor.u32 %v1932, 2147483648
    %v1938 = vmul.f32 %v1936, 1.442695
    %v1939 = vpow.pop %v1938
    %v1940 = vmul.f32 %v1937, 1.442695
    %v1941 = vpow.pop %v1940
    %v1942 = vadd.f32 %v1939, 1.0
    %v1943 = vadd.f32 %v1941, 1.0
    %v1944 = vrcp.pop %v1942
    %v1945 = vmul.f32 %v1942, %v1944
    %v1946 = vsub.f32 1.0, %v1945
    %v1947 = vmul.f32 %v1944, %v1946
    %v1948 = vadd.f32 %v1944, %v1947
    %vm1949 = vweird.f32 %v1942
    %vm1950 = vweird.f32 %v1944
    %vm1951 = vmor %vm1949, %vm1950
    %v1952 = vsel %vm1951, %v1944, %v1948
    %v1953 = vand.u32 2147483647, %v1942
    %vm1954 = vcmp.eq.f32.partialorder %v1953, 8.507059e+37
    %v1955 = vand.u32 %v1942, 2147483648
    %v1956 = vor.u32 1.1754944e-38, %v1955
    %v1957 = vsel %vm1954, %v1956, %v1952
    %v1958 = vmul.f32 1.0, %v1957
    %v1959 = vrcp.pop %v1943
    %v1960 = vmul.f32 %v1943, %v1959
    %v1961 = vsub.f32 1.0, %v1960
    %v1962 = vmul.f32 %v1959, %v1961
    %v1963 = vadd.f32 %v1959, %v1962
    %vm1964 = vweird.f32 %v1943
    %vm1965 = vweird.f32 %v1959
    %vm1966 = vmor %vm1964, %vm1965
    %v1967 = vsel %vm1966, %v1959, %v1963
    %v1968 = vand.u32 2147483647, %v1943
    %vm1969 = vcmp.eq.f32.partialorder %v1968, 8.507059e+37
    %v1970 = vand.u32 %v1943, 2147483648
    %v1971 = vor.u32 1.1754944e-38, %v1970
    %v1972 = vsel %vm1969, %v1971, %v1967
    %v1973 = vmul.f32 1.0, %v1972
    %v1974 = vxor.u32 %v1933, 2147483648
    %v1975 = vmul.f32 %v1974, 1.442695
    %v1976 = vpow.pop %v1975
    %v1977 = vadd.f32 %v1976, 1.0
    %v1978 = vrcp.pop %v1977
    %v1979 = vmul.f32 %v1977, %v1978
    %v1980 = vsub.f32 1.0, %v1979
    %v1981 = vmul.f32 %v1978, %v1980
    %v1982 = vadd.f32 %v1978, %v1981
    %vm1983 = vweird.f32 %v1977
    %vm1984 = vweird.f32 %v1978
    %vm1985 = vmor %vm1983, %vm1984
    %v1986 = vsel %vm1985, %v1978, %v1982
    %v1987 = vand.u32 2147483647, %v1977
    %vm1988 = vcmp.eq.f32.partialorder %v1987, 8.507059e+37
    %v1989 = vand.u32 %v1977, 2147483648
    %v1990 = vor.u32 1.1754944e-38, %v1989
    %v1991 = vsel %vm1988, %v1990, %v1986
    %v1992 = vmul.f32 1.0, %v1991
    %v1993 = vtanh.pop %v1933
    %v1994 = vtanh.pop %v1934
    %v1995 = vxor.u32 %v1934, 2147483648
    %v1996 = vxor.u32 %v1935, 2147483648
    %v1997 = vmul.f32 %v1995, 1.442695
    %v1998 = vpow.pop %v1997
    %v1999 = vmul.f32 %v1996, 1.442695
    %v2000 = vpow.pop %v1999
    %v2001 = vadd.f32 %v1998, 1.0
    %v2002 = vadd.f32 %v2000, 1.0
    %v2003 = vrcp.pop %v2001
    %v2004 = vmul.f32 %v2001, %v2003
    %v2005 = vsub.f32 1.0, %v2004
    %v2006 = vmul.f32 %v2003, %v2005
    %v2007 = vadd.f32 %v2003, %v2006
    %vm2008 = vweird.f32 %v2001
    %vm2009 = vweird.f32 %v2003
    %vm2010 = vmor %vm2008, %vm2009
    %v2011 = vsel %vm2010, %v2003, %v2007
    %v2012 = vand.u32 2147483647, %v2001
    %vm2013 = vcmp.eq.f32.partialorder %v2012, 8.507059e+37
    %v2014 = vand.u32 %v2001, 2147483648
    %v2015 = vor.u32 1.1754944e-38, %v2014
    %v2016 = vsel %vm2013, %v2015, %v2011
    %v2017 = vmul.f32 1.0, %v2016
    %v2018 = vrcp.pop %v2002
    %v2019 = vmul.f32 %v2002, %v2018
    %v2020 = vsub.f32 1.0, %v2019
    %v2021 = vmul.f32 %v2018, %v2020
    %v2022 = vadd.f32 %v2018, %v2021
    %vm2023 = vweird.f32 %v2002
    %vm2024 = vweird.f32 %v2018
    %vm2025 = vmor %vm2023, %vm2024
    %v2026 = vsel %vm2025, %v2018, %v2022
    %v2027 = vand.u32 2147483647, %v2002
    %vm2028 = vcmp.eq.f32.partialorder %v2027, 8.507059e+37
    %v2029 = vand.u32 %v2002, 2147483648
    %v2030 = vor.u32 1.1754944e-38, %v2029
    %v2031 = vsel %vm2028, %v2030, %v2026
    %v2032 = vmul.f32 1.0, %v2031
    %v2033 = vmul.f32 %v1973, 0.0
    %v2034 = vmul.f32 %v1992, 0.0
    %2037 = vrot.lane.b32.xlu0 %v1993, 64
    %v2038 = vpop.permute.xlu0 %2037
    %2039 = vrot.lane.b32.xlu0 %v1994, 64
    %v2040 = vpop.permute.xlu0 %2039
    %vm2041 = vcmask 523264
    %v2042 = vsel %vm2041, %v2038, %v2040
    %v2045 = vmul.f32 %v1958, %v2042
    %v2046 = vmul.f32 %v1973, %v2040
    %2049 = vrot.lane.b32.xlu0 %v2045, 32
    %v2050 = vpop.permute.xlu0 %2049
    %2051 = vrot.lane.b32.xlu0 %v2046, 32
    %v2052 = vpop.permute.xlu0 %2051
    %v2053 = vsel %vm1711, %v2050, %v2052
    %v2056 = vadd.f32 %v2033, %v2050
    %v2057 = vadd.f32 %v2034, %v2053
    %v2058 = vtanh.pop %v2056
    %v2059 = vtanh.pop %v2057
    %2062 = vrot.lane.b32.xlu0 %v2058, 64
    %v2063 = vpop.permute.xlu0 %2062
    %2064 = vrot.lane.b32.xlu0 %v2059, 64
    %v2065 = vpop.permute.xlu0 %2064
    %v2066 = vsel %vm2041, %v2063, %v2065
    %v2069 = vmul.f32 %v2017, %v2063
    %v2070 = vmul.f32 %v2032, %v2066
    %v2076 = vrot.slane %v817, 1
    %v2077 = vrot.slane %v837, 1
    %v2078 = vrot.slane %v857, 1
    %v2079 = vrot.slane %v877, 1
    %v2080 = vrot.slane %v897, 1
    %v2086 = vsel %vm1705, %v2076, %v1507
    %v2087 = vsel %vm1705, %v2077, %v1527
    %v2088 = vsel %vm1705, %v2078, %v1547
    %v2089 = vsel %vm1705, %v2079, %v1567
    %v2090 = vsel %vm1705, %v2080, %v1587
    %2093 = vrot.lane.b32.xlu0 %v2069, 32
    %v2094 = vpop.permute.xlu0 %2093
    %2095 = vrot.lane.b32.xlu0 %v2070, 32
    %v2096 = vpop.permute.xlu0 %2095
    %v2097 = vsel %vm1711, %v2094, %v2096
    %v2099 = vsel %vm1711, %v2096, 0
    %2101 = vmatpush.msra.mxu0 %v1664
    %2102 = vmatpush.msra.mxu0 %v1659
    %2103 = vmatpush.msra.mxu0 %v1654
    %2104 = vmatpush.msra.mxu0 %v1649
    %2105 = vmatpush.msra.mxu0 %v1644
    %2106 = vmatpush.msra.mxu0 %v1639
    %2107 = vmatpush.msra.mxu0 %v1634
    %2108 = vmatpush.msra.mxu0 %v1629
    %2109 = vmatpush.msra.mxu0 %v1624
    %2110 = vmatpush.msra.mxu0 %v1619
    %2111 = vmatpush.msra.mxu0 %v1614
    %2112 = vmatpush.msra.mxu0 %v1609
    %2113 = vmatpush.msra.mxu0 %v1604
    %2114 = vmatpush.msra.mxu0 %v1599
    %2115 = vmatpush.msra.mxu0 %v1594
    %2116 = vmatpush.msra.mxu0 %v1589
    %2117 = vmatmul.f32.gmra.mxu0 %v2097
    %v2118 = vpop.f32.mrf.mxu0
    %v2119 = vadd.f32 0.0, %v2118
    %2120 = vdwg.mxu0
    %2121 = vmatpush.msra.mxu0 0.0
    %2122 = vmatpush.msra.mxu0 0.0
    %2123 = vmatpush.msra.mxu0 0.0
    %2124 = vmatpush.msra.mxu0 0.0
    %2125 = vmatpush.msra.mxu0 0.0
    %2126 = vmatpush.msra.mxu0 0.0
    %2127 = vmatpush.msra.mxu0 0.0
    %2128 = vmatpush.msra.mxu0 0.0
    %2129 = vmatpush.msra.mxu0 0.0
    %2130 = vmatpush.msra.mxu0 0.0
    %2131 = vmatpush.msra.mxu0 0.0
    %2132 = vmatpush.msra.mxu0 0.0
    %2133 = vmatpush.msra.mxu0 %v1684
    %2134 = vmatpush.msra.mxu0 %v1679
    %2135 = vmatpush.msra.mxu0 %v1674
    %2136 = vmatpush.msra.mxu0 %v1669
    %2137 = vmatmul.f32.gmra.mxu0 %v2099
    %v2138 = vpop.f32.mrf.mxu0
    %v2139 = vadd.f32 %v2119, %v2138
    %2140 = vdwg.mxu0
    %2141 = vmatpush.msra.mxu0 %v1665
    %2142 = vmatpush.msra.mxu0 %v1660
    %2143 = vmatpush.msra.mxu0 %v1655
    %2144 = vmatpush.msra.mxu0 %v1650
    %2145 = vmatpush.msra.mxu0 %v1645
    %2146 = vmatpush.msra.mxu0 %v1640
    %2147 = vmatpush.msra.mxu0 %v1635
    %2148 = vmatpush.msra.mxu0 %v1630
    %2149 = vmatpush.msra.mxu0 %v1625
    %2150 = vmatpush.msra.mxu0 %v1620
    %2151 = vmatpush.msra.mxu0 %v1615
    %2152 = vmatpush.msra.mxu0 %v1610
    %2153 = vmatpush.msra.mxu0 %v1605
    %2154 = vmatpush.msra.mxu0 %v1600
    %2155 = vmatpush.msra.mxu0 %v1595
    %2156 = vmatpush.msra.mxu0 %v1590
    %2157 = vmatmul.f32.gmra.mxu0 %v2097
    %v2158 = vpop.f32.mrf.mxu0
    %v2159 = vadd.f32 0.0, %v2158
    %2160 = vdwg.mxu0
    %2161 = vmatpush.msra.mxu0 0.0
    %2162 = vmatpush.msra.mxu0 0.0
    %2163 = vmatpush.msra.mxu0 0.0
    %2164 = vmatpush.msra.mxu0 0.0
    %2165 = vmatpush.msra.mxu0 0.0
    %2166 = vmatpush.msra.mxu0 0.0
    %2167 = vmatpush.msra.mxu0 0.0
    %2168 = vmatpush.msra.mxu0 0.0
    %2169 = vmatpush.msra.mxu0 0.0
    %2170 = vmatpush.msra.mxu0 0.0
    %2171 = vmatpush.msra.mxu0 0.0
    %2172 = vmatpush.msra.mxu0 0.0
    %2173 = vmatpush.msra.mxu0 %v1685
    %2174 = vmatpush.msra.mxu0 %v1680
    %2175 = vmatpush.msra.mxu0 %v1675
    %2176 = vmatpush.msra.mxu0 %v1670
    %2177 = vmatmul.f32.gmra.mxu0 %v2099
    %v2178 = vpop.f32.mrf.mxu0
    %v2179 = vadd.f32 %v2159, %v2178
    %2180 = vdwg.mxu0
    %2181 = vmatpush.msra.mxu0 %v1666
    %2182 = vmatpush.msra.mxu0 %v1661
    %2183 = vmatpush.msra.mxu0 %v1656
    %2184 = vmatpush.msra.mxu0 %v1651
    %2185 = vmatpush.msra.mxu0 %v1646
    %2186 = vmatpush.msra.mxu0 %v1641
    %2187 = vmatpush.msra.mxu0 %v1636
    %2188 = vmatpush.msra.mxu0 %v1631
    %2189 = vmatpush.msra.mxu0 %v1626
    %2190 = vmatpush.msra.mxu0 %v1621
    %2191 = vmatpush.msra.mxu0 %v1616
    %2192 = vmatpush.msra.mxu0 %v1611
    %2193 = vmatpush.msra.mxu0 %v1606
    %2194 = vmatpush.msra.mxu0 %v1601
    %2195 = vmatpush.msra.mxu0 %v1596
    %2196 = vmatpush.msra.mxu0 %v1591
    %2197 = vmatmul.f32.gmra.mxu0 %v2097
    %v2198 = vpop.f32.mrf.mxu0
    %v2199 = vadd.f32 0.0, %v2198
    %2200 = vdwg.mxu0
    %2201 = vmatpush.msra.mxu0 0.0
    %2202 = vmatpush.msra.mxu0 0.0
    %2203 = vmatpush.msra.mxu0 0.0
    %2204 = vmatpush.msra.mxu0 0.0
    %2205 = vmatpush.msra.mxu0 0.0
    %2206 = vmatpush.msra.mxu0 0.0
    %2207 = vmatpush.msra.mxu0 0.0
    %2208 = vmatpush.msra.mxu0 0.0
    %2209 = vmatpush.msra.mxu0 0.0
    %2210 = vmatpush.msra.mxu0 0.0
    %2211 = vmatpush.msra.mxu0 0.0
    %2212 = vmatpush.msra.mxu0 0.0
    %2213 = vmatpush.msra.mxu0 %v1686
    %2214 = vmatpush.msra.mxu0 %v1681
    %2215 = vmatpush.msra.mxu0 %v1676
    %2216 = vmatpush.msra.mxu0 %v1671
    %2217 = vmatmul.f32.gmra.mxu0 %v2099
    %v2218 = vpop.f32.mrf.mxu0
    %v2219 = vadd.f32 %v2199, %v2218
    %2220 = vdwg.mxu0
    %2221 = vmatpush.msra.mxu0 %v1667
    %2222 = vmatpush.msra.mxu0 %v1662
    %2223 = vmatpush.msra.mxu0 %v1657
    %2224 = vmatpush.msra.mxu0 %v1652
    %2225 = vmatpush.msra.mxu0 %v1647
    %2226 = vmatpush.msra.mxu0 %v1642
    %2227 = vmatpush.msra.mxu0 %v1637
    %2228 = vmatpush.msra.mxu0 %v1632
    %2229 = vmatpush.msra.mxu0 %v1627
    %2230 = vmatpush.msra.mxu0 %v1622
    %2231 = vmatpush.msra.mxu0 %v1617
    %2232 = vmatpush.msra.mxu0 %v1612
    %2233 = vmatpush.msra.mxu0 %v1607
    %2234 = vmatpush.msra.mxu0 %v1602
    %2235 = vmatpush.msra.mxu0 %v1597
    %2236 = vmatpush.msra.mxu0 %v1592
    %2237 = vmatmul.f32.gmra.mxu0 %v2097
    %v2238 = vpop.f32.mrf.mxu0
    %v2239 = vadd.f32 0.0, %v2238
    %2240 = vdwg.mxu0
    %2241 = vmatpush.msra.mxu0 0.0
    %2242 = vmatpush.msra.mxu0 0.0
    %2243 = vmatpush.msra.mxu0 0.0
    %2244 = vmatpush.msra.mxu0 0.0
    %2245 = vmatpush.msra.mxu0 0.0
    %2246 = vmatpush.msra.mxu0 0.0
    %2247 = vmatpush.msra.mxu0 0.0
    %2248 = vmatpush.msra.mxu0 0.0
    %2249 = vmatpush.msra.mxu0 0.0
    %2250 = vmatpush.msra.mxu0 0.0
    %2251 = vmatpush.msra.mxu0 0.0
    %2252 = vmatpush.msra.mxu0 0.0
    %2253 = vmatpush.msra.mxu0 %v1687
    %2254 = vmatpush.msra.mxu0 %v1682
    %2255 = vmatpush.msra.mxu0 %v1677
    %2256 = vmatpush.msra.mxu0 %v1672
    %2257 = vmatmul.f32.gmra.mxu0 %v2099
    %v2258 = vpop.f32.mrf.mxu0
    %v2259 = vadd.f32 %v2239, %v2258
    %2260 = vdwg.mxu0
    %2261 = vmatpush.msra.mxu0 %v1668
    %2262 = vmatpush.msra.mxu0 %v1663
    %2263 = vmatpush.msra.mxu0 %v1658
    %2264 = vmatpush.msra.mxu0 %v1653
    %2265 = vmatpush.msra.mxu0 %v1648
    %2266 = vmatpush.msra.mxu0 %v1643
    %2267 = vmatpush.msra.mxu0 %v1638
    %2268 = vmatpush.msra.mxu0 %v1633
    %2269 = vmatpush.msra.mxu0 %v1628
    %2270 = vmatpush.msra.mxu0 %v1623
    %2271 = vmatpush.msra.mxu0 %v1618
    %2272 = vmatpush.msra.mxu0 %v1613
    %2273 = vmatpush.msra.mxu0 %v1608
    %2274 = vmatpush.msra.mxu0 %v1603
    %2275 = vmatpush.msra.mxu0 %v1598
    %2276 = vmatpush.msra.mxu0 %v1593
    %2277 = vmatmul.f32.gmra.mxu0 %v2097
    %v2278 = vpop.f32.mrf.mxu0
    %v2279 = vadd.f32 0.0, %v2278
    %2280 = vdwg.mxu0
    %2281 = vmatpush.msra.mxu0 0.0
    %2282 = vmatpush.msra.mxu0 0.0
    %2283 = vmatpush.msra.mxu0 0.0
    %2284 = vmatpush.msra.mxu0 0.0
    %2285 = vmatpush.msra.mxu0 0.0
    %2286 = vmatpush.msra.mxu0 0.0
    %2287 = vmatpush.msra.mxu0 0.0
    %2288 = vmatpush.msra.mxu0 0.0
    %2289 = vmatpush.msra.mxu0 0.0
    %2290 = vmatpush.msra.mxu0 0.0
    %2291 = vmatpush.msra.mxu0 0.0
    %2292 = vmatpush.msra.mxu0 0.0
    %2293 = vmatpush.msra.mxu0 %v1688
    %2294 = vmatpush.msra.mxu0 %v1683
    %2295 = vmatpush.msra.mxu0 %v1678
    %2296 = vmatpush.msra.mxu0 %v1673
    %2297 = vmatmul.f32.gmra.mxu0 %v2099
    %v2298 = vpop.f32.mrf.mxu0
    %v2299 = vadd.f32 %v2279, %v2298
    %2300 = vdwg.mxu0
    %v2301 = vadd.f32 %v2086, %v2139
    %v2302 = vadd.f32 %v2087, %v2179
    %v2303 = vadd.f32 %v2088, %v2219
    %v2304 = vadd.f32 %v2089, %v2259
    %v2305 = vadd.f32 %v2090, %v2299
    %v2306 = vadd.f32 %v2301, %v1921
    %v2307 = vadd.f32 %v2302, %v1922
    %v2308 = vadd.f32 %v2303, %v1923
    %v2309 = vadd.f32 %v2304, %v1924
    %v2310 = vadd.f32 %v2305, %v1925
    %v2311 = vxor.u32 %v2306, 2147483648
    %v2312 = vxor.u32 %v2307, 2147483648
    %v2313 = vmul.f32 %v2311, 1.442695
    %v2314 = vpow.pop %v2313
    %v2315 = vmul.f32 %v2312, 1.442695
    %v2316 = vpow.pop %v2315
    %v2317 = vadd.f32 %v2314, 1.0
    %v2318 = vadd.f32 %v2316, 1.0
    %v2319 = vrcp.pop %v2317
    %v2320 = vmul.f32 %v2317, %v2319
    %v2321 = vsub.f32 1.0, %v2320
    %v2322 = vmul.f32 %v2319, %v2321
    %v2323 = vadd.f32 %v2319, %v2322
    %vm2324 = vweird.f32 %v2317
    %vm2325 = vweird.f32 %v2319
    %vm2326 = vmor %vm2324, %vm2325
    %v2327 = vsel %vm2326, %v2319, %v2323
    %v2328 = vand.u32 2147483647, %v2317
    %vm2329 = vcmp.eq.f32.partialorder %v2328, 8.507059e+37
    %v2330 = vand.u32 %v2317, 2147483648
    %v2331 = vor.u32 1.1754944e-38, %v2330
    %v2332 = vsel %vm2329, %v2331, %v2327
    %v2333 = vmul.f32 1.0, %v2332
    %v2334 = vrcp.pop %v2318
    %v2335 = vmul.f32 %v2318, %v2334
    %v2336 = vsub.f32 1.0, %v2335
    %v2337 = vmul.f32 %v2334, %v2336
    %v2338 = vadd.f32 %v2334, %v2337
    %vm2339 = vweird.f32 %v2318
    %vm2340 = vweird.f32 %v2334
    %vm2341 = vmor %vm2339, %vm2340
    %v2342 = vsel %vm2341, %v2334, %v2338
    %v2343 = vand.u32 2147483647, %v2318
    %vm2344 = vcmp.eq.f32.partialorder %v2343, 8.507059e+37
    %v2345 = vand.u32 %v2318, 2147483648
    %v2346 = vor.u32 1.1754944e-38, %v2345
    %v2347 = vsel %vm2344, %v2346, %v2342
    %v2348 = vmul.f32 1.0, %v2347
    %v2349 = vxor.u32 %v2308, 2147483648
    %v2350 = vmul.f32 %v2349, 1.442695
    %v2351 = vpow.pop %v2350
    %v2352 = vadd.f32 %v2351, 1.0
    %v2353 = vrcp.pop %v2352
    %v2354 = vmul.f32 %v2352, %v2353
    %v2355 = vsub.f32 1.0, %v2354
    %v2356 = vmul.f32 %v2353, %v2355
    %v2357 = vadd.f32 %v2353, %v2356
    %vm2358 = vweird.f32 %v2352
    %vm2359 = vweird.f32 %v2353
    %vm2360 = vmor %vm2358, %vm2359
    %v2361 = vsel %vm2360, %v2353, %v2357
    %v2362 = vand.u32 2147483647, %v2352
    %vm2363 = vcmp.eq.f32.partialorder %v2362, 8.507059e+37
    %v2364 = vand.u32 %v2352, 2147483648
    %v2365 = vor.u32 1.1754944e-38, %v2364
    %v2366 = vsel %vm2363, %v2365, %v2361
    %v2367 = vmul.f32 1.0, %v2366
    %v2368 = vtanh.pop %v2308
    %v2369 = vtanh.pop %v2309
    %v2370 = vxor.u32 %v2309, 2147483648
    %v2371 = vxor.u32 %v2310, 2147483648
    %v2372 = vmul.f32 %v2370, 1.442695
    %v2373 = vpow.pop %v2372
    %v2374 = vmul.f32 %v2371, 1.442695
    %v2375 = vpow.pop %v2374
    %v2376 = vadd.f32 %v2373, 1.0
    %v2377 = vadd.f32 %v2375, 1.0
    %v2378 = vrcp.pop %v2376
    %v2379 = vmul.f32 %v2376, %v2378
    %v2380 = vsub.f32 1.0, %v2379
    %v2381 = vmul.f32 %v2378, %v2380
    %v2382 = vadd.f32 %v2378, %v2381
    %vm2383 = vweird.f32 %v2376
    %vm2384 = vweird.f32 %v2378
    %vm2385 = vmor %vm2383, %vm2384
    %v2386 = vsel %vm2385, %v2378, %v2382
    %v2387 = vand.u32 2147483647, %v2376
    %vm2388 = vcmp.eq.f32.partialorder %v2387, 8.507059e+37
    %v2389 = vand.u32 %v2376, 2147483648
    %v2390 = vor.u32 1.1754944e-38, %v2389
    %v2391 = vsel %vm2388, %v2390, %v2386
    %v2392 = vmul.f32 1.0, %v2391
    %v2393 = vrcp.pop %v2377
    %v2394 = vmul.f32 %v2377, %v2393
    %v2395 = vsub.f32 1.0, %v2394
    %v2396 = vmul.f32 %v2393, %v2395
    %v2397 = vadd.f32 %v2393, %v2396
    %vm2398 = vweird.f32 %v2377
    %vm2399 = vweird.f32 %v2393
    %vm2400 = vmor %vm2398, %vm2399
    %v2401 = vsel %vm2400, %v2393, %v2397
    %v2402 = vand.u32 2147483647, %v2377
    %vm2403 = vcmp.eq.f32.partialorder %v2402, 8.507059e+37
    %v2404 = vand.u32 %v2377, 2147483648
    %v2405 = vor.u32 1.1754944e-38, %v2404
    %v2406 = vsel %vm2403, %v2405, %v2401
    %v2407 = vmul.f32 1.0, %v2406
    %v2408 = vmul.f32 %v2348, %v2056
    %v2409 = vmul.f32 %v2367, %v2057
    %2412 = vrot.lane.b32.xlu0 %v2368, 64
    %v2413 = vpop.permute.xlu0 %2412
    %2414 = vrot.lane.b32.xlu0 %v2369, 64
    %v2415 = vpop.permute.xlu0 %2414
    %v2416 = vsel %vm2041, %v2413, %v2415
    %v2419 = vmul.f32 %v2333, %v2416
    %v2420 = vmul.f32 %v2348, %v2415
    %2423 = vrot.lane.b32.xlu0 %v2419, 32
    %v2424 = vpop.permute.xlu0 %2423
    %2425 = vrot.lane.b32.xlu0 %v2420, 32
    %v2426 = vpop.permute.xlu0 %2425
    %v2427 = vsel %vm1711, %v2424, %v2426
    %v2430 = vadd.f32 %v2408, %v2424
    %v2431 = vadd.f32 %v2409, %v2427
    %v2432 = vtanh.pop %v2430
    %v2433 = vtanh.pop %v2431
    %2436 = vrot.lane.b32.xlu0 %v2432, 64
    %v2437 = vpop.permute.xlu0 %2436
    %2438 = vrot.lane.b32.xlu0 %v2433, 64
    %v2439 = vpop.permute.xlu0 %2438
    %v2440 = vsel %vm2041, %v2437, %v2439
    %v2443 = vmul.f32 %v2392, %v2437
    %v2444 = vmul.f32 %v2407, %v2440
    %v2445 = vrot.slane %v817, 2
    %v2446 = vrot.slane %v837, 2
    %v2447 = vrot.slane %v857, 2
    %v2448 = vrot.slane %v877, 2
    %v2449 = vrot.slane %v897, 2
    %v2455 = vrot.slane %v1507, 1
    %v2456 = vrot.slane %v1527, 1
    %v2457 = vrot.slane %v1547, 1
    %v2458 = vrot.slane %v1567, 1
    %v2459 = vrot.slane %v1587, 1
    %v2465 = vsel %vm1705, %v2445, %v2455
    %v2466 = vsel %vm1705, %v2446, %v2456
    %v2467 = vsel %vm1705, %v2447, %v2457
    %v2468 = vsel %vm1705, %v2448, %v2458
    %v2469 = vsel %vm1705, %v2449, %v2459
    %2472 = vrot.lane.b32.xlu0 %v2443, 32
    %v2473 = vpop.permute.xlu0 %2472
    %2474 = vrot.lane.b32.xlu0 %v2444, 32
    %v2475 = vpop.permute.xlu0 %2474
    %v2476 = vsel %vm1711, %v2473, %v2475
    %v2478 = vsel %vm1711, %v2475, 0
    %2480 = vmatpush.msra.mxu0 %v1664
    %2481 = vmatpush.msra.mxu0 %v1659
    %2482 = vmatpush.msra.mxu0 %v1654
    %2483 = vmatpush.msra.mxu0 %v1649
    %2484 = vmatpush.msra.mxu0 %v1644
    %2485 = vmatpush.msra.mxu0 %v1639
    %2486 = vmatpush.msra.mxu0 %v1634
    %2487 = vmatpush.msra.mxu0 %v1629
    %2488 = vmatpush.msra.mxu0 %v1624
    %2489 = vmatpush.msra.mxu0 %v1619
    %2490 = vmatpush.msra.mxu0 %v1614
    %2491 = vmatpush.msra.mxu0 %v1609
    %2492 = vmatpush.msra.mxu0 %v1604
    %2493 = vmatpush.msra.mxu0 %v1599
    %2494 = vmatpush.msra.mxu0 %v1594
    %2495 = vmatpush.msra.mxu0 %v1589
    %2496 = vmatmul.f32.gmra.mxu0 %v2476
    %v2497 = vpop.f32.mrf.mxu0
    %v2498 = vadd.f32 0.0, %v2497
    %2499 = vdwg.mxu0
    %2500 = vmatpush.msra.mxu0 0.0
    %2501 = vmatpush.msra.mxu0 0.0
    %2502 = vmatpush.msra.mxu0 0.0
    %2503 = vmatpush.msra.mxu0 0.0
    %2504 = vmatpush.msra.mxu0 0.0
    %2505 = vmatpush.msra.mxu0 0.0
    %2506 = vmatpush.msra.mxu0 0.0
    %2507 = vmatpush.msra.mxu0 0.0
    %2508 = vmatpush.msra.mxu0 0.0
    %2509 = vmatpush.msra.mxu0 0.0
    %2510 = vmatpush.msra.mxu0 0.0
    %2511 = vmatpush.msra.mxu0 0.0
    %2512 = vmatpush.msra.mxu0 %v1684
    %2513 = vmatpush.msra.mxu0 %v1679
    %2514 = vmatpush.msra.mxu0 %v1674
    %2515 = vmatpush.msra.mxu0 %v1669
    %2516 = vmatmul.f32.gmra.mxu0 %v2478
    %v2517 = vpop.f32.mrf.mxu0
    %v2518 = vadd.f32 %v2498, %v2517
    %2519 = vdwg.mxu0
    %2520 = vmatpush.msra.mxu0 %v1665
    %2521 = vmatpush.msra.mxu0 %v1660
    %2522 = vmatpush.msra.mxu0 %v1655
    %2523 = vmatpush.msra.mxu0 %v1650
    %2524 = vmatpush.msra.mxu0 %v1645
    %2525 = vmatpush.msra.mxu0 %v1640
    %2526 = vmatpush.msra.mxu0 %v1635
    %2527 = vmatpush.msra.mxu0 %v1630
    %2528 = vmatpush.msra.mxu0 %v1625
    %2529 = vmatpush.msra.mxu0 %v1620
    %2530 = vmatpush.msra.mxu0 %v1615
    %2531 = vmatpush.msra.mxu0 %v1610
    %2532 = vmatpush.msra.mxu0 %v1605
    %2533 = vmatpush.msra.mxu0 %v1600
    %2534 = vmatpush.msra.mxu0 %v1595
    %2535 = vmatpush.msra.mxu0 %v1590
    %2536 = vmatmul.f32.gmra.mxu0 %v2476
    %v2537 = vpop.f32.mrf.mxu0
    %v2538 = vadd.f32 0.0, %v2537
    %2539 = vdwg.mxu0
    %2540 = vmatpush.msra.mxu0 0.0
    %2541 = vmatpush.msra.mxu0 0.0
    %2542 = vmatpush.msra.mxu0 0.0
    %2543 = vmatpush.msra.mxu0 0.0
    %2544 = vmatpush.msra.mxu0 0.0
    %2545 = vmatpush.msra.mxu0 0.0
    %2546 = vmatpush.msra.mxu0 0.0
    %2547 = vmatpush.msra.mxu0 0.0
    %2548 = vmatpush.msra.mxu0 0.0
    %2549 = vmatpush.msra.mxu0 0.0
    %2550 = vmatpush.msra.mxu0 0.0
    %2551 = vmatpush.msra.mxu0 0.0
    %2552 = vmatpush.msra.mxu0 %v1685
    %2553 = vmatpush.msra.mxu0 %v1680
    %2554 = vmatpush.msra.mxu0 %v1675
    %2555 = vmatpush.msra.mxu0 %v1670
    %2556 = vmatmul.f32.gmra.mxu0 %v2478
    %v2557 = vpop.f32.mrf.mxu0
    %v2558 = vadd.f32 %v2538, %v2557
    %2559 = vdwg.mxu0
    %2560 = vmatpush.msra.mxu0 %v1666
    %2561 = vmatpush.msra.mxu0 %v1661
    %2562 = vmatpush.msra.mxu0 %v1656
    %2563 = vmatpush.msra.mxu0 %v1651
    %2564 = vmatpush.msra.mxu0 %v1646
    %2565 = vmatpush.msra.mxu0 %v1641
    %2566 = vmatpush.msra.mxu0 %v1636
    %2567 = vmatpush.msra.mxu0 %v1631
    %2568 = vmatpush.msra.mxu0 %v1626
    %2569 = vmatpush.msra.mxu0 %v1621
    %2570 = vmatpush.msra.mxu0 %v1616
    %2571 = vmatpush.msra.mxu0 %v1611
    %2572 = vmatpush.msra.mxu0 %v1606
    %2573 = vmatpush.msra.mxu0 %v1601
    %2574 = vmatpush.msra.mxu0 %v1596
    %2575 = vmatpush.msra.mxu0 %v1591
    %2576 = vmatmul.f32.gmra.mxu0 %v2476
    %v2577 = vpop.f32.mrf.mxu0
    %v2578 = vadd.f32 0.0, %v2577
    %2579 = vdwg.mxu0
    %2580 = vmatpush.msra.mxu0 0.0
    %2581 = vmatpush.msra.mxu0 0.0
    %2582 = vmatpush.msra.mxu0 0.0
    %2583 = vmatpush.msra.mxu0 0.0
    %2584 = vmatpush.msra.mxu0 0.0
    %2585 = vmatpush.msra.mxu0 0.0
    %2586 = vmatpush.msra.mxu0 0.0
    %2587 = vmatpush.msra.mxu0 0.0
    %2588 = vmatpush.msra.mxu0 0.0
    %2589 = vmatpush.msra.mxu0 0.0
    %2590 = vmatpush.msra.mxu0 0.0
    %2591 = vmatpush.msra.mxu0 0.0
    %2592 = vmatpush.msra.mxu0 %v1686
    %2593 = vmatpush.msra.mxu0 %v1681
    %2594 = vmatpush.msra.mxu0 %v1676
    %2595 = vmatpush.msra.mxu0 %v1671
    %2596 = vmatmul.f32.gmra.mxu0 %v2478
    %v2597 = vpop.f32.mrf.mxu0
    %v2598 = vadd.f32 %v2578, %v2597
    %2599 = vdwg.mxu0
    %2600 = vmatpush.msra.mxu0 %v1667
    %2601 = vmatpush.msra.mxu0 %v1662
    %2602 = vmatpush.msra.mxu0 %v1657
    %2603 = vmatpush.msra.mxu0 %v1652
    %2604 = vmatpush.msra.mxu0 %v1647
    %2605 = vmatpush.msra.mxu0 %v1642
    %2606 = vmatpush.msra.mxu0 %v1637
    %2607 = vmatpush.msra.mxu0 %v1632
    %2608 = vmatpush.msra.mxu0 %v1627
    %2609 = vmatpush.msra.mxu0 %v1622
    %2610 = vmatpush.msra.mxu0 %v1617
    %2611 = vmatpush.msra.mxu0 %v1612
    %2612 = vmatpush.msra.mxu0 %v1607
    %2613 = vmatpush.msra.mxu0 %v1602
    %2614 = vmatpush.msra.mxu0 %v1597
    %2615 = vmatpush.msra.mxu0 %v1592
    %2616 = vmatmul.f32.gmra.mxu0 %v2476
    %v2617 = vpop.f32.mrf.mxu0
    %v2618 = vadd.f32 0.0, %v2617
    %2619 = vdwg.mxu0
    %2620 = vmatpush.msra.mxu0 0.0
    %2621 = vmatpush.msra.mxu0 0.0
    %2622 = vmatpush.msra.mxu0 0.0
    %2623 = vmatpush.msra.mxu0 0.0
    %2624 = vmatpush.msra.mxu0 0.0
    %2625 = vmatpush.msra.mxu0 0.0
    %2626 = vmatpush.msra.mxu0 0.0
    %2627 = vmatpush.msra.mxu0 0.0
    %2628 = vmatpush.msra.mxu0 0.0
    %2629 = vmatpush.msra.mxu0 0.0
    %2630 = vmatpush.msra.mxu0 0.0
    %2631 = vmatpush.msra.mxu0 0.0
    %2632 = vmatpush.msra.mxu0 %v1687
    %2633 = vmatpush.msra.mxu0 %v1682
    %2634 = vmatpush.msra.mxu0 %v1677
    %2635 = vmatpush.msra.mxu0 %v1672
    %2636 = vmatmul.f32.gmra.mxu0 %v2478
    %v2637 = vpop.f32.mrf.mxu0
    %v2638 = vadd.f32 %v2618, %v2637
    %2639 = vdwg.mxu0
    %2640 = vmatpush.msra.mxu0 %v1668
    %2641 = vmatpush.msra.mxu0 %v1663
    %2642 = vmatpush.msra.mxu0 %v1658
    %2643 = vmatpush.msra.mxu0 %v1653
    %2644 = vmatpush.msra.mxu0 %v1648
    %2645 = vmatpush.msra.mxu0 %v1643
    %2646 = vmatpush.msra.mxu0 %v1638
    %2647 = vmatpush.msra.mxu0 %v1633
    %2648 = vmatpush.msra.mxu0 %v1628
    %2649 = vmatpush.msra.mxu0 %v1623
    %2650 = vmatpush.msra.mxu0 %v1618
    %2651 = vmatpush.msra.mxu0 %v1613
    %2652 = vmatpush.msra.mxu0 %v1608
    %2653 = vmatpush.msra.mxu0 %v1603
    %2654 = vmatpush.msra.mxu0 %v1598
    %2655 = vmatpush.msra.mxu0 %v1593
    %2656 = vmatmul.f32.gmra.mxu0 %v2476
    %v2657 = vpop.f32.mrf.mxu0
    %v2658 = vadd.f32 0.0, %v2657
    %2659 = vdwg.mxu0
    %2660 = vmatpush.msra.mxu0 0.0
    %2661 = vmatpush.msra.mxu0 0.0
    %2662 = vmatpush.msra.mxu0 0.0
    %2663 = vmatpush.msra.mxu0 0.0
    %2664 = vmatpush.msra.mxu0 0.0
    %2665 = vmatpush.msra.mxu0 0.0
    %2666 = vmatpush.msra.mxu0 0.0
    %2667 = vmatpush.msra.mxu0 0.0
    %2668 = vmatpush.msra.mxu0 0.0
    %2669 = vmatpush.msra.mxu0 0.0
    %2670 = vmatpush.msra.mxu0 0.0
    %2671 = vmatpush.msra.mxu0 0.0
    %2672 = vmatpush.msra.mxu0 %v1688
    %2673 = vmatpush.msra.mxu0 %v1683
    %2674 = vmatpush.msra.mxu0 %v1678
    %2675 = vmatpush.msra.mxu0 %v1673
    %2676 = vmatmul.f32.gmra.mxu0 %v2478
    %v2677 = vpop.f32.mrf.mxu0
    %v2678 = vadd.f32 %v2658, %v2677
    %2679 = vdwg.mxu0
    %v2680 = vadd.f32 %v2465, %v2518
    %v2681 = vadd.f32 %v2466, %v2558
    %v2682 = vadd.f32 %v2467, %v2598
    %v2683 = vadd.f32 %v2468, %v2638
    %v2684 = vadd.f32 %v2469, %v2678
    %v2685 = vadd.f32 %v2680, %v1921
    %v2686 = vadd.f32 %v2681, %v1922
    %v2687 = vadd.f32 %v2682, %v1923
    %v2688 = vadd.f32 %v2683, %v1924
    %v2689 = vadd.f32 %v2684, %v1925
    %v2690 = vxor.u32 %v2685, 2147483648
    %v2691 = vxor.u32 %v2686, 2147483648
    %v2692 = vmul.f32 %v2690, 1.442695
    %v2693 = vpow.pop %v2692
    %v2694 = vmul.f32 %v2691, 1.442695
    %v2695 = vpow.pop %v2694
    %v2696 = vadd.f32 %v2693, 1.0
    %v2697 = vadd.f32 %v2695, 1.0
    %v2698 = vrcp.pop %v2696
    %v2699 = vmul.f32 %v2696, %v2698
    %v2700 = vsub.f32 1.0, %v2699
    %v2701 = vmul.f32 %v2698, %v2700
    %v2702 = vadd.f32 %v2698, %v2701
    %vm2703 = vweird.f32 %v2696
    %vm2704 = vweird.f32 %v2698
    %vm2705 = vmor %vm2703, %vm2704
    %v2706 = vsel %vm2705, %v2698, %v2702
    %v2707 = vand.u32 2147483647, %v2696
    %vm2708 = vcmp.eq.f32.partialorder %v2707, 8.507059e+37
    %v2709 = vand.u32 %v2696, 2147483648
    %v2710 = vor.u32 1.1754944e-38, %v2709
    %v2711 = vsel %vm2708, %v2710, %v2706
    %v2712 = vmul.f32 1.0, %v2711
    %v2713 = vrcp.pop %v2697
    %v2714 = vmul.f32 %v2697, %v2713
    %v2715 = vsub.f32 1.0, %v2714
    %v2716 = vmul.f32 %v2713, %v2715
    %v2717 = vadd.f32 %v2713, %v2716
    %vm2718 = vweird.f32 %v2697
    %vm2719 = vweird.f32 %v2713
    %vm2720 = vmor %vm2718, %vm2719
    %v2721 = vsel %vm2720, %v2713, %v2717
    %v2722 = vand.u32 2147483647, %v2697
    %vm2723 = vcmp.eq.f32.partialorder %v2722, 8.507059e+37
    %v2724 = vand.u32 %v2697, 2147483648
    %v2725 = vor.u32 1.1754944e-38, %v2724
    %v2726 = vsel %vm2723, %v2725, %v2721
    %v2727 = vmul.f32 1.0, %v2726
    %v2728 = vxor.u32 %v2687, 2147483648
    %v2729 = vmul.f32 %v2728, 1.442695
    %v2730 = vpow.pop %v2729
    %v2731 = vadd.f32 %v2730, 1.0
    %v2732 = vrcp.pop %v2731
    %v2733 = vmul.f32 %v2731, %v2732
    %v2734 = vsub.f32 1.0, %v2733
    %v2735 = vmul.f32 %v2732, %v2734
    %v2736 = vadd.f32 %v2732, %v2735
    %vm2737 = vweird.f32 %v2731
    %vm2738 = vweird.f32 %v2732
    %vm2739 = vmor %vm2737, %vm2738
    %v2740 = vsel %vm2739, %v2732, %v2736
    %v2741 = vand.u32 2147483647, %v2731
    %vm2742 = vcmp.eq.f32.partialorder %v2741, 8.507059e+37
    %v2743 = vand.u32 %v2731, 2147483648
    %v2744 = vor.u32 1.1754944e-38, %v2743
    %v2745 = vsel %vm2742, %v2744, %v2740
    %v2746 = vmul.f32 1.0, %v2745
    %v2747 = vtanh.pop %v2687
    %v2748 = vtanh.pop %v2688
    %v2749 = vxor.u32 %v2688, 2147483648
    %v2750 = vxor.u32 %v2689, 2147483648
    %v2751 = vmul.f32 %v2749, 1.442695
    %v2752 = vpow.pop %v2751
    %v2753 = vmul.f32 %v2750, 1.442695
    %v2754 = vpow.pop %v2753
    %v2755 = vadd.f32 %v2752, 1.0
    %v2756 = vadd.f32 %v2754, 1.0
    %v2757 = vrcp.pop %v2755
    %v2758 = vmul.f32 %v2755, %v2757
    %v2759 = vsub.f32 1.0, %v2758
    %v2760 = vmul.f32 %v2757, %v2759
    %v2761 = vadd.f32 %v2757, %v2760
    %vm2762 = vweird.f32 %v2755
    %vm2763 = vweird.f32 %v2757
    %vm2764 = vmor %vm2762, %vm2763
    %v2765 = vsel %vm2764, %v2757, %v2761
    %v2766 = vand.u32 2147483647, %v2755
    %vm2767 = vcmp.eq.f32.partialorder %v2766, 8.507059e+37
    %v2768 = vand.u32 %v2755, 2147483648
    %v2769 = vor.u32 1.1754944e-38, %v2768
    %v2770 = vsel %vm2767, %v2769, %v2765
    %v2771 = vmul.f32 1.0, %v2770
    %v2772 = vrcp.pop %v2756
    %v2773 = vmul.f32 %v2756, %v2772
    %v2774 = vsub.f32 1.0, %v2773
    %v2775 = vmul.f32 %v2772, %v2774
    %v2776 = vadd.f32 %v2772, %v2775
    %vm2777 = vweird.f32 %v2756
    %vm2778 = vweird.f32 %v2772
    %vm2779 = vmor %vm2777, %vm2778
    %v2780 = vsel %vm2779, %v2772, %v2776
    %v2781 = vand.u32 2147483647, %v2756
    %vm2782 = vcmp.eq.f32.partialorder %v2781, 8.507059e+37
    %v2783 = vand.u32 %v2756, 2147483648
    %v2784 = vor.u32 1.1754944e-38, %v2783
    %v2785 = vsel %vm2782, %v2784, %v2780
    %v2786 = vmul.f32 1.0, %v2785
    %v2787 = vmul.f32 %v2727, %v2430
    %v2788 = vmul.f32 %v2746, %v2431
    %2791 = vrot.lane.b32.xlu0 %v2747, 64
    %v2792 = vpop.permute.xlu0 %2791
    %2793 = vrot.lane.b32.xlu0 %v2748, 64
    %v2794 = vpop.permute.xlu0 %2793
    %v2795 = vsel %vm2041, %v2792, %v2794
    %v2798 = vmul.f32 %v2712, %v2795
    %v2799 = vmul.f32 %v2727, %v2794
    %2802 = vrot.lane.b32.xlu0 %v2798, 32
    %v2803 = vpop.permute.xlu0 %2802
    %2804 = vrot.lane.b32.xlu0 %v2799, 32
    %v2805 = vpop.permute.xlu0 %2804
    %v2806 = vsel %vm1711, %v2803, %v2805
    %v2809 = vadd.f32 %v2787, %v2803
    %v2810 = vadd.f32 %v2788, %v2806
    %v2811 = vtanh.pop %v2809
    %v2812 = vtanh.pop %v2810
    %2815 = vrot.lane.b32.xlu0 %v2811, 64
    %v2816 = vpop.permute.xlu0 %2815
    %2817 = vrot.lane.b32.xlu0 %v2812, 64
    %v2818 = vpop.permute.xlu0 %2817
    %v2819 = vsel %vm2041, %v2816, %v2818
    %v2822 = vmul.f32 %v2771, %v2816
    %v2823 = vmul.f32 %v2786, %v2819
    %v2824 = vrot.slane %v817, 3
    %v2825 = vrot.slane %v837, 3
    %v2826 = vrot.slane %v857, 3
    %v2827 = vrot.slane %v877, 3
    %v2828 = vrot.slane %v897, 3
    %v2834 = vrot.slane %v1507, 2
    %v2835 = vrot.slane %v1527, 2
    %v2836 = vrot.slane %v1547, 2
    %v2837 = vrot.slane %v1567, 2
    %v2838 = vrot.slane %v1587, 2
    %v2844 = vsel %vm1705, %v2824, %v2834
    %v2845 = vsel %vm1705, %v2825, %v2835
    %v2846 = vsel %vm1705, %v2826, %v2836
    %v2847 = vsel %vm1705, %v2827, %v2837
    %v2848 = vsel %vm1705, %v2828, %v2838
    %2851 = vrot.lane.b32.xlu0 %v2822, 32
    %v2852 = vpop.permute.xlu0 %2851
    %2853 = vrot.lane.b32.xlu0 %v2823, 32
    %v2854 = vpop.permute.xlu0 %2853
    %v2855 = vsel %vm1711, %v2852, %v2854
    %v2857 = vsel %vm1711, %v2854, 0
    %2859 = vmatpush.msra.mxu0 %v1664
    %2860 = vmatpush.msra.mxu0 %v1659
    %2861 = vmatpush.msra.mxu0 %v1654
    %2862 = vmatpush.msra.mxu0 %v1649
    %2863 = vmatpush.msra.mxu0 %v1644
    %2864 = vmatpush.msra.mxu0 %v1639
    %2865 = vmatpush.msra.mxu0 %v1634
    %2866 = vmatpush.msra.mxu0 %v1629
    %2867 = vmatpush.msra.mxu0 %v1624
    %2868 = vmatpush.msra.mxu0 %v1619
    %2869 = vmatpush.msra.mxu0 %v1614
    %2870 = vmatpush.msra.mxu0 %v1609
    %2871 = vmatpush.msra.mxu0 %v1604
    %2872 = vmatpush.msra.mxu0 %v1599
    %2873 = vmatpush.msra.mxu0 %v1594
    %2874 = vmatpush.msra.mxu0 %v1589
    %2875 = vmatmul.f32.gmra.mxu0 %v2855
    %v2876 = vpop.f32.mrf.mxu0
    %v2877 = vadd.f32 0.0, %v2876
    %2878 = vdwg.mxu0
    %2879 = vmatpush.msra.mxu0 0.0
    %2880 = vmatpush.msra.mxu0 0.0
    %2881 = vmatpush.msra.mxu0 0.0
    %2882 = vmatpush.msra.mxu0 0.0
    %2883 = vmatpush.msra.mxu0 0.0
    %2884 = vmatpush.msra.mxu0 0.0
    %2885 = vmatpush.msra.mxu0 0.0
    %2886 = vmatpush.msra.mxu0 0.0
    %2887 = vmatpush.msra.mxu0 0.0
    %2888 = vmatpush.msra.mxu0 0.0
    %2889 = vmatpush.msra.mxu0 0.0
    %2890 = vmatpush.msra.mxu0 0.0
    %2891 = vmatpush.msra.mxu0 %v1684
    %2892 = vmatpush.msra.mxu0 %v1679
    %2893 = vmatpush.msra.mxu0 %v1674
    %2894 = vmatpush.msra.mxu0 %v1669
    %2895 = vmatmul.f32.gmra.mxu0 %v2857
    %v2896 = vpop.f32.mrf.mxu0
    %v2897 = vadd.f32 %v2877, %v2896
    %2898 = vdwg.mxu0
    %2899 = vmatpush.msra.mxu0 %v1665
    %2900 = vmatpush.msra.mxu0 %v1660
    %2901 = vmatpush.msra.mxu0 %v1655
    %2902 = vmatpush.msra.mxu0 %v1650
    %2903 = vmatpush.msra.mxu0 %v1645
    %2904 = vmatpush.msra.mxu0 %v1640
    %2905 = vmatpush.msra.mxu0 %v1635
    %2906 = vmatpush.msra.mxu0 %v1630
    %2907 = vmatpush.msra.mxu0 %v1625
    %2908 = vmatpush.msra.mxu0 %v1620
    %2909 = vmatpush.msra.mxu0 %v1615
    %2910 = vmatpush.msra.mxu0 %v1610
    %2911 = vmatpush.msra.mxu0 %v1605
    %2912 = vmatpush.msra.mxu0 %v1600
    %2913 = vmatpush.msra.mxu0 %v1595
    %2914 = vmatpush.msra.mxu0 %v1590
    %2915 = vmatmul.f32.gmra.mxu0 %v2855
    %v2916 = vpop.f32.mrf.mxu0
    %v2917 = vadd.f32 0.0, %v2916
    %2918 = vdwg.mxu0
    %2919 = vmatpush.msra.mxu0 0.0
    %2920 = vmatpush.msra.mxu0 0.0
    %2921 = vmatpush.msra.mxu0 0.0
    %2922 = vmatpush.msra.mxu0 0.0
    %2923 = vmatpush.msra.mxu0 0.0
    %2924 = vmatpush.msra.mxu0 0.0
    %2925 = vmatpush.msra.mxu0 0.0
    %2926 = vmatpush.msra.mxu0 0.0
    %2927 = vmatpush.msra.mxu0 0.0
    %2928 = vmatpush.msra.mxu0 0.0
    %2929 = vmatpush.msra.mxu0 0.0
    %2930 = vmatpush.msra.mxu0 0.0
    %2931 = vmatpush.msra.mxu0 %v1685
    %2932 = vmatpush.msra.mxu0 %v1680
    %2933 = vmatpush.msra.mxu0 %v1675
    %2934 = vmatpush.msra.mxu0 %v1670
    %2935 = vmatmul.f32.gmra.mxu0 %v2857
    %v2936 = vpop.f32.mrf.mxu0
    %v2937 = vadd.f32 %v2917, %v2936
    %2938 = vdwg.mxu0
    %2939 = vmatpush.msra.mxu0 %v1666
    %2940 = vmatpush.msra.mxu0 %v1661
    %2941 = vmatpush.msra.mxu0 %v1656
    %2942 = vmatpush.msra.mxu0 %v1651
    %2943 = vmatpush.msra.mxu0 %v1646
    %2944 = vmatpush.msra.mxu0 %v1641
    %2945 = vmatpush.msra.mxu0 %v1636
    %2946 = vmatpush.msra.mxu0 %v1631
    %2947 = vmatpush.msra.mxu0 %v1626
    %2948 = vmatpush.msra.mxu0 %v1621
    %2949 = vmatpush.msra.mxu0 %v1616
    %2950 = vmatpush.msra.mxu0 %v1611
    %2951 = vmatpush.msra.mxu0 %v1606
    %2952 = vmatpush.msra.mxu0 %v1601
    %2953 = vmatpush.msra.mxu0 %v1596
    %2954 = vmatpush.msra.mxu0 %v1591
    %2955 = vmatmul.f32.gmra.mxu0 %v2855
    %v2956 = vpop.f32.mrf.mxu0
    %v2957 = vadd.f32 0.0, %v2956
    %2958 = vdwg.mxu0
    %2959 = vmatpush.msra.mxu0 0.0
    %2960 = vmatpush.msra.mxu0 0.0
    %2961 = vmatpush.msra.mxu0 0.0
    %2962 = vmatpush.msra.mxu0 0.0
    %2963 = vmatpush.msra.mxu0 0.0
    %2964 = vmatpush.msra.mxu0 0.0
    %2965 = vmatpush.msra.mxu0 0.0
    %2966 = vmatpush.msra.mxu0 0.0
    %2967 = vmatpush.msra.mxu0 0.0
    %2968 = vmatpush.msra.mxu0 0.0
    %2969 = vmatpush.msra.mxu0 0.0
    %2970 = vmatpush.msra.mxu0 0.0
    %2971 = vmatpush.msra.mxu0 %v1686
    %2972 = vmatpush.msra.mxu0 %v1681
    %2973 = vmatpush.msra.mxu0 %v1676
    %2974 = vmatpush.msra.mxu0 %v1671
    %2975 = vmatmul.f32.gmra.mxu0 %v2857
    %v2976 = vpop.f32.mrf.mxu0
    %v2977 = vadd.f32 %v2957, %v2976
    %2978 = vdwg.mxu0
    %2979 = vmatpush.msra.mxu0 %v1667
    %2980 = vmatpush.msra.mxu0 %v1662
    %2981 = vmatpush.msra.mxu0 %v1657
    %2982 = vmatpush.msra.mxu0 %v1652
    %2983 = vmatpush.msra.mxu0 %v1647
    %2984 = vmatpush.msra.mxu0 %v1642
    %2985 = vmatpush.msra.mxu0 %v1637
    %2986 = vmatpush.msra.mxu0 %v1632
    %2987 = vmatpush.msra.mxu0 %v1627
    %2988 = vmatpush.msra.mxu0 %v1622
    %2989 = vmatpush.msra.mxu0 %v1617
    %2990 = vmatpush.msra.mxu0 %v1612
    %2991 = vmatpush.msra.mxu0 %v1607
    %2992 = vmatpush.msra.mxu0 %v1602
    %2993 = vmatpush.msra.mxu0 %v1597
    %2994 = vmatpush.msra.mxu0 %v1592
    %2995 = vmatmul.f32.gmra.mxu0 %v2855
    %v2996 = vpop.f32.mrf.mxu0
    %v2997 = vadd.f32 0.0, %v2996
    %2998 = vdwg.mxu0
    %2999 = vmatpush.msra.mxu0 0.0
    %3000 = vmatpush.msra.mxu0 0.0
    %3001 = vmatpush.msra.mxu0 0.0
    %3002 = vmatpush.msra.mxu0 0.0
    %3003 = vmatpush.msra.mxu0 0.0
    %3004 = vmatpush.msra.mxu0 0.0
    %3005 = vmatpush.msra.mxu0 0.0
    %3006 = vmatpush.msra.mxu0 0.0
    %3007 = vmatpush.msra.mxu0 0.0
    %3008 = vmatpush.msra.mxu0 0.0
    %3009 = vmatpush.msra.mxu0 0.0
    %3010 = vmatpush.msra.mxu0 0.0
    %3011 = vmatpush.msra.mxu0 %v1687
    %3012 = vmatpush.msra.mxu0 %v1682
    %3013 = vmatpush.msra.mxu0 %v1677
    %3014 = vmatpush.msra.mxu0 %v1672
    %3015 = vmatmul.f32.gmra.mxu0 %v2857
    %v3016 = vpop.f32.mrf.mxu0
    %v3017 = vadd.f32 %v2997, %v3016
    %3018 = vdwg.mxu0
    %3019 = vmatpush.msra.mxu0 %v1668
    %3020 = vmatpush.msra.mxu0 %v1663
    %3021 = vmatpush.msra.mxu0 %v1658
    %3022 = vmatpush.msra.mxu0 %v1653
    %3023 = vmatpush.msra.mxu0 %v1648
    %3024 = vmatpush.msra.mxu0 %v1643
    %3025 = vmatpush.msra.mxu0 %v1638
    %3026 = vmatpush.msra.mxu0 %v1633
    %3027 = vmatpush.msra.mxu0 %v1628
    %3028 = vmatpush.msra.mxu0 %v1623
    %3029 = vmatpush.msra.mxu0 %v1618
    %3030 = vmatpush.msra.mxu0 %v1613
    %3031 = vmatpush.msra.mxu0 %v1608
    %3032 = vmatpush.msra.mxu0 %v1603
    %3033 = vmatpush.msra.mxu0 %v1598
    %3034 = vmatpush.msra.mxu0 %v1593
    %3035 = vmatmul.f32.gmra.mxu0 %v2855
    %v3036 = vpop.f32.mrf.mxu0
    %v3037 = vadd.f32 0.0, %v3036
    %3038 = vdwg.mxu0
    %3039 = vmatpush.msra.mxu0 0.0
    %3040 = vmatpush.msra.mxu0 0.0
    %3041 = vmatpush.msra.mxu0 0.0
    %3042 = vmatpush.msra.mxu0 0.0
    %3043 = vmatpush.msra.mxu0 0.0
    %3044 = vmatpush.msra.mxu0 0.0
    %3045 = vmatpush.msra.mxu0 0.0
    %3046 = vmatpush.msra.mxu0 0.0
    %3047 = vmatpush.msra.mxu0 0.0
    %3048 = vmatpush.msra.mxu0 0.0
    %3049 = vmatpush.msra.mxu0 0.0
    %3050 = vmatpush.msra.mxu0 0.0
    %3051 = vmatpush.msra.mxu0 %v1688
    %3052 = vmatpush.msra.mxu0 %v1683
    %3053 = vmatpush.msra.mxu0 %v1678
    %3054 = vmatpush.msra.mxu0 %v1673
    %3055 = vmatmul.f32.gmra.mxu0 %v2857
    %v3056 = vpop.f32.mrf.mxu0
    %v3057 = vadd.f32 %v3037, %v3056
    %3058 = vdwg.mxu0
    %v3059 = vadd.f32 %v2844, %v2897
    %v3060 = vadd.f32 %v2845, %v2937
    %v3061 = vadd.f32 %v2846, %v2977
    %v3062 = vadd.f32 %v2847, %v3017
    %v3063 = vadd.f32 %v2848, %v3057
    %v3064 = vadd.f32 %v3059, %v1921
    %v3065 = vadd.f32 %v3060, %v1922
    %v3066 = vadd.f32 %v3061, %v1923
    %v3067 = vadd.f32 %v3062, %v1924
    %v3068 = vadd.f32 %v3063, %v1925
    %v3069 = vxor.u32 %v3064, 2147483648
    %v3070 = vxor.u32 %v3065, 2147483648
    %v3071 = vmul.f32 %v3069, 1.442695
    %v3072 = vpow.pop %v3071
    %v3073 = vmul.f32 %v3070, 1.442695
    %v3074 = vpow.pop %v3073
    %v3075 = vadd.f32 %v3072, 1.0
    %v3076 = vadd.f32 %v3074, 1.0
    %v3077 = vrcp.pop %v3075
    %v3078 = vmul.f32 %v3075, %v3077
    %v3079 = vsub.f32 1.0, %v3078
    %v3080 = vmul.f32 %v3077, %v3079
    %v3081 = vadd.f32 %v3077, %v3080
    %vm3082 = vweird.f32 %v3075
    %vm3083 = vweird.f32 %v3077
    %vm3084 = vmor %vm3082, %vm3083
    %v3085 = vsel %vm3084, %v3077, %v3081
    %v3086 = vand.u32 2147483647, %v3075
    %vm3087 = vcmp.eq.f32.partialorder %v3086, 8.507059e+37
    %v3088 = vand.u32 %v3075, 2147483648
    %v3089 = vor.u32 1.1754944e-38, %v3088
    %v3090 = vsel %vm3087, %v3089, %v3085
    %v3091 = vmul.f32 1.0, %v3090
    %v3092 = vrcp.pop %v3076
    %v3093 = vmul.f32 %v3076, %v3092
    %v3094 = vsub.f32 1.0, %v3093
    %v3095 = vmul.f32 %v3092, %v3094
    %v3096 = vadd.f32 %v3092, %v3095
    %vm3097 = vweird.f32 %v3076
    %vm3098 = vweird.f32 %v3092
    %vm3099 = vmor %vm3097, %vm3098
    %v3100 = vsel %vm3099, %v3092, %v3096
    %v3101 = vand.u32 2147483647, %v3076
    %vm3102 = vcmp.eq.f32.partialorder %v3101, 8.507059e+37
    %v3103 = vand.u32 %v3076, 2147483648
    %v3104 = vor.u32 1.1754944e-38, %v3103
    %v3105 = vsel %vm3102, %v3104, %v3100
    %v3106 = vmul.f32 1.0, %v3105
    %v3107 = vxor.u32 %v3066, 2147483648
    %v3108 = vmul.f32 %v3107, 1.442695
    %v3109 = vpow.pop %v3108
    %v3110 = vadd.f32 %v3109, 1.0
    %v3111 = vrcp.pop %v3110
    %v3112 = vmul.f32 %v3110, %v3111
    %v3113 = vsub.f32 1.0, %v3112
    %v3114 = vmul.f32 %v3111, %v3113
    %v3115 = vadd.f32 %v3111, %v3114
    %vm3116 = vweird.f32 %v3110
    %vm3117 = vweird.f32 %v3111
    %vm3118 = vmor %vm3116, %vm3117
    %v3119 = vsel %vm3118, %v3111, %v3115
    %v3120 = vand.u32 2147483647, %v3110
    %vm3121 = vcmp.eq.f32.partialorder %v3120, 8.507059e+37
    %v3122 = vand.u32 %v3110, 2147483648
    %v3123 = vor.u32 1.1754944e-38, %v3122
    %v3124 = vsel %vm3121, %v3123, %v3119
    %v3125 = vmul.f32 1.0, %v3124
    %v3126 = vtanh.pop %v3066
    %v3127 = vtanh.pop %v3067
    %v3128 = vxor.u32 %v3067, 2147483648
    %v3129 = vxor.u32 %v3068, 2147483648
    %v3130 = vmul.f32 %v3128, 1.442695
    %v3131 = vpow.pop %v3130
    %v3132 = vmul.f32 %v3129, 1.442695
    %v3133 = vpow.pop %v3132
    %v3134 = vadd.f32 %v3131, 1.0
    %v3135 = vadd.f32 %v3133, 1.0
    %v3136 = vrcp.pop %v3134
    %v3137 = vmul.f32 %v3134, %v3136
    %v3138 = vsub.f32 1.0, %v3137
    %v3139 = vmul.f32 %v3136, %v3138
    %v3140 = vadd.f32 %v3136, %v3139
    %vm3141 = vweird.f32 %v3134
    %vm3142 = vweird.f32 %v3136
    %vm3143 = vmor %vm3141, %vm3142
    %v3144 = vsel %vm3143, %v3136, %v3140
    %v3145 = vand.u32 2147483647, %v3134
    %vm3146 = vcmp.eq.f32.partialorder %v3145, 8.507059e+37
    %v3147 = vand.u32 %v3134, 2147483648
    %v3148 = vor.u32 1.1754944e-38, %v3147
    %v3149 = vsel %vm3146, %v3148, %v3144
    %v3150 = vmul.f32 1.0, %v3149
    %v3151 = vrcp.pop %v3135
    %v3152 = vmul.f32 %v3135, %v3151
    %v3153 = vsub.f32 1.0, %v3152
    %v3154 = vmul.f32 %v3151, %v3153
    %v3155 = vadd.f32 %v3151, %v3154
    %vm3156 = vweird.f32 %v3135
    %vm3157 = vweird.f32 %v3151
    %vm3158 = vmor %vm3156, %vm3157
    %v3159 = vsel %vm3158, %v3151, %v3155
    %v3160 = vand.u32 2147483647, %v3135
    %vm3161 = vcmp.eq.f32.partialorder %v3160, 8.507059e+37
    %v3162 = vand.u32 %v3135, 2147483648
    %v3163 = vor.u32 1.1754944e-38, %v3162
    %v3164 = vsel %vm3161, %v3163, %v3159
    %v3165 = vmul.f32 1.0, %v3164
    %v3166 = vmul.f32 %v3106, %v2809
    %v3167 = vmul.f32 %v3125, %v2810
    %3170 = vrot.lane.b32.xlu0 %v3126, 64
    %v3171 = vpop.permute.xlu0 %3170
    %3172 = vrot.lane.b32.xlu0 %v3127, 64
    %v3173 = vpop.permute.xlu0 %3172
    %v3174 = vsel %vm2041, %v3171, %v3173
    %v3177 = vmul.f32 %v3091, %v3174
    %v3178 = vmul.f32 %v3106, %v3173
    %3181 = vrot.lane.b32.xlu0 %v3177, 32
    %v3182 = vpop.permute.xlu0 %3181
    %3183 = vrot.lane.b32.xlu0 %v3178, 32
    %v3184 = vpop.permute.xlu0 %3183
    %v3185 = vsel %vm1711, %v3182, %v3184
    %v3188 = vadd.f32 %v3166, %v3182
    %v3189 = vadd.f32 %v3167, %v3185
    %v3190 = vtanh.pop %v3188
    %v3191 = vtanh.pop %v3189
    %3194 = vrot.lane.b32.xlu0 %v3190, 64
    %v3195 = vpop.permute.xlu0 %3194
    %3196 = vrot.lane.b32.xlu0 %v3191, 64
    %v3197 = vpop.permute.xlu0 %3196
    %v3198 = vsel %vm2041, %v3195, %v3197
    %v3201 = vmul.f32 %v3150, %v3195
    %v3202 = vmul.f32 %v3165, %v3198
    %v3203 = vrot.slane %v817, 4
    %v3204 = vrot.slane %v837, 4
    %v3205 = vrot.slane %v857, 4
    %v3206 = vrot.slane %v877, 4
    %v3207 = vrot.slane %v897, 4
    %v3213 = vrot.slane %v1507, 3
    %v3214 = vrot.slane %v1527, 3
    %v3215 = vrot.slane %v1547, 3
    %v3216 = vrot.slane %v1567, 3
    %v3217 = vrot.slane %v1587, 3
    %v3223 = vsel %vm1705, %v3203, %v3213
    %v3224 = vsel %vm1705, %v3204, %v3214
    %v3225 = vsel %vm1705, %v3205, %v3215
    %v3226 = vsel %vm1705, %v3206, %v3216
    %v3227 = vsel %vm1705, %v3207, %v3217
    %3230 = vrot.lane.b32.xlu0 %v3201, 32
    %v3231 = vpop.permute.xlu0 %3230
    %3232 = vrot.lane.b32.xlu0 %v3202, 32
    %v3233 = vpop.permute.xlu0 %3232
    %v3234 = vsel %vm1711, %v3231, %v3233
    %v3236 = vsel %vm1711, %v3233, 0
    %3238 = vmatpush.msra.mxu0 %v1664
    %3239 = vmatpush.msra.mxu0 %v1659
    %3240 = vmatpush.msra.mxu0 %v1654
    %3241 = vmatpush.msra.mxu0 %v1649
    %3242 = vmatpush.msra.mxu0 %v1644
    %3243 = vmatpush.msra.mxu0 %v1639
    %3244 = vmatpush.msra.mxu0 %v1634
    %3245 = vmatpush.msra.mxu0 %v1629
    %3246 = vmatpush.msra.mxu0 %v1624
    %3247 = vmatpush.msra.mxu0 %v1619
    %3248 = vmatpush.msra.mxu0 %v1614
    %3249 = vmatpush.msra.mxu0 %v1609
    %3250 = vmatpush.msra.mxu0 %v1604
    %3251 = vmatpush.msra.mxu0 %v1599
    %3252 = vmatpush.msra.mxu0 %v1594
    %3253 = vmatpush.msra.mxu0 %v1589
    %3254 = vmatmul.f32.gmra.mxu0 %v3234
    %v3255 = vpop.f32.mrf.mxu0
    %v3256 = vadd.f32 0.0, %v3255
    %3257 = vdwg.mxu0
    %3258 = vmatpush.msra.mxu0 0.0
    %3259 = vmatpush.msra.mxu0 0.0
    %3260 = vmatpush.msra.mxu0 0.0
    %3261 = vmatpush.msra.mxu0 0.0
    %3262 = vmatpush.msra.mxu0 0.0
    %3263 = vmatpush.msra.mxu0 0.0
    %3264 = vmatpush.msra.mxu0 0.0
    %3265 = vmatpush.msra.mxu0 0.0
    %3266 = vmatpush.msra.mxu0 0.0
    %3267 = vmatpush.msra.mxu0 0.0
    %3268 = vmatpush.msra.mxu0 0.0
    %3269 = vmatpush.msra.mxu0 0.0
    %3270 = vmatpush.msra.mxu0 %v1684
    %3271 = vmatpush.msra.mxu0 %v1679
    %3272 = vmatpush.msra.mxu0 %v1674
    %3273 = vmatpush.msra.mxu0 %v1669
    %3274 = vmatmul.f32.gmra.mxu0 %v3236
    %v3275 = vpop.f32.mrf.mxu0
    %v3276 = vadd.f32 %v3256, %v3275
    %3277 = vdwg.mxu0
    %3278 = vmatpush.msra.mxu0 %v1665
    %3279 = vmatpush.msra.mxu0 %v1660
    %3280 = vmatpush.msra.mxu0 %v1655
    %3281 = vmatpush.msra.mxu0 %v1650
    %3282 = vmatpush.msra.mxu0 %v1645
    %3283 = vmatpush.msra.mxu0 %v1640
    %3284 = vmatpush.msra.mxu0 %v1635
    %3285 = vmatpush.msra.mxu0 %v1630
    %3286 = vmatpush.msra.mxu0 %v1625
    %3287 = vmatpush.msra.mxu0 %v1620
    %3288 = vmatpush.msra.mxu0 %v1615
    %3289 = vmatpush.msra.mxu0 %v1610
    %3290 = vmatpush.msra.mxu0 %v1605
    %3291 = vmatpush.msra.mxu0 %v1600
    %3292 = vmatpush.msra.mxu0 %v1595
    %3293 = vmatpush.msra.mxu0 %v1590
    %3294 = vmatmul.f32.gmra.mxu0 %v3234
    %v3295 = vpop.f32.mrf.mxu0
    %v3296 = vadd.f32 0.0, %v3295
    %3297 = vdwg.mxu0
    %3298 = vmatpush.msra.mxu0 0.0
    %3299 = vmatpush.msra.mxu0 0.0
    %3300 = vmatpush.msra.mxu0 0.0
    %3301 = vmatpush.msra.mxu0 0.0
    %3302 = vmatpush.msra.mxu0 0.0
    %3303 = vmatpush.msra.mxu0 0.0
    %3304 = vmatpush.msra.mxu0 0.0
    %3305 = vmatpush.msra.mxu0 0.0
    %3306 = vmatpush.msra.mxu0 0.0
    %3307 = vmatpush.msra.mxu0 0.0
    %3308 = vmatpush.msra.mxu0 0.0
    %3309 = vmatpush.msra.mxu0 0.0
    %3310 = vmatpush.msra.mxu0 %v1685
    %3311 = vmatpush.msra.mxu0 %v1680
    %3312 = vmatpush.msra.mxu0 %v1675
    %3313 = vmatpush.msra.mxu0 %v1670
    %3314 = vmatmul.f32.gmra.mxu0 %v3236
    %v3315 = vpop.f32.mrf.mxu0
    %v3316 = vadd.f32 %v3296, %v3315
    %3317 = vdwg.mxu0
    %3318 = vmatpush.msra.mxu0 %v1666
    %3319 = vmatpush.msra.mxu0 %v1661
    %3320 = vmatpush.msra.mxu0 %v1656
    %3321 = vmatpush.msra.mxu0 %v1651
    %3322 = vmatpush.msra.mxu0 %v1646
    %3323 = vmatpush.msra.mxu0 %v1641
    %3324 = vmatpush.msra.mxu0 %v1636
    %3325 = vmatpush.msra.mxu0 %v1631
    %3326 = vmatpush.msra.mxu0 %v1626
    %3327 = vmatpush.msra.mxu0 %v1621
    %3328 = vmatpush.msra.mxu0 %v1616
    %3329 = vmatpush.msra.mxu0 %v1611
    %3330 = vmatpush.msra.mxu0 %v1606
    %3331 = vmatpush.msra.mxu0 %v1601
    %3332 = vmatpush.msra.mxu0 %v1596
    %3333 = vmatpush.msra.mxu0 %v1591
    %3334 = vmatmul.f32.gmra.mxu0 %v3234
    %v3335 = vpop.f32.mrf.mxu0
    %v3336 = vadd.f32 0.0, %v3335
    %3337 = vdwg.mxu0
    %3338 = vmatpush.msra.mxu0 0.0
    %3339 = vmatpush.msra.mxu0 0.0
    %3340 = vmatpush.msra.mxu0 0.0
    %3341 = vmatpush.msra.mxu0 0.0
    %3342 = vmatpush.msra.mxu0 0.0
    %3343 = vmatpush.msra.mxu0 0.0
    %3344 = vmatpush.msra.mxu0 0.0
    %3345 = vmatpush.msra.mxu0 0.0
    %3346 = vmatpush.msra.mxu0 0.0
    %3347 = vmatpush.msra.mxu0 0.0
    %3348 = vmatpush.msra.mxu0 0.0
    %3349 = vmatpush.msra.mxu0 0.0
    %3350 = vmatpush.msra.mxu0 %v1686
    %3351 = vmatpush.msra.mxu0 %v1681
    %3352 = vmatpush.msra.mxu0 %v1676
    %3353 = vmatpush.msra.mxu0 %v1671
    %3354 = vmatmul.f32.gmra.mxu0 %v3236
    %v3355 = vpop.f32.mrf.mxu0
    %v3356 = vadd.f32 %v3336, %v3355
    %3357 = vdwg.mxu0
    %3358 = vmatpush.msra.mxu0 %v1667
    %3359 = vmatpush.msra.mxu0 %v1662
    %3360 = vmatpush.msra.mxu0 %v1657
    %3361 = vmatpush.msra.mxu0 %v1652
    %3362 = vmatpush.msra.mxu0 %v1647
    %3363 = vmatpush.msra.mxu0 %v1642
    %3364 = vmatpush.msra.mxu0 %v1637
    %3365 = vmatpush.msra.mxu0 %v1632
    %3366 = vmatpush.msra.mxu0 %v1627
    %3367 = vmatpush.msra.mxu0 %v1622
    %3368 = vmatpush.msra.mxu0 %v1617
    %3369 = vmatpush.msra.mxu0 %v1612
    %3370 = vmatpush.msra.mxu0 %v1607
    %3371 = vmatpush.msra.mxu0 %v1602
    %3372 = vmatpush.msra.mxu0 %v1597
    %3373 = vmatpush.msra.mxu0 %v1592
    %3374 = vmatmul.f32.gmra.mxu0 %v3234
    %v3375 = vpop.f32.mrf.mxu0
    %v3376 = vadd.f32 0.0, %v3375
    %3377 = vdwg.mxu0
    %3378 = vmatpush.msra.mxu0 0.0
    %3379 = vmatpush.msra.mxu0 0.0
    %3380 = vmatpush.msra.mxu0 0.0
    %3381 = vmatpush.msra.mxu0 0.0
    %3382 = vmatpush.msra.mxu0 0.0
    %3383 = vmatpush.msra.mxu0 0.0
    %3384 = vmatpush.msra.mxu0 0.0
    %3385 = vmatpush.msra.mxu0 0.0
    %3386 = vmatpush.msra.mxu0 0.0
    %3387 = vmatpush.msra.mxu0 0.0
    %3388 = vmatpush.msra.mxu0 0.0
    %3389 = vmatpush.msra.mxu0 0.0
    %3390 = vmatpush.msra.mxu0 %v1687
    %3391 = vmatpush.msra.mxu0 %v1682
    %3392 = vmatpush.msra.mxu0 %v1677
    %3393 = vmatpush.msra.mxu0 %v1672
    %3394 = vmatmul.f32.gmra.mxu0 %v3236
    %v3395 = vpop.f32.mrf.mxu0
    %v3396 = vadd.f32 %v3376, %v3395
    %3397 = vdwg.mxu0
    %3398 = vmatpush.msra.mxu0 %v1668
    %3399 = vmatpush.msra.mxu0 %v1663
    %3400 = vmatpush.msra.mxu0 %v1658
    %3401 = vmatpush.msra.mxu0 %v1653
    %3402 = vmatpush.msra.mxu0 %v1648
    %3403 = vmatpush.msra.mxu0 %v1643
    %3404 = vmatpush.msra.mxu0 %v1638
    %3405 = vmatpush.msra.mxu0 %v1633
    %3406 = vmatpush.msra.mxu0 %v1628
    %3407 = vmatpush.msra.mxu0 %v1623
    %3408 = vmatpush.msra.mxu0 %v1618
    %3409 = vmatpush.msra.mxu0 %v1613
    %3410 = vmatpush.msra.mxu0 %v1608
    %3411 = vmatpush.msra.mxu0 %v1603
    %3412 = vmatpush.msra.mxu0 %v1598
    %3413 = vmatpush.msra.mxu0 %v1593
    %3414 = vmatmul.f32.gmra.mxu0 %v3234
    %v3415 = vpop.f32.mrf.mxu0
    %v3416 = vadd.f32 0.0, %v3415
    %3417 = vdwg.mxu0
    %3418 = vmatpush.msra.mxu0 0.0
    %3419 = vmatpush.msra.mxu0 0.0
    %3420 = vmatpush.msra.mxu0 0.0
    %3421 = vmatpush.msra.mxu0 0.0
    %3422 = vmatpush.msra.mxu0 0.0
    %3423 = vmatpush.msra.mxu0 0.0
    %3424 = vmatpush.msra.mxu0 0.0
    %3425 = vmatpush.msra.mxu0 0.0
    %3426 = vmatpush.msra.mxu0 0.0
    %3427 = vmatpush.msra.mxu0 0.0
    %3428 = vmatpush.msra.mxu0 0.0
    %3429 = vmatpush.msra.mxu0 0.0
    %3430 = vmatpush.msra.mxu0 %v1688
    %3431 = vmatpush.msra.mxu0 %v1683
    %3432 = vmatpush.msra.mxu0 %v1678
    %3433 = vmatpush.msra.mxu0 %v1673
    %3434 = vmatmul.f32.gmra.mxu0 %v3236
    %v3435 = vpop.f32.mrf.mxu0
    %v3436 = vadd.f32 %v3416, %v3435
    %3437 = vdwg.mxu0
    %v3438 = vadd.f32 %v3223, %v3276
    %v3439 = vadd.f32 %v3224, %v3316
    %v3440 = vadd.f32 %v3225, %v3356
    %v3441 = vadd.f32 %v3226, %v3396
    %v3442 = vadd.f32 %v3227, %v3436
    %v3443 = vadd.f32 %v3438, %v1921
    %v3444 = vadd.f32 %v3439, %v1922
    %v3445 = vadd.f32 %v3440, %v1923
    %v3446 = vadd.f32 %v3441, %v1924
    %v3447 = vadd.f32 %v3442, %v1925
    %v3448 = vxor.u32 %v3443, 2147483648
    %v3449 = vxor.u32 %v3444, 2147483648
    %v3450 = vmul.f32 %v3448, 1.442695
    %v3451 = vpow.pop %v3450
    %v3452 = vmul.f32 %v3449, 1.442695
    %v3453 = vpow.pop %v3452
    %v3454 = vadd.f32 %v3451, 1.0
    %v3455 = vadd.f32 %v3453, 1.0
    %v3456 = vrcp.pop %v3454
    %v3457 = vmul.f32 %v3454, %v3456
    %v3458 = vsub.f32 1.0, %v3457
    %v3459 = vmul.f32 %v3456, %v3458
    %v3460 = vadd.f32 %v3456, %v3459
    %vm3461 = vweird.f32 %v3454
    %vm3462 = vweird.f32 %v3456
    %vm3463 = vmor %vm3461, %vm3462
    %v3464 = vsel %vm3463, %v3456, %v3460
    %v3465 = vand.u32 2147483647, %v3454
    %vm3466 = vcmp.eq.f32.partialorder %v3465, 8.507059e+37
    %v3467 = vand.u32 %v3454, 2147483648
    %v3468 = vor.u32 1.1754944e-38, %v3467
    %v3469 = vsel %vm3466, %v3468, %v3464
    %v3470 = vmul.f32 1.0, %v3469
    %v3471 = vrcp.pop %v3455
    %v3472 = vmul.f32 %v3455, %v3471
    %v3473 = vsub.f32 1.0, %v3472
    %v3474 = vmul.f32 %v3471, %v3473
    %v3475 = vadd.f32 %v3471, %v3474
    %vm3476 = vweird.f32 %v3455
    %vm3477 = vweird.f32 %v3471
    %vm3478 = vmor %vm3476, %vm3477
    %v3479 = vsel %vm3478, %v3471, %v3475
    %v3480 = vand.u32 2147483647, %v3455
    %vm3481 = vcmp.eq.f32.partialorder %v3480, 8.507059e+37
    %v3482 = vand.u32 %v3455, 2147483648
    %v3483 = vor.u32 1.1754944e-38, %v3482
    %v3484 = vsel %vm3481, %v3483, %v3479
    %v3485 = vmul.f32 1.0, %v3484
    %v3486 = vxor.u32 %v3445, 2147483648
    %v3487 = vmul.f32 %v3486, 1.442695
    %v3488 = vpow.pop %v3487
    %v3489 = vadd.f32 %v3488, 1.0
    %v3490 = vrcp.pop %v3489
    %v3491 = vmul.f32 %v3489, %v3490
    %v3492 = vsub.f32 1.0, %v3491
    %v3493 = vmul.f32 %v3490, %v3492
    %v3494 = vadd.f32 %v3490, %v3493
    %vm3495 = vweird.f32 %v3489
    %vm3496 = vweird.f32 %v3490
    %vm3497 = vmor %vm3495, %vm3496
    %v3498 = vsel %vm3497, %v3490, %v3494
    %v3499 = vand.u32 2147483647, %v3489
    %vm3500 = vcmp.eq.f32.partialorder %v3499, 8.507059e+37
    %v3501 = vand.u32 %v3489, 2147483648
    %v3502 = vor.u32 1.1754944e-38, %v3501
    %v3503 = vsel %vm3500, %v3502, %v3498
    %v3504 = vmul.f32 1.0, %v3503
    %v3505 = vtanh.pop %v3445
    %v3506 = vtanh.pop %v3446
    %v3507 = vxor.u32 %v3446, 2147483648
    %v3508 = vxor.u32 %v3447, 2147483648
    %v3509 = vmul.f32 %v3507, 1.442695
    %v3510 = vpow.pop %v3509
    %v3511 = vmul.f32 %v3508, 1.442695
    %v3512 = vpow.pop %v3511
    %v3513 = vadd.f32 %v3510, 1.0
    %v3514 = vadd.f32 %v3512, 1.0
    %v3515 = vrcp.pop %v3513
    %v3516 = vmul.f32 %v3513, %v3515
    %v3517 = vsub.f32 1.0, %v3516
    %v3518 = vmul.f32 %v3515, %v3517
    %v3519 = vadd.f32 %v3515, %v3518
    %vm3520 = vweird.f32 %v3513
    %vm3521 = vweird.f32 %v3515
    %vm3522 = vmor %vm3520, %vm3521
    %v3523 = vsel %vm3522, %v3515, %v3519
    %v3524 = vand.u32 2147483647, %v3513
    %vm3525 = vcmp.eq.f32.partialorder %v3524, 8.507059e+37
    %v3526 = vand.u32 %v3513, 2147483648
    %v3527 = vor.u32 1.1754944e-38, %v3526
    %v3528 = vsel %vm3525, %v3527, %v3523
    %v3529 = vmul.f32 1.0, %v3528
    %v3530 = vrcp.pop %v3514
    %v3531 = vmul.f32 %v3514, %v3530
    %v3532 = vsub.f32 1.0, %v3531
    %v3533 = vmul.f32 %v3530, %v3532
    %v3534 = vadd.f32 %v3530, %v3533
    %vm3535 = vweird.f32 %v3514
    %vm3536 = vweird.f32 %v3530
    %vm3537 = vmor %vm3535, %vm3536
    %v3538 = vsel %vm3537, %v3530, %v3534
    %v3539 = vand.u32 2147483647, %v3514
    %vm3540 = vcmp.eq.f32.partialorder %v3539, 8.507059e+37
    %v3541 = vand.u32 %v3514, 2147483648
    %v3542 = vor.u32 1.1754944e-38, %v3541
    %v3543 = vsel %vm3540, %v3542, %v3538
    %v3544 = vmul.f32 1.0, %v3543
    %v3545 = vmul.f32 %v3485, %v3188
    %v3546 = vmul.f32 %v3504, %v3189
    %3549 = vrot.lane.b32.xlu0 %v3505, 64
    %v3550 = vpop.permute.xlu0 %3549
    %3551 = vrot.lane.b32.xlu0 %v3506, 64
    %v3552 = vpop.permute.xlu0 %3551
    %v3553 = vsel %vm2041, %v3550, %v3552
    %v3556 = vmul.f32 %v3470, %v3553
    %v3557 = vmul.f32 %v3485, %v3552
    %3560 = vrot.lane.b32.xlu0 %v3556, 32
    %v3561 = vpop.permute.xlu0 %3560
    %3562 = vrot.lane.b32.xlu0 %v3557, 32
    %v3563 = vpop.permute.xlu0 %3562
    %v3564 = vsel %vm1711, %v3561, %v3563
    %v3567 = vadd.f32 %v3545, %v3561
    %v3568 = vadd.f32 %v3546, %v3564
    %v3569 = vtanh.pop %v3567
    %v3570 = vtanh.pop %v3568
    %3573 = vrot.lane.b32.xlu0 %v3569, 64
    %v3574 = vpop.permute.xlu0 %3573
    %3575 = vrot.lane.b32.xlu0 %v3570, 64
    %v3576 = vpop.permute.xlu0 %3575
    %v3577 = vsel %vm2041, %v3574, %v3576
    %v3580 = vmul.f32 %v3529, %v3574
    %v3581 = vmul.f32 %v3544, %v3577
    %v3582 = vrot.slane %v817, 5
    %v3583 = vrot.slane %v837, 5
    %v3584 = vrot.slane %v857, 5
    %v3585 = vrot.slane %v877, 5
    %v3586 = vrot.slane %v897, 5
    %v3592 = vrot.slane %v1507, 4
    %v3593 = vrot.slane %v1527, 4
    %v3594 = vrot.slane %v1547, 4
    %v3595 = vrot.slane %v1567, 4
    %v3596 = vrot.slane %v1587, 4
    %v3602 = vsel %vm1705, %v3582, %v3592
    %v3603 = vsel %vm1705, %v3583, %v3593
    %v3604 = vsel %vm1705, %v3584, %v3594
    %v3605 = vsel %vm1705, %v3585, %v3595
    %v3606 = vsel %vm1705, %v3586, %v3596
    %3609 = vrot.lane.b32.xlu0 %v3580, 32
    %v3610 = vpop.permute.xlu0 %3609
    %3611 = vrot.lane.b32.xlu0 %v3581, 32
    %v3612 = vpop.permute.xlu0 %3611
    %v3613 = vsel %vm1711, %v3610, %v3612
    %v3615 = vsel %vm1711, %v3612, 0
    %3617 = vmatpush.msra.mxu0 %v1664
    %3618 = vmatpush.msra.mxu0 %v1659
    %3619 = vmatpush.msra.mxu0 %v1654
    %3620 = vmatpush.msra.mxu0 %v1649
    %3621 = vmatpush.msra.mxu0 %v1644
    %3622 = vmatpush.msra.mxu0 %v1639
    %3623 = vmatpush.msra.mxu0 %v1634
    %3624 = vmatpush.msra.mxu0 %v1629
    %3625 = vmatpush.msra.mxu0 %v1624
    %3626 = vmatpush.msra.mxu0 %v1619
    %3627 = vmatpush.msra.mxu0 %v1614
    %3628 = vmatpush.msra.mxu0 %v1609
    %3629 = vmatpush.msra.mxu0 %v1604
    %3630 = vmatpush.msra.mxu0 %v1599
    %3631 = vmatpush.msra.mxu0 %v1594
    %3632 = vmatpush.msra.mxu0 %v1589
    %3633 = vmatmul.f32.gmra.mxu0 %v3613
    %v3634 = vpop.f32.mrf.mxu0
    %v3635 = vadd.f32 0.0, %v3634
    %3636 = vdwg.mxu0
    %3637 = vmatpush.msra.mxu0 0.0
    %3638 = vmatpush.msra.mxu0 0.0
    %3639 = vmatpush.msra.mxu0 0.0
    %3640 = vmatpush.msra.mxu0 0.0
    %3641 = vmatpush.msra.mxu0 0.0
    %3642 = vmatpush.msra.mxu0 0.0
    %3643 = vmatpush.msra.mxu0 0.0
    %3644 = vmatpush.msra.mxu0 0.0
    %3645 = vmatpush.msra.mxu0 0.0
    %3646 = vmatpush.msra.mxu0 0.0
    %3647 = vmatpush.msra.mxu0 0.0
    %3648 = vmatpush.msra.mxu0 0.0
    %3649 = vmatpush.msra.mxu0 %v1684
    %3650 = vmatpush.msra.mxu0 %v1679
    %3651 = vmatpush.msra.mxu0 %v1674
    %3652 = vmatpush.msra.mxu0 %v1669
    %3653 = vmatmul.f32.gmra.mxu0 %v3615
    %v3654 = vpop.f32.mrf.mxu0
    %v3655 = vadd.f32 %v3635, %v3654
    %3656 = vdwg.mxu0
    %3657 = vmatpush.msra.mxu0 %v1665
    %3658 = vmatpush.msra.mxu0 %v1660
    %3659 = vmatpush.msra.mxu0 %v1655
    %3660 = vmatpush.msra.mxu0 %v1650
    %3661 = vmatpush.msra.mxu0 %v1645
    %3662 = vmatpush.msra.mxu0 %v1640
    %3663 = vmatpush.msra.mxu0 %v1635
    %3664 = vmatpush.msra.mxu0 %v1630
    %3665 = vmatpush.msra.mxu0 %v1625
    %3666 = vmatpush.msra.mxu0 %v1620
    %3667 = vmatpush.msra.mxu0 %v1615
    %3668 = vmatpush.msra.mxu0 %v1610
    %3669 = vmatpush.msra.mxu0 %v1605
    %3670 = vmatpush.msra.mxu0 %v1600
    %3671 = vmatpush.msra.mxu0 %v1595
    %3672 = vmatpush.msra.mxu0 %v1590
    %3673 = vmatmul.f32.gmra.mxu0 %v3613
    %v3674 = vpop.f32.mrf.mxu0
    %v3675 = vadd.f32 0.0, %v3674
    %3676 = vdwg.mxu0
    %3677 = vmatpush.msra.mxu0 0.0
    %3678 = vmatpush.msra.mxu0 0.0
    %3679 = vmatpush.msra.mxu0 0.0
    %3680 = vmatpush.msra.mxu0 0.0
    %3681 = vmatpush.msra.mxu0 0.0
    %3682 = vmatpush.msra.mxu0 0.0
    %3683 = vmatpush.msra.mxu0 0.0
    %3684 = vmatpush.msra.mxu0 0.0
    %3685 = vmatpush.msra.mxu0 0.0
    %3686 = vmatpush.msra.mxu0 0.0
    %3687 = vmatpush.msra.mxu0 0.0
    %3688 = vmatpush.msra.mxu0 0.0
    %3689 = vmatpush.msra.mxu0 %v1685
    %3690 = vmatpush.msra.mxu0 %v1680
    %3691 = vmatpush.msra.mxu0 %v1675
    %3692 = vmatpush.msra.mxu0 %v1670
    %3693 = vmatmul.f32.gmra.mxu0 %v3615
    %v3694 = vpop.f32.mrf.mxu0
    %v3695 = vadd.f32 %v3675, %v3694
    %3696 = vdwg.mxu0
    %3697 = vmatpush.msra.mxu0 %v1666
    %3698 = vmatpush.msra.mxu0 %v1661
    %3699 = vmatpush.msra.mxu0 %v1656
    %3700 = vmatpush.msra.mxu0 %v1651
    %3701 = vmatpush.msra.mxu0 %v1646
    %3702 = vmatpush.msra.mxu0 %v1641
    %3703 = vmatpush.msra.mxu0 %v1636
    %3704 = vmatpush.msra.mxu0 %v1631
    %3705 = vmatpush.msra.mxu0 %v1626
    %3706 = vmatpush.msra.mxu0 %v1621
    %3707 = vmatpush.msra.mxu0 %v1616
    %3708 = vmatpush.msra.mxu0 %v1611
    %3709 = vmatpush.msra.mxu0 %v1606
    %3710 = vmatpush.msra.mxu0 %v1601
    %3711 = vmatpush.msra.mxu0 %v1596
    %3712 = vmatpush.msra.mxu0 %v1591
    %3713 = vmatmul.f32.gmra.mxu0 %v3613
    %v3714 = vpop.f32.mrf.mxu0
    %v3715 = vadd.f32 0.0, %v3714
    %3716 = vdwg.mxu0
    %3717 = vmatpush.msra.mxu0 0.0
    %3718 = vmatpush.msra.mxu0 0.0
    %3719 = vmatpush.msra.mxu0 0.0
    %3720 = vmatpush.msra.mxu0 0.0
    %3721 = vmatpush.msra.mxu0 0.0
    %3722 = vmatpush.msra.mxu0 0.0
    %3723 = vmatpush.msra.mxu0 0.0
    %3724 = vmatpush.msra.mxu0 0.0
    %3725 = vmatpush.msra.mxu0 0.0
    %3726 = vmatpush.msra.mxu0 0.0
    %3727 = vmatpush.msra.mxu0 0.0
    %3728 = vmatpush.msra.mxu0 0.0
    %3729 = vmatpush.msra.mxu0 %v1686
    %3730 = vmatpush.msra.mxu0 %v1681
    %3731 = vmatpush.msra.mxu0 %v1676
    %3732 = vmatpush.msra.mxu0 %v1671
    %3733 = vmatmul.f32.gmra.mxu0 %v3615
    %v3734 = vpop.f32.mrf.mxu0
    %v3735 = vadd.f32 %v3715, %v3734
    %3736 = vdwg.mxu0
    %3737 = vmatpush.msra.mxu0 %v1667
    %3738 = vmatpush.msra.mxu0 %v1662
    %3739 = vmatpush.msra.mxu0 %v1657
    %3740 = vmatpush.msra.mxu0 %v1652
    %3741 = vmatpush.msra.mxu0 %v1647
    %3742 = vmatpush.msra.mxu0 %v1642
    %3743 = vmatpush.msra.mxu0 %v1637
    %3744 = vmatpush.msra.mxu0 %v1632
    %3745 = vmatpush.msra.mxu0 %v1627
    %3746 = vmatpush.msra.mxu0 %v1622
    %3747 = vmatpush.msra.mxu0 %v1617
    %3748 = vmatpush.msra.mxu0 %v1612
    %3749 = vmatpush.msra.mxu0 %v1607
    %3750 = vmatpush.msra.mxu0 %v1602
    %3751 = vmatpush.msra.mxu0 %v1597
    %3752 = vmatpush.msra.mxu0 %v1592
    %3753 = vmatmul.f32.gmra.mxu0 %v3613
    %v3754 = vpop.f32.mrf.mxu0
    %v3755 = vadd.f32 0.0, %v3754
    %3756 = vdwg.mxu0
    %3757 = vmatpush.msra.mxu0 0.0
    %3758 = vmatpush.msra.mxu0 0.0
    %3759 = vmatpush.msra.mxu0 0.0
    %3760 = vmatpush.msra.mxu0 0.0
    %3761 = vmatpush.msra.mxu0 0.0
    %3762 = vmatpush.msra.mxu0 0.0
    %3763 = vmatpush.msra.mxu0 0.0
    %3764 = vmatpush.msra.mxu0 0.0
    %3765 = vmatpush.msra.mxu0 0.0
    %3766 = vmatpush.msra.mxu0 0.0
    %3767 = vmatpush.msra.mxu0 0.0
    %3768 = vmatpush.msra.mxu0 0.0
    %3769 = vmatpush.msra.mxu0 %v1687
    %3770 = vmatpush.msra.mxu0 %v1682
    %3771 = vmatpush.msra.mxu0 %v1677
    %3772 = vmatpush.msra.mxu0 %v1672
    %3773 = vmatmul.f32.gmra.mxu0 %v3615
    %v3774 = vpop.f32.mrf.mxu0
    %v3775 = vadd.f32 %v3755, %v3774
    %3776 = vdwg.mxu0
    %3777 = vmatpush.msra.mxu0 %v1668
    %3778 = vmatpush.msra.mxu0 %v1663
    %3779 = vmatpush.msra.mxu0 %v1658
    %3780 = vmatpush.msra.mxu0 %v1653
    %3781 = vmatpush.msra.mxu0 %v1648
    %3782 = vmatpush.msra.mxu0 %v1643
    %3783 = vmatpush.msra.mxu0 %v1638
    %3784 = vmatpush.msra.mxu0 %v1633
    %3785 = vmatpush.msra.mxu0 %v1628
    %3786 = vmatpush.msra.mxu0 %v1623
    %3787 = vmatpush.msra.mxu0 %v1618
    %3788 = vmatpush.msra.mxu0 %v1613
    %3789 = vmatpush.msra.mxu0 %v1608
    %3790 = vmatpush.msra.mxu0 %v1603
    %3791 = vmatpush.msra.mxu0 %v1598
    %3792 = vmatpush.msra.mxu0 %v1593
    %3793 = vmatmul.f32.gmra.mxu0 %v3613
    %v3794 = vpop.f32.mrf.mxu0
    %v3795 = vadd.f32 0.0, %v3794
    %3796 = vdwg.mxu0
    %3797 = vmatpush.msra.mxu0 0.0
    %3798 = vmatpush.msra.mxu0 0.0
    %3799 = vmatpush.msra.mxu0 0.0
    %3800 = vmatpush.msra.mxu0 0.0
    %3801 = vmatpush.msra.mxu0 0.0
    %3802 = vmatpush.msra.mxu0 0.0
    %3803 = vmatpush.msra.mxu0 0.0
    %3804 = vmatpush.msra.mxu0 0.0
    %3805 = vmatpush.msra.mxu0 0.0
    %3806 = vmatpush.msra.mxu0 0.0
    %3807 = vmatpush.msra.mxu0 0.0
    %3808 = vmatpush.msra.mxu0 0.0
    %3809 = vmatpush.msra.mxu0 %v1688
    %3810 = vmatpush.msra.mxu0 %v1683
    %3811 = vmatpush.msra.mxu0 %v1678
    %3812 = vmatpush.msra.mxu0 %v1673
    %3813 = vmatmul.f32.gmra.mxu0 %v3615
    %v3814 = vpop.f32.mrf.mxu0
    %v3815 = vadd.f32 %v3795, %v3814
    %3816 = vdwg.mxu0
    %v3817 = vadd.f32 %v3602, %v3655
    %v3818 = vadd.f32 %v3603, %v3695
    %v3819 = vadd.f32 %v3604, %v3735
    %v3820 = vadd.f32 %v3605, %v3775
    %v3821 = vadd.f32 %v3606, %v3815
    %v3822 = vadd.f32 %v3817, %v1921
    %v3823 = vadd.f32 %v3818, %v1922
    %v3824 = vadd.f32 %v3819, %v1923
    %v3825 = vadd.f32 %v3820, %v1924
    %v3826 = vadd.f32 %v3821, %v1925
    %v3827 = vxor.u32 %v3822, 2147483648
    %v3828 = vxor.u32 %v3823, 2147483648
    %v3829 = vmul.f32 %v3827, 1.442695
    %v3830 = vpow.pop %v3829
    %v3831 = vmul.f32 %v3828, 1.442695
    %v3832 = vpow.pop %v3831
    %v3833 = vadd.f32 %v3830, 1.0
    %v3834 = vadd.f32 %v3832, 1.0
    %v3835 = vrcp.pop %v3833
    %v3836 = vmul.f32 %v3833, %v3835
    %v3837 = vsub.f32 1.0, %v3836
    %v3838 = vmul.f32 %v3835, %v3837
    %v3839 = vadd.f32 %v3835, %v3838
    %vm3840 = vweird.f32 %v3833
    %vm3841 = vweird.f32 %v3835
    %vm3842 = vmor %vm3840, %vm3841
    %v3843 = vsel %vm3842, %v3835, %v3839
    %v3844 = vand.u32 2147483647, %v3833
    %vm3845 = vcmp.eq.f32.partialorder %v3844, 8.507059e+37
    %v3846 = vand.u32 %v3833, 2147483648
    %v3847 = vor.u32 1.1754944e-38, %v3846
    %v3848 = vsel %vm3845, %v3847, %v3843
    %v3849 = vmul.f32 1.0, %v3848
    %v3850 = vrcp.pop %v3834
    %v3851 = vmul.f32 %v3834, %v3850
    %v3852 = vsub.f32 1.0, %v3851
    %v3853 = vmul.f32 %v3850, %v3852
    %v3854 = vadd.f32 %v3850, %v3853
    %vm3855 = vweird.f32 %v3834
    %vm3856 = vweird.f32 %v3850
    %vm3857 = vmor %vm3855, %vm3856
    %v3858 = vsel %vm3857, %v3850, %v3854
    %v3859 = vand.u32 2147483647, %v3834
    %vm3860 = vcmp.eq.f32.partialorder %v3859, 8.507059e+37
    %v3861 = vand.u32 %v3834, 2147483648
    %v3862 = vor.u32 1.1754944e-38, %v3861
    %v3863 = vsel %vm3860, %v3862, %v3858
    %v3864 = vmul.f32 1.0, %v3863
    %v3865 = vxor.u32 %v3824, 2147483648
    %v3866 = vmul.f32 %v3865, 1.442695
    %v3867 = vpow.pop %v3866
    %v3868 = vadd.f32 %v3867, 1.0
    %v3869 = vrcp.pop %v3868
    %v3870 = vmul.f32 %v3868, %v3869
    %v3871 = vsub.f32 1.0, %v3870
    %v3872 = vmul.f32 %v3869, %v3871
    %v3873 = vadd.f32 %v3869, %v3872
    %vm3874 = vweird.f32 %v3868
    %vm3875 = vweird.f32 %v3869
    %vm3876 = vmor %vm3874, %vm3875
    %v3877 = vsel %vm3876, %v3869, %v3873
    %v3878 = vand.u32 2147483647, %v3868
    %vm3879 = vcmp.eq.f32.partialorder %v3878, 8.507059e+37
    %v3880 = vand.u32 %v3868, 2147483648
    %v3881 = vor.u32 1.1754944e-38, %v3880
    %v3882 = vsel %vm3879, %v3881, %v3877
    %v3883 = vmul.f32 1.0, %v3882
    %v3884 = vtanh.pop %v3824
    %v3885 = vtanh.pop %v3825
    %v3886 = vxor.u32 %v3825, 2147483648
    %v3887 = vxor.u32 %v3826, 2147483648
    %v3888 = vmul.f32 %v3886, 1.442695
    %v3889 = vpow.pop %v3888
    %v3890 = vmul.f32 %v3887, 1.442695
    %v3891 = vpow.pop %v3890
    %v3892 = vadd.f32 %v3889, 1.0
    %v3893 = vadd.f32 %v3891, 1.0
    %v3894 = vrcp.pop %v3892
    %v3895 = vmul.f32 %v3892, %v3894
    %v3896 = vsub.f32 1.0, %v3895
    %v3897 = vmul.f32 %v3894, %v3896
    %v3898 = vadd.f32 %v3894, %v3897
    %vm3899 = vweird.f32 %v3892
    %vm3900 = vweird.f32 %v3894
    %vm3901 = vmor %vm3899, %vm3900
    %v3902 = vsel %vm3901, %v3894, %v3898
    %v3903 = vand.u32 2147483647, %v3892
    %vm3904 = vcmp.eq.f32.partialorder %v3903, 8.507059e+37
    %v3905 = vand.u32 %v3892, 2147483648
    %v3906 = vor.u32 1.1754944e-38, %v3905
    %v3907 = vsel %vm3904, %v3906, %v3902
    %v3908 = vmul.f32 1.0, %v3907
    %v3909 = vrcp.pop %v3893
    %v3910 = vmul.f32 %v3893, %v3909
    %v3911 = vsub.f32 1.0, %v3910
    %v3912 = vmul.f32 %v3909, %v3911
    %v3913 = vadd.f32 %v3909, %v3912
    %vm3914 = vweird.f32 %v3893
    %vm3915 = vweird.f32 %v3909
    %vm3916 = vmor %vm3914, %vm3915
    %v3917 = vsel %vm3916, %v3909, %v3913
    %v3918 = vand.u32 2147483647, %v3893
    %vm3919 = vcmp.eq.f32.partialorder %v3918, 8.507059e+37
    %v3920 = vand.u32 %v3893, 2147483648
    %v3921 = vor.u32 1.1754944e-38, %v3920
    %v3922 = vsel %vm3919, %v3921, %v3917
    %v3923 = vmul.f32 1.0, %v3922
    %v3924 = vmul.f32 %v3864, %v3567
    %v3925 = vmul.f32 %v3883, %v3568
    %3928 = vrot.lane.b32.xlu0 %v3884, 64
    %v3929 = vpop.permute.xlu0 %3928
    %3930 = vrot.lane.b32.xlu0 %v3885, 64
    %v3931 = vpop.permute.xlu0 %3930
    %v3932 = vsel %vm2041, %v3929, %v3931
    %v3935 = vmul.f32 %v3849, %v3932
    %v3936 = vmul.f32 %v3864, %v3931
    %3939 = vrot.lane.b32.xlu0 %v3935, 32
    %v3940 = vpop.permute.xlu0 %3939
    %3941 = vrot.lane.b32.xlu0 %v3936, 32
    %v3942 = vpop.permute.xlu0 %3941
    %v3943 = vsel %vm1711, %v3940, %v3942
    %v3946 = vadd.f32 %v3924, %v3940
    %v3947 = vadd.f32 %v3925, %v3943
    %v3948 = vtanh.pop %v3946
    %v3949 = vtanh.pop %v3947
    %3952 = vrot.lane.b32.xlu0 %v3948, 64
    %v3953 = vpop.permute.xlu0 %3952
    %3954 = vrot.lane.b32.xlu0 %v3949, 64
    %v3955 = vpop.permute.xlu0 %3954
    %v3956 = vsel %vm2041, %v3953, %v3955
    %v3959 = vmul.f32 %v3908, %v3953
    %v3960 = vmul.f32 %v3923, %v3956
    %v3961 = vrot.slane %v817, 6
    %v3962 = vrot.slane %v837, 6
    %v3963 = vrot.slane %v857, 6
    %v3964 = vrot.slane %v877, 6
    %v3965 = vrot.slane %v897, 6
    %v3971 = vrot.slane %v1507, 5
    %v3972 = vrot.slane %v1527, 5
    %v3973 = vrot.slane %v1547, 5
    %v3974 = vrot.slane %v1567, 5
    %v3975 = vrot.slane %v1587, 5
    %v3981 = vsel %vm1705, %v3961, %v3971
    %v3982 = vsel %vm1705, %v3962, %v3972
    %v3983 = vsel %vm1705, %v3963, %v3973
    %v3984 = vsel %vm1705, %v3964, %v3974
    %v3985 = vsel %vm1705, %v3965, %v3975
    %3988 = vrot.lane.b32.xlu0 %v3959, 32
    %v3989 = vpop.permute.xlu0 %3988
    %3990 = vrot.lane.b32.xlu0 %v3960, 32
    %v3991 = vpop.permute.xlu0 %3990
    %v3992 = vsel %vm1711, %v3989, %v3991
    %v3994 = vsel %vm1711, %v3991, 0
    %3996 = vmatpush.msra.mxu0 %v1664
    %3997 = vmatpush.msra.mxu0 %v1659
    %3998 = vmatpush.msra.mxu0 %v1654
    %3999 = vmatpush.msra.mxu0 %v1649
    %4000 = vmatpush.msra.mxu0 %v1644
    %4001 = vmatpush.msra.mxu0 %v1639
    %4002 = vmatpush.msra.mxu0 %v1634
    %4003 = vmatpush.msra.mxu0 %v1629
    %4004 = vmatpush.msra.mxu0 %v1624
    %4005 = vmatpush.msra.mxu0 %v1619
    %4006 = vmatpush.msra.mxu0 %v1614
    %4007 = vmatpush.msra.mxu0 %v1609
    %4008 = vmatpush.msra.mxu0 %v1604
    %4009 = vmatpush.msra.mxu0 %v1599
    %4010 = vmatpush.msra.mxu0 %v1594
    %4011 = vmatpush.msra.mxu0 %v1589
    %4012 = vmatmul.f32.gmra.mxu0 %v3992
    %v4013 = vpop.f32.mrf.mxu0
    %v4014 = vadd.f32 0.0, %v4013
    %4015 = vdwg.mxu0
    %4016 = vmatpush.msra.mxu0 0.0
    %4017 = vmatpush.msra.mxu0 0.0
    %4018 = vmatpush.msra.mxu0 0.0
    %4019 = vmatpush.msra.mxu0 0.0
    %4020 = vmatpush.msra.mxu0 0.0
    %4021 = vmatpush.msra.mxu0 0.0
    %4022 = vmatpush.msra.mxu0 0.0
    %4023 = vmatpush.msra.mxu0 0.0
    %4024 = vmatpush.msra.mxu0 0.0
    %4025 = vmatpush.msra.mxu0 0.0
    %4026 = vmatpush.msra.mxu0 0.0
    %4027 = vmatpush.msra.mxu0 0.0
    %4028 = vmatpush.msra.mxu0 %v1684
    %4029 = vmatpush.msra.mxu0 %v1679
    %4030 = vmatpush.msra.mxu0 %v1674
    %4031 = vmatpush.msra.mxu0 %v1669
    %4032 = vmatmul.f32.gmra.mxu0 %v3994
    %v4033 = vpop.f32.mrf.mxu0
    %v4034 = vadd.f32 %v4014, %v4033
    %4035 = vdwg.mxu0
    %4036 = vmatpush.msra.mxu0 %v1665
    %4037 = vmatpush.msra.mxu0 %v1660
    %4038 = vmatpush.msra.mxu0 %v1655
    %4039 = vmatpush.msra.mxu0 %v1650
    %4040 = vmatpush.msra.mxu0 %v1645
    %4041 = vmatpush.msra.mxu0 %v1640
    %4042 = vmatpush.msra.mxu0 %v1635
    %4043 = vmatpush.msra.mxu0 %v1630
    %4044 = vmatpush.msra.mxu0 %v1625
    %4045 = vmatpush.msra.mxu0 %v1620
    %4046 = vmatpush.msra.mxu0 %v1615
    %4047 = vmatpush.msra.mxu0 %v1610
    %4048 = vmatpush.msra.mxu0 %v1605
    %4049 = vmatpush.msra.mxu0 %v1600
    %4050 = vmatpush.msra.mxu0 %v1595
    %4051 = vmatpush.msra.mxu0 %v1590
    %4052 = vmatmul.f32.gmra.mxu0 %v3992
    %v4053 = vpop.f32.mrf.mxu0
    %v4054 = vadd.f32 0.0, %v4053
    %4055 = vdwg.mxu0
    %4056 = vmatpush.msra.mxu0 0.0
    %4057 = vmatpush.msra.mxu0 0.0
    %4058 = vmatpush.msra.mxu0 0.0
    %4059 = vmatpush.msra.mxu0 0.0
    %4060 = vmatpush.msra.mxu0 0.0
    %4061 = vmatpush.msra.mxu0 0.0
    %4062 = vmatpush.msra.mxu0 0.0
    %4063 = vmatpush.msra.mxu0 0.0
    %4064 = vmatpush.msra.mxu0 0.0
    %4065 = vmatpush.msra.mxu0 0.0
    %4066 = vmatpush.msra.mxu0 0.0
    %4067 = vmatpush.msra.mxu0 0.0
    %4068 = vmatpush.msra.mxu0 %v1685
    %4069 = vmatpush.msra.mxu0 %v1680
    %4070 = vmatpush.msra.mxu0 %v1675
    %4071 = vmatpush.msra.mxu0 %v1670
    %4072 = vmatmul.f32.gmra.mxu0 %v3994
    %v4073 = vpop.f32.mrf.mxu0
    %v4074 = vadd.f32 %v4054, %v4073
    %4075 = vdwg.mxu0
    %4076 = vmatpush.msra.mxu0 %v1666
    %4077 = vmatpush.msra.mxu0 %v1661
    %4078 = vmatpush.msra.mxu0 %v1656
    %4079 = vmatpush.msra.mxu0 %v1651
    %4080 = vmatpush.msra.mxu0 %v1646
    %4081 = vmatpush.msra.mxu0 %v1641
    %4082 = vmatpush.msra.mxu0 %v1636
    %4083 = vmatpush.msra.mxu0 %v1631
    %4084 = vmatpush.msra.mxu0 %v1626
    %4085 = vmatpush.msra.mxu0 %v1621
    %4086 = vmatpush.msra.mxu0 %v1616
    %4087 = vmatpush.msra.mxu0 %v1611
    %4088 = vmatpush.msra.mxu0 %v1606
    %4089 = vmatpush.msra.mxu0 %v1601
    %4090 = vmatpush.msra.mxu0 %v1596
    %4091 = vmatpush.msra.mxu0 %v1591
    %4092 = vmatmul.f32.gmra.mxu0 %v3992
    %v4093 = vpop.f32.mrf.mxu0
    %v4094 = vadd.f32 0.0, %v4093
    %4095 = vdwg.mxu0
    %4096 = vmatpush.msra.mxu0 0.0
    %4097 = vmatpush.msra.mxu0 0.0
    %4098 = vmatpush.msra.mxu0 0.0
    %4099 = vmatpush.msra.mxu0 0.0
    %4100 = vmatpush.msra.mxu0 0.0
    %4101 = vmatpush.msra.mxu0 0.0
    %4102 = vmatpush.msra.mxu0 0.0
    %4103 = vmatpush.msra.mxu0 0.0
    %4104 = vmatpush.msra.mxu0 0.0
    %4105 = vmatpush.msra.mxu0 0.0
    %4106 = vmatpush.msra.mxu0 0.0
    %4107 = vmatpush.msra.mxu0 0.0
    %4108 = vmatpush.msra.mxu0 %v1686
    %4109 = vmatpush.msra.mxu0 %v1681
    %4110 = vmatpush.msra.mxu0 %v1676
    %4111 = vmatpush.msra.mxu0 %v1671
    %4112 = vmatmul.f32.gmra.mxu0 %v3994
    %v4113 = vpop.f32.mrf.mxu0
    %v4114 = vadd.f32 %v4094, %v4113
    %4115 = vdwg.mxu0
    %4116 = vmatpush.msra.mxu0 %v1667
    %4117 = vmatpush.msra.mxu0 %v1662
    %4118 = vmatpush.msra.mxu0 %v1657
    %4119 = vmatpush.msra.mxu0 %v1652
    %4120 = vmatpush.msra.mxu0 %v1647
    %4121 = vmatpush.msra.mxu0 %v1642
    %4122 = vmatpush.msra.mxu0 %v1637
    %4123 = vmatpush.msra.mxu0 %v1632
    %4124 = vmatpush.msra.mxu0 %v1627
    %4125 = vmatpush.msra.mxu0 %v1622
    %4126 = vmatpush.msra.mxu0 %v1617
    %4127 = vmatpush.msra.mxu0 %v1612
    %4128 = vmatpush.msra.mxu0 %v1607
    %4129 = vmatpush.msra.mxu0 %v1602
    %4130 = vmatpush.msra.mxu0 %v1597
    %4131 = vmatpush.msra.mxu0 %v1592
    %4132 = vmatmul.f32.gmra.mxu0 %v3992
    %v4133 = vpop.f32.mrf.mxu0
    %v4134 = vadd.f32 0.0, %v4133
    %4135 = vdwg.mxu0
    %4136 = vmatpush.msra.mxu0 0.0
    %4137 = vmatpush.msra.mxu0 0.0
    %4138 = vmatpush.msra.mxu0 0.0
    %4139 = vmatpush.msra.mxu0 0.0
    %4140 = vmatpush.msra.mxu0 0.0
    %4141 = vmatpush.msra.mxu0 0.0
    %4142 = vmatpush.msra.mxu0 0.0
    %4143 = vmatpush.msra.mxu0 0.0
    %4144 = vmatpush.msra.mxu0 0.0
    %4145 = vmatpush.msra.mxu0 0.0
    %4146 = vmatpush.msra.mxu0 0.0
    %4147 = vmatpush.msra.mxu0 0.0
    %4148 = vmatpush.msra.mxu0 %v1687
    %4149 = vmatpush.msra.mxu0 %v1682
    %4150 = vmatpush.msra.mxu0 %v1677
    %4151 = vmatpush.msra.mxu0 %v1672
    %4152 = vmatmul.f32.gmra.mxu0 %v3994
    %v4153 = vpop.f32.mrf.mxu0
    %v4154 = vadd.f32 %v4134, %v4153
    %4155 = vdwg.mxu0
    %4156 = vmatpush.msra.mxu0 %v1668
    %4157 = vmatpush.msra.mxu0 %v1663
    %4158 = vmatpush.msra.mxu0 %v1658
    %4159 = vmatpush.msra.mxu0 %v1653
    %4160 = vmatpush.msra.mxu0 %v1648
    %4161 = vmatpush.msra.mxu0 %v1643
    %4162 = vmatpush.msra.mxu0 %v1638
    %4163 = vmatpush.msra.mxu0 %v1633
    %4164 = vmatpush.msra.mxu0 %v1628
    %4165 = vmatpush.msra.mxu0 %v1623
    %4166 = vmatpush.msra.mxu0 %v1618
    %4167 = vmatpush.msra.mxu0 %v1613
    %4168 = vmatpush.msra.mxu0 %v1608
    %4169 = vmatpush.msra.mxu0 %v1603
    %4170 = vmatpush.msra.mxu0 %v1598
    %4171 = vmatpush.msra.mxu0 %v1593
    %4172 = vmatmul.f32.gmra.mxu0 %v3992
    %v4173 = vpop.f32.mrf.mxu0
    %v4174 = vadd.f32 0.0, %v4173
    %4175 = vdwg.mxu0
    %4176 = vmatpush.msra.mxu0 0.0
    %4177 = vmatpush.msra.mxu0 0.0
    %4178 = vmatpush.msra.mxu0 0.0
    %4179 = vmatpush.msra.mxu0 0.0
    %4180 = vmatpush.msra.mxu0 0.0
    %4181 = vmatpush.msra.mxu0 0.0
    %4182 = vmatpush.msra.mxu0 0.0
    %4183 = vmatpush.msra.mxu0 0.0
    %4184 = vmatpush.msra.mxu0 0.0
    %4185 = vmatpush.msra.mxu0 0.0
    %4186 = vmatpush.msra.mxu0 0.0
    %4187 = vmatpush.msra.mxu0 0.0
    %4188 = vmatpush.msra.mxu0 %v1688
    %4189 = vmatpush.msra.mxu0 %v1683
    %4190 = vmatpush.msra.mxu0 %v1678
    %4191 = vmatpush.msra.mxu0 %v1673
    %4192 = vmatmul.f32.gmra.mxu0 %v3994
    %v4193 = vpop.f32.mrf.mxu0
    %v4194 = vadd.f32 %v4174, %v4193
    %4195 = vdwg.mxu0
    %v4196 = vadd.f32 %v3981, %v4034
    %v4197 = vadd.f32 %v3982, %v4074
    %v4198 = vadd.f32 %v3983, %v4114
    %v4199 = vadd.f32 %v3984, %v4154
    %v4200 = vadd.f32 %v3985, %v4194
    %v4201 = vadd.f32 %v4196, %v1921
    %v4202 = vadd.f32 %v4197, %v1922
    %v4203 = vadd.f32 %v4198, %v1923
    %v4204 = vadd.f32 %v4199, %v1924
    %v4205 = vadd.f32 %v4200, %v1925
    %v4206 = vxor.u32 %v4201, 2147483648
    %v4207 = vxor.u32 %v4202, 2147483648
    %v4208 = vmul.f32 %v4206, 1.442695
    %v4209 = vpow.pop %v4208
    %v4210 = vmul.f32 %v4207, 1.442695
    %v4211 = vpow.pop %v4210
    %v4212 = vadd.f32 %v4209, 1.0
    %v4213 = vadd.f32 %v4211, 1.0
    %v4214 = vrcp.pop %v4212
    %v4215 = vmul.f32 %v4212, %v4214
    %v4216 = vsub.f32 1.0, %v4215
    %v4217 = vmul.f32 %v4214, %v4216
    %v4218 = vadd.f32 %v4214, %v4217
    %vm4219 = vweird.f32 %v4212
    %vm4220 = vweird.f32 %v4214
    %vm4221 = vmor %vm4219, %vm4220
    %v4222 = vsel %vm4221, %v4214, %v4218
    %v4223 = vand.u32 2147483647, %v4212
    %vm4224 = vcmp.eq.f32.partialorder %v4223, 8.507059e+37
    %v4225 = vand.u32 %v4212, 2147483648
    %v4226 = vor.u32 1.1754944e-38, %v4225
    %v4227 = vsel %vm4224, %v4226, %v4222
    %v4228 = vmul.f32 1.0, %v4227
    %v4229 = vrcp.pop %v4213
    %v4230 = vmul.f32 %v4213, %v4229
    %v4231 = vsub.f32 1.0, %v4230
    %v4232 = vmul.f32 %v4229, %v4231
    %v4233 = vadd.f32 %v4229, %v4232
    %vm4234 = vweird.f32 %v4213
    %vm4235 = vweird.f32 %v4229
    %vm4236 = vmor %vm4234, %vm4235
    %v4237 = vsel %vm4236, %v4229, %v4233
    %v4238 = vand.u32 2147483647, %v4213
    %vm4239 = vcmp.eq.f32.partialorder %v4238, 8.507059e+37
    %v4240 = vand.u32 %v4213, 2147483648
    %v4241 = vor.u32 1.1754944e-38, %v4240
    %v4242 = vsel %vm4239, %v4241, %v4237
    %v4243 = vmul.f32 1.0, %v4242
    %v4244 = vxor.u32 %v4203, 2147483648
    %v4245 = vmul.f32 %v4244, 1.442695
    %v4246 = vpow.pop %v4245
    %v4247 = vadd.f32 %v4246, 1.0
    %v4248 = vrcp.pop %v4247
    %v4249 = vmul.f32 %v4247, %v4248
    %v4250 = vsub.f32 1.0, %v4249
    %v4251 = vmul.f32 %v4248, %v4250
    %v4252 = vadd.f32 %v4248, %v4251
    %vm4253 = vweird.f32 %v4247
    %vm4254 = vweird.f32 %v4248
    %vm4255 = vmor %vm4253, %vm4254
    %v4256 = vsel %vm4255, %v4248, %v4252
    %v4257 = vand.u32 2147483647, %v4247
    %vm4258 = vcmp.eq.f32.partialorder %v4257, 8.507059e+37
    %v4259 = vand.u32 %v4247, 2147483648
    %v4260 = vor.u32 1.1754944e-38, %v4259
    %v4261 = vsel %vm4258, %v4260, %v4256
    %v4262 = vmul.f32 1.0, %v4261
    %v4263 = vtanh.pop %v4203
    %v4264 = vtanh.pop %v4204
    %v4265 = vxor.u32 %v4204, 2147483648
    %v4266 = vxor.u32 %v4205, 2147483648
    %v4267 = vmul.f32 %v4265, 1.442695
    %v4268 = vpow.pop %v4267
    %v4269 = vmul.f32 %v4266, 1.442695
    %v4270 = vpow.pop %v4269
    %v4271 = vadd.f32 %v4268, 1.0
    %v4272 = vadd.f32 %v4270, 1.0
    %v4273 = vrcp.pop %v4271
    %v4274 = vmul.f32 %v4271, %v4273
    %v4275 = vsub.f32 1.0, %v4274
    %v4276 = vmul.f32 %v4273, %v4275
    %v4277 = vadd.f32 %v4273, %v4276
    %vm4278 = vweird.f32 %v4271
    %vm4279 = vweird.f32 %v4273
    %vm4280 = vmor %vm4278, %vm4279
    %v4281 = vsel %vm4280, %v4273, %v4277
    %v4282 = vand.u32 2147483647, %v4271
    %vm4283 = vcmp.eq.f32.partialorder %v4282, 8.507059e+37
    %v4284 = vand.u32 %v4271, 2147483648
    %v4285 = vor.u32 1.1754944e-38, %v4284
    %v4286 = vsel %vm4283, %v4285, %v4281
    %v4287 = vmul.f32 1.0, %v4286
    %v4288 = vrcp.pop %v4272
    %v4289 = vmul.f32 %v4272, %v4288
    %v4290 = vsub.f32 1.0, %v4289
    %v4291 = vmul.f32 %v4288, %v4290
    %v4292 = vadd.f32 %v4288, %v4291
    %vm4293 = vweird.f32 %v4272
    %vm4294 = vweird.f32 %v4288
    %vm4295 = vmor %vm4293, %vm4294
    %v4296 = vsel %vm4295, %v4288, %v4292
    %v4297 = vand.u32 2147483647, %v4272
    %vm4298 = vcmp.eq.f32.partialorder %v4297, 8.507059e+37
    %v4299 = vand.u32 %v4272, 2147483648
    %v4300 = vor.u32 1.1754944e-38, %v4299
    %v4301 = vsel %vm4298, %v4300, %v4296
    %v4302 = vmul.f32 1.0, %v4301
    %v4303 = vmul.f32 %v4243, %v3946
    %v4304 = vmul.f32 %v4262, %v3947
    %4307 = vrot.lane.b32.xlu0 %v4263, 64
    %v4308 = vpop.permute.xlu0 %4307
    %4309 = vrot.lane.b32.xlu0 %v4264, 64
    %v4310 = vpop.permute.xlu0 %4309
    %v4311 = vsel %vm2041, %v4308, %v4310
    %v4314 = vmul.f32 %v4228, %v4311
    %v4315 = vmul.f32 %v4243, %v4310
    %4318 = vrot.lane.b32.xlu0 %v4314, 32
    %v4319 = vpop.permute.xlu0 %4318
    %4320 = vrot.lane.b32.xlu0 %v4315, 32
    %v4321 = vpop.permute.xlu0 %4320
    %v4322 = vsel %vm1711, %v4319, %v4321
    %v4325 = vadd.f32 %v4303, %v4319
    %v4326 = vadd.f32 %v4304, %v4322
    %v4327 = vtanh.pop %v4325
    %v4328 = vtanh.pop %v4326
    %4331 = vrot.lane.b32.xlu0 %v4327, 64
    %v4332 = vpop.permute.xlu0 %4331
    %4333 = vrot.lane.b32.xlu0 %v4328, 64
    %v4334 = vpop.permute.xlu0 %4333
    %v4335 = vsel %vm2041, %v4332, %v4334
    %v4338 = vmul.f32 %v4287, %v4332
    %v4339 = vmul.f32 %v4302, %v4335
    %v4340 = vrot.slane %v817, 7
    %v4341 = vrot.slane %v837, 7
    %v4342 = vrot.slane %v857, 7
    %v4343 = vrot.slane %v877, 7
    %v4344 = vrot.slane %v897, 7
    %v4350 = vrot.slane %v1507, 6
    %v4351 = vrot.slane %v1527, 6
    %v4352 = vrot.slane %v1547, 6
    %v4353 = vrot.slane %v1567, 6
    %v4354 = vrot.slane %v1587, 6
    %v4360 = vsel %vm1705, %v4340, %v4350
    %v4361 = vsel %vm1705, %v4341, %v4351
    %v4362 = vsel %vm1705, %v4342, %v4352
    %v4363 = vsel %vm1705, %v4343, %v4353
    %v4364 = vsel %vm1705, %v4344, %v4354
    %4367 = vrot.lane.b32.xlu0 %v4338, 32
    %v4368 = vpop.permute.xlu0 %4367
    %4369 = vrot.lane.b32.xlu0 %v4339, 32
    %v4370 = vpop.permute.xlu0 %4369
    %v4371 = vsel %vm1711, %v4368, %v4370
    %v4373 = vsel %vm1711, %v4370, 0
    %4375 = vmatpush.msra.mxu0 %v1664
    %4376 = vmatpush.msra.mxu0 %v1659
    %4377 = vmatpush.msra.mxu0 %v1654
    %4378 = vmatpush.msra.mxu0 %v1649
    %4379 = vmatpush.msra.mxu0 %v1644
    %4380 = vmatpush.msra.mxu0 %v1639
    %4381 = vmatpush.msra.mxu0 %v1634
    %4382 = vmatpush.msra.mxu0 %v1629
    %4383 = vmatpush.msra.mxu0 %v1624
    %4384 = vmatpush.msra.mxu0 %v1619
    %4385 = vmatpush.msra.mxu0 %v1614
    %4386 = vmatpush.msra.mxu0 %v1609
    %4387 = vmatpush.msra.mxu0 %v1604
    %4388 = vmatpush.msra.mxu0 %v1599
    %4389 = vmatpush.msra.mxu0 %v1594
    %4390 = vmatpush.msra.mxu0 %v1589
    %4391 = vmatmul.f32.gmra.mxu0 %v4371
    %v4392 = vpop.f32.mrf.mxu0
    %v4393 = vadd.f32 0.0, %v4392
    %4394 = vdwg.mxu0
    %4395 = vmatpush.msra.mxu0 0.0
    %4396 = vmatpush.msra.mxu0 0.0
    %4397 = vmatpush.msra.mxu0 0.0
    %4398 = vmatpush.msra.mxu0 0.0
    %4399 = vmatpush.msra.mxu0 0.0
    %4400 = vmatpush.msra.mxu0 0.0
    %4401 = vmatpush.msra.mxu0 0.0
    %4402 = vmatpush.msra.mxu0 0.0
    %4403 = vmatpush.msra.mxu0 0.0
    %4404 = vmatpush.msra.mxu0 0.0
    %4405 = vmatpush.msra.mxu0 0.0
    %4406 = vmatpush.msra.mxu0 0.0
    %4407 = vmatpush.msra.mxu0 %v1684
    %4408 = vmatpush.msra.mxu0 %v1679
    %4409 = vmatpush.msra.mxu0 %v1674
    %4410 = vmatpush.msra.mxu0 %v1669
    %4411 = vmatmul.f32.gmra.mxu0 %v4373
    %v4412 = vpop.f32.mrf.mxu0
    %v4413 = vadd.f32 %v4393, %v4412
    %4414 = vdwg.mxu0
    %4415 = vmatpush.msra.mxu0 %v1665
    %4416 = vmatpush.msra.mxu0 %v1660
    %4417 = vmatpush.msra.mxu0 %v1655
    %4418 = vmatpush.msra.mxu0 %v1650
    %4419 = vmatpush.msra.mxu0 %v1645
    %4420 = vmatpush.msra.mxu0 %v1640
    %4421 = vmatpush.msra.mxu0 %v1635
    %4422 = vmatpush.msra.mxu0 %v1630
    %4423 = vmatpush.msra.mxu0 %v1625
    %4424 = vmatpush.msra.mxu0 %v1620
    %4425 = vmatpush.msra.mxu0 %v1615
    %4426 = vmatpush.msra.mxu0 %v1610
    %4427 = vmatpush.msra.mxu0 %v1605
    %4428 = vmatpush.msra.mxu0 %v1600
    %4429 = vmatpush.msra.mxu0 %v1595
    %4430 = vmatpush.msra.mxu0 %v1590
    %4431 = vmatmul.f32.gmra.mxu0 %v4371
    %v4432 = vpop.f32.mrf.mxu0
    %v4433 = vadd.f32 0.0, %v4432
    %4434 = vdwg.mxu0
    %4435 = vmatpush.msra.mxu0 0.0
    %4436 = vmatpush.msra.mxu0 0.0
    %4437 = vmatpush.msra.mxu0 0.0
    %4438 = vmatpush.msra.mxu0 0.0
    %4439 = vmatpush.msra.mxu0 0.0
    %4440 = vmatpush.msra.mxu0 0.0
    %4441 = vmatpush.msra.mxu0 0.0
    %4442 = vmatpush.msra.mxu0 0.0
    %4443 = vmatpush.msra.mxu0 0.0
    %4444 = vmatpush.msra.mxu0 0.0
    %4445 = vmatpush.msra.mxu0 0.0
    %4446 = vmatpush.msra.mxu0 0.0
    %4447 = vmatpush.msra.mxu0 %v1685
    %4448 = vmatpush.msra.mxu0 %v1680
    %4449 = vmatpush.msra.mxu0 %v1675
    %4450 = vmatpush.msra.mxu0 %v1670
    %4451 = vmatmul.f32.gmra.mxu0 %v4373
    %v4452 = vpop.f32.mrf.mxu0
    %v4453 = vadd.f32 %v4433, %v4452
    %4454 = vdwg.mxu0
    %4455 = vmatpush.msra.mxu0 %v1666
    %4456 = vmatpush.msra.mxu0 %v1661
    %4457 = vmatpush.msra.mxu0 %v1656
    %4458 = vmatpush.msra.mxu0 %v1651
    %4459 = vmatpush.msra.mxu0 %v1646
    %4460 = vmatpush.msra.mxu0 %v1641
    %4461 = vmatpush.msra.mxu0 %v1636
    %4462 = vmatpush.msra.mxu0 %v1631
    %4463 = vmatpush.msra.mxu0 %v1626
    %4464 = vmatpush.msra.mxu0 %v1621
    %4465 = vmatpush.msra.mxu0 %v1616
    %4466 = vmatpush.msra.mxu0 %v1611
    %4467 = vmatpush.msra.mxu0 %v1606
    %4468 = vmatpush.msra.mxu0 %v1601
    %4469 = vmatpush.msra.mxu0 %v1596
    %4470 = vmatpush.msra.mxu0 %v1591
    %4471 = vmatmul.f32.gmra.mxu0 %v4371
    %v4472 = vpop.f32.mrf.mxu0
    %v4473 = vadd.f32 0.0, %v4472
    %4474 = vdwg.mxu0
    %4475 = vmatpush.msra.mxu0 0.0
    %4476 = vmatpush.msra.mxu0 0.0
    %4477 = vmatpush.msra.mxu0 0.0
    %4478 = vmatpush.msra.mxu0 0.0
    %4479 = vmatpush.msra.mxu0 0.0
    %4480 = vmatpush.msra.mxu0 0.0
    %4481 = vmatpush.msra.mxu0 0.0
    %4482 = vmatpush.msra.mxu0 0.0
    %4483 = vmatpush.msra.mxu0 0.0
    %4484 = vmatpush.msra.mxu0 0.0
    %4485 = vmatpush.msra.mxu0 0.0
    %4486 = vmatpush.msra.mxu0 0.0
    %4487 = vmatpush.msra.mxu0 %v1686
    %4488 = vmatpush.msra.mxu0 %v1681
    %4489 = vmatpush.msra.mxu0 %v1676
    %4490 = vmatpush.msra.mxu0 %v1671
    %4491 = vmatmul.f32.gmra.mxu0 %v4373
    %v4492 = vpop.f32.mrf.mxu0
    %v4493 = vadd.f32 %v4473, %v4492
    %4494 = vdwg.mxu0
    %4495 = vmatpush.msra.mxu0 %v1667
    %4496 = vmatpush.msra.mxu0 %v1662
    %4497 = vmatpush.msra.mxu0 %v1657
    %4498 = vmatpush.msra.mxu0 %v1652
    %4499 = vmatpush.msra.mxu0 %v1647
    %4500 = vmatpush.msra.mxu0 %v1642
    %4501 = vmatpush.msra.mxu0 %v1637
    %4502 = vmatpush.msra.mxu0 %v1632
    %4503 = vmatpush.msra.mxu0 %v1627
    %4504 = vmatpush.msra.mxu0 %v1622
    %4505 = vmatpush.msra.mxu0 %v1617
    %4506 = vmatpush.msra.mxu0 %v1612
    %4507 = vmatpush.msra.mxu0 %v1607
    %4508 = vmatpush.msra.mxu0 %v1602
    %4509 = vmatpush.msra.mxu0 %v1597
    %4510 = vmatpush.msra.mxu0 %v1592
    %4511 = vmatmul.f32.gmra.mxu0 %v4371
    %v4512 = vpop.f32.mrf.mxu0
    %v4513 = vadd.f32 0.0, %v4512
    %4514 = vdwg.mxu0
    %4515 = vmatpush.msra.mxu0 0.0
    %4516 = vmatpush.msra.mxu0 0.0
    %4517 = vmatpush.msra.mxu0 0.0
    %4518 = vmatpush.msra.mxu0 0.0
    %4519 = vmatpush.msra.mxu0 0.0
    %4520 = vmatpush.msra.mxu0 0.0
    %4521 = vmatpush.msra.mxu0 0.0
    %4522 = vmatpush.msra.mxu0 0.0
    %4523 = vmatpush.msra.mxu0 0.0
    %4524 = vmatpush.msra.mxu0 0.0
    %4525 = vmatpush.msra.mxu0 0.0
    %4526 = vmatpush.msra.mxu0 0.0
    %4527 = vmatpush.msra.mxu0 %v1687
    %4528 = vmatpush.msra.mxu0 %v1682
    %4529 = vmatpush.msra.mxu0 %v1677
    %4530 = vmatpush.msra.mxu0 %v1672
    %4531 = vmatmul.f32.gmra.mxu0 %v4373
    %v4532 = vpop.f32.mrf.mxu0
    %v4533 = vadd.f32 %v4513, %v4532
    %4534 = vdwg.mxu0
    %4535 = vmatpush.msra.mxu0 %v1668
    %4536 = vmatpush.msra.mxu0 %v1663
    %4537 = vmatpush.msra.mxu0 %v1658
    %4538 = vmatpush.msra.mxu0 %v1653
    %4539 = vmatpush.msra.mxu0 %v1648
    %4540 = vmatpush.msra.mxu0 %v1643
    %4541 = vmatpush.msra.mxu0 %v1638
    %4542 = vmatpush.msra.mxu0 %v1633
    %4543 = vmatpush.msra.mxu0 %v1628
    %4544 = vmatpush.msra.mxu0 %v1623
    %4545 = vmatpush.msra.mxu0 %v1618
    %4546 = vmatpush.msra.mxu0 %v1613
    %4547 = vmatpush.msra.mxu0 %v1608
    %4548 = vmatpush.msra.mxu0 %v1603
    %4549 = vmatpush.msra.mxu0 %v1598
    %4550 = vmatpush.msra.mxu0 %v1593
    %4551 = vmatmul.f32.gmra.mxu0 %v4371
    %v4552 = vpop.f32.mrf.mxu0
    %v4553 = vadd.f32 0.0, %v4552
    %4554 = vdwg.mxu0
    %4555 = vmatpush.msra.mxu0 0.0
    %4556 = vmatpush.msra.mxu0 0.0
    %4557 = vmatpush.msra.mxu0 0.0
    %4558 = vmatpush.msra.mxu0 0.0
    %4559 = vmatpush.msra.mxu0 0.0
    %4560 = vmatpush.msra.mxu0 0.0
    %4561 = vmatpush.msra.mxu0 0.0
    %4562 = vmatpush.msra.mxu0 0.0
    %4563 = vmatpush.msra.mxu0 0.0
    %4564 = vmatpush.msra.mxu0 0.0
    %4565 = vmatpush.msra.mxu0 0.0
    %4566 = vmatpush.msra.mxu0 0.0
    %4567 = vmatpush.msra.mxu0 %v1688
    %4568 = vmatpush.msra.mxu0 %v1683
    %4569 = vmatpush.msra.mxu0 %v1678
    %4570 = vmatpush.msra.mxu0 %v1673
    %4571 = vmatmul.f32.gmra.mxu0 %v4373
    %v4572 = vpop.f32.mrf.mxu0
    %v4573 = vadd.f32 %v4553, %v4572
    %4574 = vdwg.mxu0
    %v4575 = vadd.f32 %v4360, %v4413
    %v4576 = vadd.f32 %v4361, %v4453
    %v4577 = vadd.f32 %v4362, %v4493
    %v4578 = vadd.f32 %v4363, %v4533
    %v4579 = vadd.f32 %v4364, %v4573
    %v4580 = vadd.f32 %v4575, %v1921
    %v4581 = vadd.f32 %v4576, %v1922
    %v4582 = vadd.f32 %v4577, %v1923
    %v4583 = vadd.f32 %v4578, %v1924
    %v4584 = vadd.f32 %v4579, %v1925
    %v4585 = vxor.u32 %v4580, 2147483648
    %v4586 = vxor.u32 %v4581, 2147483648
    %v4587 = vmul.f32 %v4585, 1.442695
    %v4588 = vpow.pop %v4587
    %v4589 = vmul.f32 %v4586, 1.442695
    %v4590 = vpow.pop %v4589
    %v4591 = vadd.f32 %v4588, 1.0
    %v4592 = vadd.f32 %v4590, 1.0
    %v4593 = vrcp.pop %v4591
    %v4594 = vmul.f32 %v4591, %v4593
    %v4595 = vsub.f32 1.0, %v4594
    %v4596 = vmul.f32 %v4593, %v4595
    %v4597 = vadd.f32 %v4593, %v4596
    %vm4598 = vweird.f32 %v4591
    %vm4599 = vweird.f32 %v4593
    %vm4600 = vmor %vm4598, %vm4599
    %v4601 = vsel %vm4600, %v4593, %v4597
    %v4602 = vand.u32 2147483647, %v4591
    %vm4603 = vcmp.eq.f32.partialorder %v4602, 8.507059e+37
    %v4604 = vand.u32 %v4591, 2147483648
    %v4605 = vor.u32 1.1754944e-38, %v4604
    %v4606 = vsel %vm4603, %v4605, %v4601
    %v4607 = vmul.f32 1.0, %v4606
    %v4608 = vrcp.pop %v4592
    %v4609 = vmul.f32 %v4592, %v4608
    %v4610 = vsub.f32 1.0, %v4609
    %v4611 = vmul.f32 %v4608, %v4610
    %v4612 = vadd.f32 %v4608, %v4611
    %vm4613 = vweird.f32 %v4592
    %vm4614 = vweird.f32 %v4608
    %vm4615 = vmor %vm4613, %vm4614
    %v4616 = vsel %vm4615, %v4608, %v4612
    %v4617 = vand.u32 2147483647, %v4592
    %vm4618 = vcmp.eq.f32.partialorder %v4617, 8.507059e+37
    %v4619 = vand.u32 %v4592, 2147483648
    %v4620 = vor.u32 1.1754944e-38, %v4619
    %v4621 = vsel %vm4618, %v4620, %v4616
    %v4622 = vmul.f32 1.0, %v4621
    %v4623 = vxor.u32 %v4582, 2147483648
    %v4624 = vmul.f32 %v4623, 1.442695
    %v4625 = vpow.pop %v4624
    %v4626 = vadd.f32 %v4625, 1.0
    %v4627 = vrcp.pop %v4626
    %v4628 = vmul.f32 %v4626, %v4627
    %v4629 = vsub.f32 1.0, %v4628
    %v4630 = vmul.f32 %v4627, %v4629
    %v4631 = vadd.f32 %v4627, %v4630
    %vm4632 = vweird.f32 %v4626
    %vm4633 = vweird.f32 %v4627
    %vm4634 = vmor %vm4632, %vm4633
    %v4635 = vsel %vm4634, %v4627, %v4631
    %v4636 = vand.u32 2147483647, %v4626
    %vm4637 = vcmp.eq.f32.partialorder %v4636, 8.507059e+37
    %v4638 = vand.u32 %v4626, 2147483648
    %v4639 = vor.u32 1.1754944e-38, %v4638
    %v4640 = vsel %vm4637, %v4639, %v4635
    %v4641 = vmul.f32 1.0, %v4640
    %v4642 = vtanh.pop %v4582
    %v4643 = vtanh.pop %v4583
    %v4644 = vxor.u32 %v4583, 2147483648
    %v4645 = vxor.u32 %v4584, 2147483648
    %v4646 = vmul.f32 %v4644, 1.442695
    %v4647 = vpow.pop %v4646
    %v4648 = vmul.f32 %v4645, 1.442695
    %v4649 = vpow.pop %v4648
    %v4650 = vadd.f32 %v4647, 1.0
    %v4651 = vadd.f32 %v4649, 1.0
    %v4652 = vrcp.pop %v4650
    %v4653 = vmul.f32 %v4650, %v4652
    %v4654 = vsub.f32 1.0, %v4653
    %v4655 = vmul.f32 %v4652, %v4654
    %v4656 = vadd.f32 %v4652, %v4655
    %vm4657 = vweird.f32 %v4650
    %vm4658 = vweird.f32 %v4652
    %vm4659 = vmor %vm4657, %vm4658
    %v4660 = vsel %vm4659, %v4652, %v4656
    %v4661 = vand.u32 2147483647, %v4650
    %vm4662 = vcmp.eq.f32.partialorder %v4661, 8.507059e+37
    %v4663 = vand.u32 %v4650, 2147483648
    %v4664 = vor.u32 1.1754944e-38, %v4663
    %v4665 = vsel %vm4662, %v4664, %v4660
    %v4666 = vmul.f32 1.0, %v4665
    %v4667 = vrcp.pop %v4651
    %v4668 = vmul.f32 %v4651, %v4667
    %v4669 = vsub.f32 1.0, %v4668
    %v4670 = vmul.f32 %v4667, %v4669
    %v4671 = vadd.f32 %v4667, %v4670
    %vm4672 = vweird.f32 %v4651
    %vm4673 = vweird.f32 %v4667
    %vm4674 = vmor %vm4672, %vm4673
    %v4675 = vsel %vm4674, %v4667, %v4671
    %v4676 = vand.u32 2147483647, %v4651
    %vm4677 = vcmp.eq.f32.partialorder %v4676, 8.507059e+37
    %v4678 = vand.u32 %v4651, 2147483648
    %v4679 = vor.u32 1.1754944e-38, %v4678
    %v4680 = vsel %vm4677, %v4679, %v4675
    %v4681 = vmul.f32 1.0, %v4680
    %v4682 = vmul.f32 %v4622, %v4325
    %v4683 = vmul.f32 %v4641, %v4326
    %4686 = vrot.lane.b32.xlu0 %v4642, 64
    %v4687 = vpop.permute.xlu0 %4686
    %4688 = vrot.lane.b32.xlu0 %v4643, 64
    %v4689 = vpop.permute.xlu0 %4688
    %v4690 = vsel %vm2041, %v4687, %v4689
    %v4693 = vmul.f32 %v4607, %v4690
    %v4694 = vmul.f32 %v4622, %v4689
    %4697 = vrot.lane.b32.xlu0 %v4693, 32
    %v4698 = vpop.permute.xlu0 %4697
    %4699 = vrot.lane.b32.xlu0 %v4694, 32
    %v4700 = vpop.permute.xlu0 %4699
    %v4701 = vsel %vm1711, %v4698, %v4700
    %v4704 = vadd.f32 %v4682, %v4698
    %v4705 = vadd.f32 %v4683, %v4701
    %v4706 = vtanh.pop %v4704
    %v4707 = vtanh.pop %v4705
    %4710 = vrot.lane.b32.xlu0 %v4706, 64
    %v4711 = vpop.permute.xlu0 %4710
    %4712 = vrot.lane.b32.xlu0 %v4707, 64
    %v4713 = vpop.permute.xlu0 %4712
    %v4714 = vsel %vm2041, %v4711, %v4713
    %v4717 = vmul.f32 %v4666, %v4711
    %v4718 = vmul.f32 %v4681, %v4714
    %v4719 = vld [vmem:[%s27] sm:$0xff]
    %v4720 = vld [vmem:[%s27 + $0x8] sm:$0xff]
    %v4721 = vld [vmem:[%s27 + $0x10] sm:$0xff]
    %v4722 = vld [vmem:[%s27 + $0x18] sm:$0xff]
    %v4723 = vld [vmem:[%s27 + $0x20] sm:$0xff]
    %v4724 = vld [vmem:[%s27 + $0x28] sm:$0xff]
    %v4725 = vld [vmem:[%s27 + $0x30] sm:$0xff]
    %v4726 = vld [vmem:[%s27 + $0x38] sm:$0xff]
    %v4727 = vld [vmem:[%s27 + $0x40] sm:$0xff]
    %v4728 = vld [vmem:[%s27 + $0x48] sm:$0xff]
    %v4729 = vld [vmem:[%s27 + $0x50] sm:$0xff]
    %v4730 = vld [vmem:[%s27 + $0x58] sm:$0xff]
    %v4731 = vld [vmem:[%s27 + $0x60] sm:$0xff]
    %v4732 = vld [vmem:[%s27 + $0x68] sm:$0xff]
    %v4733 = vld [vmem:[%s27 + $0x70] sm:$0xff]
    %v4734 = vld [vmem:[%s27 + $0x78] sm:$0xff]
    %v4735 = vld [vmem:[%s27 + $0x80] sm:$0xff]
    %v4736 = vld [vmem:[%s27 + $0x88] sm:$0xff]
    %v4737 = vld [vmem:[%s27 + $0x90] sm:$0xff]
    %v4738 = vld [vmem:[%s27 + $0x98] sm:$0xff]
    %v4739 = vld [vmem:[%s29] sm:$0x1]
    %v4741 = vperm.slane %v4739, 0
    %4745 = vrot.lane.b32.xlu0 %v4717, 32
    %v4746 = vpop.permute.xlu0 %4745
    %4747 = vrot.lane.b32.xlu0 %v4718, 32
    %v4748 = vpop.permute.xlu0 %4747
    %v4749 = vsel %vm1711, %v4746, %v4748
    %v4751 = vsel %vm1711, %v4748, 0
    %4753 = vmatpush.msra.mxu0 %v4734
    %4754 = vmatpush.msra.mxu0 %v4733
    %4755 = vmatpush.msra.mxu0 %v4732
    %4756 = vmatpush.msra.mxu0 %v4731
    %4757 = vmatpush.msra.mxu0 %v4730
    %4758 = vmatpush.msra.mxu0 %v4729
    %4759 = vmatpush.msra.mxu0 %v4728
    %4760 = vmatpush.msra.mxu0 %v4727
    %4761 = vmatpush.msra.mxu0 %v4726
    %4762 = vmatpush.msra.mxu0 %v4725
    %4763 = vmatpush.msra.mxu0 %v4724
    %4764 = vmatpush.msra.mxu0 %v4723
    %4765 = vmatpush.msra.mxu0 %v4722
    %4766 = vmatpush.msra.mxu0 %v4721
    %4767 = vmatpush.msra.mxu0 %v4720
    %4768 = vmatpush.msra.mxu0 %v4719
    %4769 = vmatmul.f32.gmra.mxu0 %v4749
    %v4770 = vpop.f32.mrf.mxu0
    %v4771 = vadd.f32 %v4741, %v4770
    %4772 = vdwg.mxu0
    %4773 = vmatpush.msra.mxu0 0.0
    %4774 = vmatpush.msra.mxu0 0.0
    %4775 = vmatpush.msra.mxu0 0.0
    %4776 = vmatpush.msra.mxu0 0.0
    %4777 = vmatpush.msra.mxu0 0.0
    %4778 = vmatpush.msra.mxu0 0.0
    %4779 = vmatpush.msra.mxu0 0.0
    %4780 = vmatpush.msra.mxu0 0.0
    %4781 = vmatpush.msra.mxu0 0.0
    %4782 = vmatpush.msra.mxu0 0.0
    %4783 = vmatpush.msra.mxu0 0.0
    %4784 = vmatpush.msra.mxu0 0.0
    %4785 = vmatpush.msra.mxu0 %v4738
    %4786 = vmatpush.msra.mxu0 %v4737
    %4787 = vmatpush.msra.mxu0 %v4736
    %4788 = vmatpush.msra.mxu0 %v4735
    %4789 = vmatmul.f32.gmra.mxu0 %v4751
    %v4790 = vpop.f32.mrf.mxu0
    %v4791 = vadd.f32 %v4771, %v4790
    %4792 = vdwg.mxu0
    %v4793 = vtanh.pop %v4791
    %v4794 = vld [vmem:[%s31] sm:$0xff]
    %v4795 = vld [vmem:[%s31 + $0x8] sm:$0xff]
    %v4796 = vld [vmem:[%s31 + $0x10] sm:$0xff]
    %v4797 = vld [vmem:[%s31 + $0x18] sm:$0xff]
    %v4798 = vld [vmem:[%s31 + $0x20] sm:$0xff]
    %v4799 = vld [vmem:[%s31 + $0x28] sm:$0xff]
    %v4800 = vld [vmem:[%s31 + $0x30] sm:$0xff]
    %v4801 = vld [vmem:[%s31 + $0x38] sm:$0xff]
    %v4802 = vld [vmem:[%s31 + $0x40] sm:$0xff]
    %v4803 = vld [vmem:[%s31 + $0x48] sm:$0xff]
    %v4804 = vld [vmem:[%s31 + $0x50] sm:$0xff]
    %v4805 = vld [vmem:[%s31 + $0x58] sm:$0xff]
    %v4806 = vld [vmem:[%s31 + $0x60] sm:$0xff]
    %v4807 = vld [vmem:[%s31 + $0x68] sm:$0xff]
    %v4808 = vld [vmem:[%s31 + $0x70] sm:$0xff]
    %v4809 = vld [vmem:[%s31 + $0x78] sm:$0xff]
    %v4810 = vld [vmem:[%s33] sm:$0x1]
    %v4812 = vperm.slane %v4810, 0
    %4814 = vmatpush.msra.mxu0 %v4809
    %4815 = vmatpush.msra.mxu0 %v4808
    %4816 = vmatpush.msra.mxu0 %v4807
    %4817 = vmatpush.msra.mxu0 %v4806
    %4818 = vmatpush.msra.mxu0 %v4805
    %4819 = vmatpush.msra.mxu0 %v4804
    %4820 = vmatpush.msra.mxu0 %v4803
    %4821 = vmatpush.msra.mxu0 %v4802
    %4822 = vmatpush.msra.mxu0 %v4801
    %4823 = vmatpush.msra.mxu0 %v4800
    %4824 = vmatpush.msra.mxu0 %v4799
    %4825 = vmatpush.msra.mxu0 %v4798
    %4826 = vmatpush.msra.mxu0 %v4797
    %4827 = vmatpush.msra.mxu0 %v4796
    %4828 = vmatpush.msra.mxu0 %v4795
    %4829 = vmatpush.msra.mxu0 %v4794
    %4830 = vmatmul.f32.gmra.mxu0 %v4793
    %v4831 = vpop.f32.mrf.mxu0
    %v4832 = vadd.f32 %v4812, %v4831
    %4833 = vdwg.mxu0
    %v4834 = vld [vmem:[%s35] sm:$0xff]
    %v4835 = vld [vmem:[%s35 + $0x8] sm:$0xff]
    %v4836 = vld [vmem:[%s35 + $0x10] sm:$0xff]
    %v4837 = vld [vmem:[%s35 + $0x18] sm:$0xff]
    %v4838 = vld [vmem:[%s35 + $0x20] sm:$0xff]
    %v4839 = vld [vmem:[%s35 + $0x28] sm:$0xff]
    %v4840 = vld [vmem:[%s35 + $0x30] sm:$0xff]
    %v4841 = vld [vmem:[%s35 + $0x38] sm:$0xff]
    %v4842 = vld [vmem:[%s35 + $0x40] sm:$0xff]
    %v4843 = vld [vmem:[%s35 + $0x48] sm:$0xff]
    %v4844 = vld [vmem:[%s35 + $0x50] sm:$0xff]
    %v4845 = vld [vmem:[%s35 + $0x58] sm:$0xff]
    %v4846 = vld [vmem:[%s35 + $0x60] sm:$0xff]
    %v4847 = vld [vmem:[%s35 + $0x68] sm:$0xff]
    %v4848 = vld [vmem:[%s35 + $0x70] sm:$0xff]
    %v4849 = vld [vmem:[%s35 + $0x78] sm:$0xff]
    %v4850 = vld [vmem:[%s37] sm:$0x1]
    %v4852 = vperm.slane %v4850, 0
    %4854 = vmatpush.msra.mxu0 %v4849
    %4855 = vmatpush.msra.mxu0 %v4848
    %4856 = vmatpush.msra.mxu0 %v4847
    %4857 = vmatpush.msra.mxu0 %v4846
    %4858 = vmatpush.msra.mxu0 %v4845
    %4859 = vmatpush.msra.mxu0 %v4844
    %4860 = vmatpush.msra.mxu0 %v4843
    %4861 = vmatpush.msra.mxu0 %v4842
    %4862 = vmatpush.msra.mxu0 %v4841
    %4863 = vmatpush.msra.mxu0 %v4840
    %4864 = vmatpush.msra.mxu0 %v4839
    %4865 = vmatpush.msra.mxu0 %v4838
    %4866 = vmatpush.msra.mxu0 %v4837
    %4867 = vmatpush.msra.mxu0 %v4836
    %4868 = vmatpush.msra.mxu0 %v4835
    %4869 = vmatpush.msra.mxu0 %v4834
    %4870 = vmatmul.f32.gmra.mxu0 %v4793
    %v4871 = vpop.f32.mrf.mxu0
    %v4872 = vadd.f32 %v4852, %v4871
    %4873 = vdwg.mxu0
    %v4874 = vmul.f32 %v4872, 0.5
    %v4875 = vmul.f32 %v4874, 1.442695
    %v4876 = vpow.pop %v4875
    %v4877 = vld [vmem:[%s3] sm:$0x3]
    %v4878 = vmul.f32 %v4876, %v4877
    %v4879 = vadd.f32 %v4832, %v4878
    %vm4880 = vcmask 123904
    %4881 = vst.msk [vmem:[#allocation2] sm:$0x3] %vm4880, %v4832
    %4882 = vst.msk [vmem:[#allocation4] sm:$0x3] %vm4880, %v4872
    %v4883 = vld [vmem:[%s39] sm:$0xff]
    %v4884 = vld [vmem:[%s39 + $0x8] sm:$0xff]
    %v4885 = vld [vmem:[%s39 + $0x10] sm:$0xff]
    %v4886 = vld [vmem:[%s39 + $0x18] sm:$0xff]
    %v4887 = vld [vmem:[%s39 + $0x20] sm:$0xff]
    %v4888 = vld [vmem:[%s39 + $0x28] sm:$0xff]
    %v4889 = vld [vmem:[%s39 + $0x30] sm:$0xff]
    %v4890 = vld [vmem:[%s39 + $0x38] sm:$0xff]
    %v4891 = vld [vmem:[%s39 + $0x40] sm:$0xff]
    %v4892 = vld [vmem:[%s39 + $0x48] sm:$0xff]
    %v4893 = vld [vmem:[%s39 + $0x50] sm:$0xff]
    %v4894 = vld [vmem:[%s39 + $0x58] sm:$0xff]
    %v4895 = vld [vmem:[%s39 + $0x60] sm:$0xff]
    %v4896 = vld [vmem:[%s39 + $0x68] sm:$0xff]
    %v4897 = vld [vmem:[%s39 + $0x70] sm:$0xff]
    %v4898 = vld [vmem:[%s39 + $0x78] sm:$0xff]
    %v4899 = vld [vmem:[%s41] sm:$0xff]
    %v4901 = vperm.slane %v4899, 0
    %v4902 = vperm.slane %v4899, 1
    %v4903 = vperm.slane %v4899, 2
    %v4904 = vperm.slane %v4899, 3
    %v4905 = vperm.slane %v4899, 4
    %v4906 = vperm.slane %v4899, 5
    %v4907 = vperm.slane %v4899, 6
    %v4908 = vperm.slane %v4899, 7
    %v4918 = vsel %vm195, %v4879, 0
    %4920 = vmatpush.msra.mxu0 0.0
    %4921 = vmatpush.msra.mxu0 0.0
    %4922 = vmatpush.msra.mxu0 0.0
    %4923 = vmatpush.msra.mxu0 0.0
    %4924 = vmatpush.msra.mxu0 0.0
    %4925 = vmatpush.msra.mxu0 0.0
    %4926 = vmatpush.msra.mxu0 0.0
    %4927 = vmatpush.msra.mxu0 0.0
    %4928 = vmatpush.msra.mxu0 0.0
    %4929 = vmatpush.msra.mxu0 0.0
    %4930 = vmatpush.msra.mxu0 0.0
    %4931 = vmatpush.msra.mxu0 0.0
    %4932 = vmatpush.msra.mxu0 0.0
    %4933 = vmatpush.msra.mxu0 0.0
    %4934 = vmatpush.msra.mxu0 %v4891
    %4935 = vmatpush.msra.mxu0 %v4883
    %4936 = vmatmul.f32.gmra.mxu0 %v4918
    %v4937 = vpop.f32.mrf.mxu0
    %v4938 = vadd.f32 %v4901, %v4937
    %4939 = vdwg.mxu0
    %4940 = vmatpush.msra.mxu0 0.0
    %4941 = vmatpush.msra.mxu0 0.0
    %4942 = vmatpush.msra.mxu0 0.0
    %4943 = vmatpush.msra.mxu0 0.0
    %4944 = vmatpush.msra.mxu0 0.0
    %4945 = vmatpush.msra.mxu0 0.0
    %4946 = vmatpush.msra.mxu0 0.0
    %4947 = vmatpush.msra.mxu0 0.0
    %4948 = vmatpush.msra.mxu0 0.0
    %4949 = vmatpush.msra.mxu0 0.0
    %4950 = vmatpush.msra.mxu0 0.0
    %4951 = vmatpush.msra.mxu0 0.0
    %4952 = vmatpush.msra.mxu0 0.0
    %4953 = vmatpush.msra.mxu0 0.0
    %4954 = vmatpush.msra.mxu0 %v4892
    %4955 = vmatpush.msra.mxu0 %v4884
    %4956 = vmatmul.f32.gmra.mxu0 %v4918
    %v4957 = vpop.f32.mrf.mxu0
    %v4958 = vadd.f32 %v4902, %v4957
    %4959 = vdwg.mxu0
    %4960 = vmatpush.msra.mxu0 0.0
    %4961 = vmatpush.msra.mxu0 0.0
    %4962 = vmatpush.msra.mxu0 0.0
    %4963 = vmatpush.msra.mxu0 0.0
    %4964 = vmatpush.msra.mxu0 0.0
    %4965 = vmatpush.msra.mxu0 0.0
    %4966 = vmatpush.msra.mxu0 0.0
    %4967 = vmatpush.msra.mxu0 0.0
    %4968 = vmatpush.msra.mxu0 0.0
    %4969 = vmatpush.msra.mxu0 0.0
    %4970 = vmatpush.msra.mxu0 0.0
    %4971 = vmatpush.msra.mxu0 0.0
    %4972 = vmatpush.msra.mxu0 0.0
    %4973 = vmatpush.msra.mxu0 0.0
    %4974 = vmatpush.msra.mxu0 %v4893
    %4975 = vmatpush.msra.mxu0 %v4885
    %4976 = vmatmul.f32.gmra.mxu0 %v4918
    %v4977 = vpop.f32.mrf.mxu0
    %v4978 = vadd.f32 %v4903, %v4977
    %4979 = vdwg.mxu0
    %4980 = vmatpush.msra.mxu0 0.0
    %4981 = vmatpush.msra.mxu0 0.0
    %4982 = vmatpush.msra.mxu0 0.0
    %4983 = vmatpush.msra.mxu0 0.0
    %4984 = vmatpush.msra.mxu0 0.0
    %4985 = vmatpush.msra.mxu0 0.0
    %4986 = vmatpush.msra.mxu0 0.0
    %4987 = vmatpush.msra.mxu0 0.0
    %4988 = vmatpush.msra.mxu0 0.0
    %4989 = vmatpush.msra.mxu0 0.0
    %4990 = vmatpush.msra.mxu0 0.0
    %4991 = vmatpush.msra.mxu0 0.0
    %4992 = vmatpush.msra.mxu0 0.0
    %4993 = vmatpush.msra.mxu0 0.0
    %4994 = vmatpush.msra.mxu0 %v4894
    %4995 = vmatpush.msra.mxu0 %v4886
    %4996 = vmatmul.f32.gmra.mxu0 %v4918
    %v4997 = vpop.f32.mrf.mxu0
    %v4998 = vadd.f32 %v4904, %v4997
    %4999 = vdwg.mxu0
    %5000 = vmatpush.msra.mxu0 0.0
    %5001 = vmatpush.msra.mxu0 0.0
    %5002 = vmatpush.msra.mxu0 0.0
    %5003 = vmatpush.msra.mxu0 0.0
    %5004 = vmatpush.msra.mxu0 0.0
    %5005 = vmatpush.msra.mxu0 0.0
    %5006 = vmatpush.msra.mxu0 0.0
    %5007 = vmatpush.msra.mxu0 0.0
    %5008 = vmatpush.msra.mxu0 0.0
    %5009 = vmatpush.msra.mxu0 0.0
    %5010 = vmatpush.msra.mxu0 0.0
    %5011 = vmatpush.msra.mxu0 0.0
    %5012 = vmatpush.msra.mxu0 0.0
    %5013 = vmatpush.msra.mxu0 0.0
    %5014 = vmatpush.msra.mxu0 %v4895
    %5015 = vmatpush.msra.mxu0 %v4887
    %5016 = vmatmul.f32.gmra.mxu0 %v4918
    %v5017 = vpop.f32.mrf.mxu0
    %v5018 = vadd.f32 %v4905, %v5017
    %5019 = vdwg.mxu0
    %5020 = vmatpush.msra.mxu0 0.0
    %5021 = vmatpush.msra.mxu0 0.0
    %5022 = vmatpush.msra.mxu0 0.0
    %5023 = vmatpush.msra.mxu0 0.0
    %5024 = vmatpush.msra.mxu0 0.0
    %5025 = vmatpush.msra.mxu0 0.0
    %5026 = vmatpush.msra.mxu0 0.0
    %5027 = vmatpush.msra.mxu0 0.0
    %5028 = vmatpush.msra.mxu0 0.0
    %5029 = vmatpush.msra.mxu0 0.0
    %5030 = vmatpush.msra.mxu0 0.0
    %5031 = vmatpush.msra.mxu0 0.0
    %5032 = vmatpush.msra.mxu0 0.0
    %5033 = vmatpush.msra.mxu0 0.0
    %5034 = vmatpush.msra.mxu0 %v4896
    %5035 = vmatpush.msra.mxu0 %v4888
    %5036 = vmatmul.f32.gmra.mxu0 %v4918
    %v5037 = vpop.f32.mrf.mxu0
    %v5038 = vadd.f32 %v4906, %v5037
    %5039 = vdwg.mxu0
    %5040 = vmatpush.msra.mxu0 0.0
    %5041 = vmatpush.msra.mxu0 0.0
    %5042 = vmatpush.msra.mxu0 0.0
    %5043 = vmatpush.msra.mxu0 0.0
    %5044 = vmatpush.msra.mxu0 0.0
    %5045 = vmatpush.msra.mxu0 0.0
    %5046 = vmatpush.msra.mxu0 0.0
    %5047 = vmatpush.msra.mxu0 0.0
    %5048 = vmatpush.msra.mxu0 0.0
    %5049 = vmatpush.msra.mxu0 0.0
    %5050 = vmatpush.msra.mxu0 0.0
    %5051 = vmatpush.msra.mxu0 0.0
    %5052 = vmatpush.msra.mxu0 0.0
    %5053 = vmatpush.msra.mxu0 0.0
    %5054 = vmatpush.msra.mxu0 %v4897
    %5055 = vmatpush.msra.mxu0 %v4889
    %5056 = vmatmul.f32.gmra.mxu0 %v4918
    %v5057 = vpop.f32.mrf.mxu0
    %v5058 = vadd.f32 %v4907, %v5057
    %5059 = vdwg.mxu0
    %5060 = vmatpush.msra.mxu0 0.0
    %5061 = vmatpush.msra.mxu0 0.0
    %5062 = vmatpush.msra.mxu0 0.0
    %5063 = vmatpush.msra.mxu0 0.0
    %5064 = vmatpush.msra.mxu0 0.0
    %5065 = vmatpush.msra.mxu0 0.0
    %5066 = vmatpush.msra.mxu0 0.0
    %5067 = vmatpush.msra.mxu0 0.0
    %5068 = vmatpush.msra.mxu0 0.0
    %5069 = vmatpush.msra.mxu0 0.0
    %5070 = vmatpush.msra.mxu0 0.0
    %5071 = vmatpush.msra.mxu0 0.0
    %5072 = vmatpush.msra.mxu0 0.0
    %5073 = vmatpush.msra.mxu0 0.0
    %5074 = vmatpush.msra.mxu0 %v4898
    %5075 = vmatpush.msra.mxu0 %v4890
    %5076 = vmatmul.f32.gmra.mxu0 %v4918
    %v5077 = vpop.f32.mrf.mxu0
    %v5078 = vadd.f32 %v4908, %v5077
    %5079 = vdwg.mxu0
    %v5080 = vmax.f32 %v4938, 0.0
    %v5081 = vmax.f32 %v4958, 0.0
    %v5082 = vmax.f32 %v4978, 0.0
    %v5083 = vmax.f32 %v4998, 0.0
    %v5084 = vmax.f32 %v5018, 0.0
    %v5085 = vmax.f32 %v5038, 0.0
    %v5086 = vmax.f32 %v5058, 0.0
    %v5087 = vmax.f32 %v5078, 0.0
    %v5088 = vld [vmem:[%s43] sm:$0xff]
    %v5089 = vld [vmem:[%s43 + $0x8] sm:$0xff]
    %v5090 = vld [vmem:[%s43 + $0x10] sm:$0xff]
    %v5091 = vld [vmem:[%s43 + $0x18] sm:$0xff]
    %v5092 = vld [vmem:[%s43 + $0x20] sm:$0xff]
    %v5093 = vld [vmem:[%s43 + $0x28] sm:$0xff]
    %v5094 = vld [vmem:[%s43 + $0x30] sm:$0xff]
    %v5095 = vld [vmem:[%s43 + $0x38] sm:$0xff]
    %v5096 = vld [vmem:[%s43 + $0x40] sm:$0xff]
    %v5097 = vld [vmem:[%s43 + $0x48] sm:$0xff]
    %v5098 = vld [vmem:[%s43 + $0x50] sm:$0xff]
    %v5099 = vld [vmem:[%s43 + $0x58] sm:$0xff]
    %v5100 = vld [vmem:[%s43 + $0x60] sm:$0xff]
    %v5101 = vld [vmem:[%s43 + $0x68] sm:$0xff]
    %v5102 = vld [vmem:[%s43 + $0x70] sm:$0xff]
    %v5103 = vld [vmem:[%s43 + $0x78] sm:$0xff]
    %v5104 = vld [vmem:[%s43 + $0x80] sm:$0xff]
    %v5105 = vld [vmem:[%s43 + $0x88] sm:$0xff]
    %v5106 = vld [vmem:[%s43 + $0x90] sm:$0xff]
    %v5107 = vld [vmem:[%s43 + $0x98] sm:$0xff]
    %v5108 = vld [vmem:[%s43 + $0xa0] sm:$0xff]
    %v5109 = vld [vmem:[%s43 + $0xa8] sm:$0xff]
    %v5110 = vld [vmem:[%s43 + $0xb0] sm:$0xff]
    %v5111 = vld [vmem:[%s43 + $0xb8] sm:$0xff]
    %v5112 = vld [vmem:[%s43 + $0xc0] sm:$0xff]
    %v5113 = vld [vmem:[%s43 + $0xc8] sm:$0xff]
    %v5114 = vld [vmem:[%s43 + $0xd0] sm:$0xff]
    %v5115 = vld [vmem:[%s43 + $0xd8] sm:$0xff]
    %v5116 = vld [vmem:[%s43 + $0xe0] sm:$0xff]
    %v5117 = vld [vmem:[%s43 + $0xe8] sm:$0xff]
    %v5118 = vld [vmem:[%s43 + $0xf0] sm:$0xff]
    %v5119 = vld [vmem:[%s43 + $0xf8] sm:$0xff]
    %v5120 = vld [vmem:[%s43 + $0x100] sm:$0xff]
    %v5121 = vld [vmem:[%s43 + $0x108] sm:$0xff]
    %v5122 = vld [vmem:[%s43 + $0x110] sm:$0xff]
    %v5123 = vld [vmem:[%s43 + $0x118] sm:$0xff]
    %v5124 = vld [vmem:[%s43 + $0x120] sm:$0xff]
    %v5125 = vld [vmem:[%s43 + $0x128] sm:$0xff]
    %v5126 = vld [vmem:[%s43 + $0x130] sm:$0xff]
    %v5127 = vld [vmem:[%s43 + $0x138] sm:$0xff]
    %v5128 = vld [vmem:[%s43 + $0x140] sm:$0xff]
    %v5129 = vld [vmem:[%s43 + $0x148] sm:$0xff]
    %v5130 = vld [vmem:[%s43 + $0x150] sm:$0xff]
    %v5131 = vld [vmem:[%s43 + $0x158] sm:$0xff]
    %v5132 = vld [vmem:[%s43 + $0x160] sm:$0xff]
    %v5133 = vld [vmem:[%s43 + $0x168] sm:$0xff]
    %v5134 = vld [vmem:[%s43 + $0x170] sm:$0xff]
    %v5135 = vld [vmem:[%s43 + $0x178] sm:$0xff]
    %v5136 = vld [vmem:[%s43 + $0x180] sm:$0xff]
    %v5137 = vld [vmem:[%s43 + $0x188] sm:$0xff]
    %v5138 = vld [vmem:[%s43 + $0x190] sm:$0xff]
    %v5139 = vld [vmem:[%s43 + $0x198] sm:$0xff]
    %v5140 = vld [vmem:[%s43 + $0x1a0] sm:$0xff]
    %v5141 = vld [vmem:[%s43 + $0x1a8] sm:$0xff]
    %v5142 = vld [vmem:[%s43 + $0x1b0] sm:$0xff]
    %v5143 = vld [vmem:[%s43 + $0x1b8] sm:$0xff]
    %v5144 = vld [vmem:[%s43 + $0x1c0] sm:$0xff]
    %v5145 = vld [vmem:[%s43 + $0x1c8] sm:$0xff]
    %v5146 = vld [vmem:[%s43 + $0x1d0] sm:$0xff]
    %v5147 = vld [vmem:[%s43 + $0x1d8] sm:$0xff]
    %v5148 = vld [vmem:[%s43 + $0x1e0] sm:$0xff]
    %v5149 = vld [vmem:[%s43 + $0x1e8] sm:$0xff]
    %v5150 = vld [vmem:[%s43 + $0x1f0] sm:$0xff]
    %v5151 = vld [vmem:[%s43 + $0x1f8] sm:$0xff]
    %v5152 = vld [vmem:[%s43 + $0x200] sm:$0xff]
    %v5153 = vld [vmem:[%s43 + $0x208] sm:$0xff]
    %v5154 = vld [vmem:[%s43 + $0x210] sm:$0xff]
    %v5155 = vld [vmem:[%s43 + $0x218] sm:$0xff]
    %v5156 = vld [vmem:[%s43 + $0x220] sm:$0xff]
    %v5157 = vld [vmem:[%s43 + $0x228] sm:$0xff]
    %v5158 = vld [vmem:[%s43 + $0x230] sm:$0xff]
    %v5159 = vld [vmem:[%s43 + $0x238] sm:$0xff]
    %v5160 = vld [vmem:[%s43 + $0x240] sm:$0xff]
    %v5161 = vld [vmem:[%s43 + $0x248] sm:$0xff]
    %v5162 = vld [vmem:[%s43 + $0x250] sm:$0xff]
    %v5163 = vld [vmem:[%s43 + $0x258] sm:$0xff]
    %v5164 = vld [vmem:[%s43 + $0x260] sm:$0xff]
    %v5165 = vld [vmem:[%s43 + $0x268] sm:$0xff]
    %v5166 = vld [vmem:[%s43 + $0x270] sm:$0xff]
    %v5167 = vld [vmem:[%s43 + $0x278] sm:$0xff]
    %v5168 = vld [vmem:[%s43 + $0x280] sm:$0xff]
    %v5169 = vld [vmem:[%s43 + $0x288] sm:$0xff]
    %v5170 = vld [vmem:[%s43 + $0x290] sm:$0xff]
    %v5171 = vld [vmem:[%s43 + $0x298] sm:$0xff]
    %v5172 = vld [vmem:[%s43 + $0x2a0] sm:$0xff]
    %v5173 = vld [vmem:[%s43 + $0x2a8] sm:$0xff]
    %v5174 = vld [vmem:[%s43 + $0x2b0] sm:$0xff]
    %v5175 = vld [vmem:[%s43 + $0x2b8] sm:$0xff]
    %v5176 = vld [vmem:[%s43 + $0x2c0] sm:$0xff]
    %v5177 = vld [vmem:[%s43 + $0x2c8] sm:$0xff]
    %v5178 = vld [vmem:[%s43 + $0x2d0] sm:$0xff]
    %v5179 = vld [vmem:[%s43 + $0x2d8] sm:$0xff]
    %v5180 = vld [vmem:[%s43 + $0x2e0] sm:$0xff]
    %v5181 = vld [vmem:[%s43 + $0x2e8] sm:$0xff]
    %v5182 = vld [vmem:[%s43 + $0x2f0] sm:$0xff]
    %v5183 = vld [vmem:[%s43 + $0x2f8] sm:$0xff]
    %v5184 = vld [vmem:[%s43 + $0x300] sm:$0xff]
    %v5185 = vld [vmem:[%s43 + $0x308] sm:$0xff]
    %v5186 = vld [vmem:[%s43 + $0x310] sm:$0xff]
    %v5187 = vld [vmem:[%s43 + $0x318] sm:$0xff]
    %v5188 = vld [vmem:[%s43 + $0x320] sm:$0xff]
    %v5189 = vld [vmem:[%s43 + $0x328] sm:$0xff]
    %v5190 = vld [vmem:[%s43 + $0x330] sm:$0xff]
    %v5191 = vld [vmem:[%s43 + $0x338] sm:$0xff]
    %v5192 = vld [vmem:[%s43 + $0x340] sm:$0xff]
    %v5193 = vld [vmem:[%s43 + $0x348] sm:$0xff]
    %v5194 = vld [vmem:[%s43 + $0x350] sm:$0xff]
    %v5195 = vld [vmem:[%s43 + $0x358] sm:$0xff]
    %v5196 = vld [vmem:[%s43 + $0x360] sm:$0xff]
    %v5197 = vld [vmem:[%s43 + $0x368] sm:$0xff]
    %v5198 = vld [vmem:[%s43 + $0x370] sm:$0xff]
    %v5199 = vld [vmem:[%s43 + $0x378] sm:$0xff]
    %v5200 = vld [vmem:[%s43 + $0x380] sm:$0xff]
    %v5201 = vld [vmem:[%s43 + $0x388] sm:$0xff]
    %v5202 = vld [vmem:[%s43 + $0x390] sm:$0xff]
    %v5203 = vld [vmem:[%s43 + $0x398] sm:$0xff]
    %v5204 = vld [vmem:[%s43 + $0x3a0] sm:$0xff]
    %v5205 = vld [vmem:[%s43 + $0x3a8] sm:$0xff]
    %v5206 = vld [vmem:[%s43 + $0x3b0] sm:$0xff]
    %v5207 = vld [vmem:[%s43 + $0x3b8] sm:$0xff]
    %v5208 = vld [vmem:[%s43 + $0x3c0] sm:$0xff]
    %v5209 = vld [vmem:[%s43 + $0x3c8] sm:$0xff]
    %v5210 = vld [vmem:[%s43 + $0x3d0] sm:$0xff]
    %v5211 = vld [vmem:[%s43 + $0x3d8] sm:$0xff]
    %v5212 = vld [vmem:[%s43 + $0x3e0] sm:$0xff]
    %v5213 = vld [vmem:[%s43 + $0x3e8] sm:$0xff]
    %v5214 = vld [vmem:[%s43 + $0x3f0] sm:$0xff]
    %v5215 = vld [vmem:[%s43 + $0x3f8] sm:$0xff]
    %v5216 = vld [vmem:[%s45] sm:$0x1]
    %v5218 = vperm.slane %v5216, 0
    %5220 = vmatpush.msra.mxu0 %v5103
    %5221 = vmatpush.msra.mxu0 %v5102
    %5222 = vmatpush.msra.mxu0 %v5101
    %5223 = vmatpush.msra.mxu0 %v5100
    %5224 = vmatpush.msra.mxu0 %v5099
    %5225 = vmatpush.msra.mxu0 %v5098
    %5226 = vmatpush.msra.mxu0 %v5097
    %5227 = vmatpush.msra.mxu0 %v5096
    %5228 = vmatpush.msra.mxu0 %v5095
    %5229 = vmatpush.msra.mxu0 %v5094
    %5230 = vmatpush.msra.mxu0 %v5093
    %5231 = vmatpush.msra.mxu0 %v5092
    %5232 = vmatpush.msra.mxu0 %v5091
    %5233 = vmatpush.msra.mxu0 %v5090
    %5234 = vmatpush.msra.mxu0 %v5089
    %5235 = vmatpush.msra.mxu0 %v5088
    %5236 = vmatmul.f32.gmra.mxu0 %v5080
    %v5237 = vpop.f32.mrf.mxu0
    %v5238 = vadd.f32 %v5218, %v5237
    %5239 = vdwg.mxu0
    %5240 = vmatpush.msra.mxu0 %v5119
    %5241 = vmatpush.msra.mxu0 %v5118
    %5242 = vmatpush.msra.mxu0 %v5117
    %5243 = vmatpush.msra.mxu0 %v5116
    %5244 = vmatpush.msra.mxu0 %v5115
    %5245 = vmatpush.msra.mxu0 %v5114
    %5246 = vmatpush.msra.mxu0 %v5113
    %5247 = vmatpush.msra.mxu0 %v5112
    %5248 = vmatpush.msra.mxu0 %v5111
    %5249 = vmatpush.msra.mxu0 %v5110
    %5250 = vmatpush.msra.mxu0 %v5109
    %5251 = vmatpush.msra.mxu0 %v5108
    %5252 = vmatpush.msra.mxu0 %v5107
    %5253 = vmatpush.msra.mxu0 %v5106
    %5254 = vmatpush.msra.mxu0 %v5105
    %5255 = vmatpush.msra.mxu0 %v5104
    %5256 = vmatmul.f32.gmra.mxu0 %v5081
    %v5257 = vpop.f32.mrf.mxu0
    %v5258 = vadd.f32 %v5238, %v5257
    %5259 = vdwg.mxu0
    %5260 = vmatpush.msra.mxu0 %v5135
    %5261 = vmatpush.msra.mxu0 %v5134
    %5262 = vmatpush.msra.mxu0 %v5133
    %5263 = vmatpush.msra.mxu0 %v5132
    %5264 = vmatpush.msra.mxu0 %v5131
    %5265 = vmatpush.msra.mxu0 %v5130
    %5266 = vmatpush.msra.mxu0 %v5129
    %5267 = vmatpush.msra.mxu0 %v5128
    %5268 = vmatpush.msra.mxu0 %v5127
    %5269 = vmatpush.msra.mxu0 %v5126
    %5270 = vmatpush.msra.mxu0 %v5125
    %5271 = vmatpush.msra.mxu0 %v5124
    %5272 = vmatpush.msra.mxu0 %v5123
    %5273 = vmatpush.msra.mxu0 %v5122
    %5274 = vmatpush.msra.mxu0 %v5121
    %5275 = vmatpush.msra.mxu0 %v5120
    %5276 = vmatmul.f32.gmra.mxu0 %v5082
    %v5277 = vpop.f32.mrf.mxu0
    %v5278 = vadd.f32 %v5258, %v5277
    %5279 = vdwg.mxu0
    %5280 = vmatpush.msra.mxu0 %v5151
    %5281 = vmatpush.msra.mxu0 %v5150
    %5282 = vmatpush.msra.mxu0 %v5149
    %5283 = vmatpush.msra.mxu0 %v5148
    %5284 = vmatpush.msra.mxu0 %v5147
    %5285 = vmatpush.msra.mxu0 %v5146
    %5286 = vmatpush.msra.mxu0 %v5145
    %5287 = vmatpush.msra.mxu0 %v5144
    %5288 = vmatpush.msra.mxu0 %v5143
    %5289 = vmatpush.msra.mxu0 %v5142
    %5290 = vmatpush.msra.mxu0 %v5141
    %5291 = vmatpush.msra.mxu0 %v5140
    %5292 = vmatpush.msra.mxu0 %v5139
    %5293 = vmatpush.msra.mxu0 %v5138
    %5294 = vmatpush.msra.mxu0 %v5137
    %5295 = vmatpush.msra.mxu0 %v5136
    %5296 = vmatmul.f32.gmra.mxu0 %v5083
    %v5297 = vpop.f32.mrf.mxu0
    %v5298 = vadd.f32 %v5278, %v5297
    %5299 = vdwg.mxu0
    %5300 = vmatpush.msra.mxu0 %v5167
    %5301 = vmatpush.msra.mxu0 %v5166
    %5302 = vmatpush.msra.mxu0 %v5165
    %5303 = vmatpush.msra.mxu0 %v5164
    %5304 = vmatpush.msra.mxu0 %v5163
    %5305 = vmatpush.msra.mxu0 %v5162
    %5306 = vmatpush.msra.mxu0 %v5161
    %5307 = vmatpush.msra.mxu0 %v5160
    %5308 = vmatpush.msra.mxu0 %v5159
    %5309 = vmatpush.msra.mxu0 %v5158
    %5310 = vmatpush.msra.mxu0 %v5157
    %5311 = vmatpush.msra.mxu0 %v5156
    %5312 = vmatpush.msra.mxu0 %v5155
    %5313 = vmatpush.msra.mxu0 %v5154
    %5314 = vmatpush.msra.mxu0 %v5153
    %5315 = vmatpush.msra.mxu0 %v5152
    %5316 = vmatmul.f32.gmra.mxu0 %v5084
    %v5317 = vpop.f32.mrf.mxu0
    %v5318 = vadd.f32 %v5298, %v5317
    %5319 = vdwg.mxu0
    %5320 = vmatpush.msra.mxu0 %v5183
    %5321 = vmatpush.msra.mxu0 %v5182
    %5322 = vmatpush.msra.mxu0 %v5181
    %5323 = vmatpush.msra.mxu0 %v5180
    %5324 = vmatpush.msra.mxu0 %v5179
    %5325 = vmatpush.msra.mxu0 %v5178
    %5326 = vmatpush.msra.mxu0 %v5177
    %5327 = vmatpush.msra.mxu0 %v5176
    %5328 = vmatpush.msra.mxu0 %v5175
    %5329 = vmatpush.msra.mxu0 %v5174
    %5330 = vmatpush.msra.mxu0 %v5173
    %5331 = vmatpush.msra.mxu0 %v5172
    %5332 = vmatpush.msra.mxu0 %v5171
    %5333 = vmatpush.msra.mxu0 %v5170
    %5334 = vmatpush.msra.mxu0 %v5169
    %5335 = vmatpush.msra.mxu0 %v5168
    %5336 = vmatmul.f32.gmra.mxu0 %v5085
    %v5337 = vpop.f32.mrf.mxu0
    %v5338 = vadd.f32 %v5318, %v5337
    %5339 = vdwg.mxu0
    %5340 = vmatpush.msra.mxu0 %v5199
    %5341 = vmatpush.msra.mxu0 %v5198
    %5342 = vmatpush.msra.mxu0 %v5197
    %5343 = vmatpush.msra.mxu0 %v5196
    %5344 = vmatpush.msra.mxu0 %v5195
    %5345 = vmatpush.msra.mxu0 %v5194
    %5346 = vmatpush.msra.mxu0 %v5193
    %5347 = vmatpush.msra.mxu0 %v5192
    %5348 = vmatpush.msra.mxu0 %v5191
    %5349 = vmatpush.msra.mxu0 %v5190
    %5350 = vmatpush.msra.mxu0 %v5189
    %5351 = vmatpush.msra.mxu0 %v5188
    %5352 = vmatpush.msra.mxu0 %v5187
    %5353 = vmatpush.msra.mxu0 %v5186
    %5354 = vmatpush.msra.mxu0 %v5185
    %5355 = vmatpush.msra.mxu0 %v5184
    %5356 = vmatmul.f32.gmra.mxu0 %v5086
    %v5357 = vpop.f32.mrf.mxu0
    %v5358 = vadd.f32 %v5338, %v5357
    %5359 = vdwg.mxu0
    %5360 = vmatpush.msra.mxu0 %v5215
    %5361 = vmatpush.msra.mxu0 %v5214
    %5362 = vmatpush.msra.mxu0 %v5213
    %5363 = vmatpush.msra.mxu0 %v5212
    %5364 = vmatpush.msra.mxu0 %v5211
    %5365 = vmatpush.msra.mxu0 %v5210
    %5366 = vmatpush.msra.mxu0 %v5209
    %5367 = vmatpush.msra.mxu0 %v5208
    %5368 = vmatpush.msra.mxu0 %v5207
    %5369 = vmatpush.msra.mxu0 %v5206
    %5370 = vmatpush.msra.mxu0 %v5205
    %5371 = vmatpush.msra.mxu0 %v5204
    %5372 = vmatpush.msra.mxu0 %v5203
    %5373 = vmatpush.msra.mxu0 %v5202
    %5374 = vmatpush.msra.mxu0 %v5201
    %5375 = vmatpush.msra.mxu0 %v5200
    %5376 = vmatmul.f32.gmra.mxu0 %v5087
    %v5377 = vpop.f32.mrf.mxu0
    %v5378 = vadd.f32 %v5358, %v5377
    %5379 = vdwg.mxu0
    %v5380 = vtanh.pop %v5378
    %vm5381 = vcmask 254976
    %5382 = vst.msk [vmem:[%s59] sm:$0x3] %vm5381, %v5380
    %v5383 = vld [vmem:[%s47] sm:$0xff]
    %v5384 = vld [vmem:[%s47 + $0x8] sm:$0xff]
    %v5385 = vld [vmem:[%s49] sm:$0x1]
    %v5387 = vperm.slane %v5385, 0
    %5389 = vmatpush.msra.mxu0 0.0
    %5390 = vmatpush.msra.mxu0 0.0
    %5391 = vmatpush.msra.mxu0 0.0
    %5392 = vmatpush.msra.mxu0 0.0
    %5393 = vmatpush.msra.mxu0 0.0
    %5394 = vmatpush.msra.mxu0 0.0
    %5395 = vmatpush.msra.mxu0 0.0
    %5396 = vmatpush.msra.mxu0 0.0
    %5397 = vmatpush.msra.mxu0 0.0
    %5398 = vmatpush.msra.mxu0 0.0
    %5399 = vmatpush.msra.mxu0 0.0
    %5400 = vmatpush.msra.mxu0 0.0
    %5401 = vmatpush.msra.mxu0 0.0
    %5402 = vmatpush.msra.mxu0 0.0
    %5403 = vmatpush.msra.mxu0 %v5384
    %5404 = vmatpush.msra.mxu0 %v5383
    %5405 = vmatmul.f32.gmra.mxu0 %v4918
    %v5406 = vpop.f32.mrf.mxu0
    %v5407 = vadd.f32 %v5387, %v5406
    %5408 = vdwg.mxu0
    %v5409 = vmax.f32 %v5407, 0.0
    %v5410 = vld [vmem:[%s51] sm:$0xff]
    %v5411 = vld [vmem:[%s51 + $0x8] sm:$0xff]
    %v5412 = vld [vmem:[%s51 + $0x10] sm:$0xff]
    %v5413 = vld [vmem:[%s51 + $0x18] sm:$0xff]
    %v5414 = vld [vmem:[%s51 + $0x20] sm:$0xff]
    %v5415 = vld [vmem:[%s51 + $0x28] sm:$0xff]
    %v5416 = vld [vmem:[%s51 + $0x30] sm:$0xff]
    %v5417 = vld [vmem:[%s51 + $0x38] sm:$0xff]
    %v5418 = vld [vmem:[%s51 + $0x40] sm:$0xff]
    %v5419 = vld [vmem:[%s51 + $0x48] sm:$0xff]
    %v5420 = vld [vmem:[%s51 + $0x50] sm:$0xff]
    %v5421 = vld [vmem:[%s51 + $0x58] sm:$0xff]
    %v5422 = vld [vmem:[%s51 + $0x60] sm:$0xff]
    %v5423 = vld [vmem:[%s51 + $0x68] sm:$0xff]
    %v5424 = vld [vmem:[%s51 + $0x70] sm:$0xff]
    %v5425 = vld [vmem:[%s51 + $0x78] sm:$0xff]
    %v5426 = vld [vmem:[%s53] sm:$0x1]
    %v5428 = vperm.slane %v5426, 0
    %5430 = vmatpush.msra.mxu0 %v5425
    %5431 = vmatpush.msra.mxu0 %v5424
    %5432 = vmatpush.msra.mxu0 %v5423
    %5433 = vmatpush.msra.mxu0 %v5422
    %5434 = vmatpush.msra.mxu0 %v5421
    %5435 = vmatpush.msra.mxu0 %v5420
    %5436 = vmatpush.msra.mxu0 %v5419
    %5437 = vmatpush.msra.mxu0 %v5418
    %5438 = vmatpush.msra.mxu0 %v5417
    %5439 = vmatpush.msra.mxu0 %v5416
    %5440 = vmatpush.msra.mxu0 %v5415
    %5441 = vmatpush.msra.mxu0 %v5414
    %5442 = vmatpush.msra.mxu0 %v5413
    %5443 = vmatpush.msra.mxu0 %v5412
    %5444 = vmatpush.msra.mxu0 %v5411
    %5445 = vmatpush.msra.mxu0 %v5410
    %5446 = vmatmul.f32.gmra.mxu0 %v5409
    %v5447 = vpop.f32.mrf.mxu0
    %v5448 = vadd.f32 %v5428, %v5447
    %5449 = vdwg.mxu0
    %v5450 = vxor.u32 %v5448, 2147483648
    %v5451 = vmul.f32 %v5450, 1.442695
    %v5452 = vpow.pop %v5451
    %v5453 = vadd.f32 %v5452, 1.0
    %v5454 = vrcp.pop %v5453
    %v5455 = vmul.f32 %v5453, %v5454
    %v5456 = vsub.f32 1.0, %v5455
    %v5457 = vmul.f32 %v5454, %v5456
    %v5458 = vadd.f32 %v5454, %v5457
    %vm5459 = vweird.f32 %v5453
    %vm5460 = vweird.f32 %v5454
    %vm5461 = vmor %vm5459, %vm5460
    %v5462 = vsel %vm5461, %v5454, %v5458
    %v5463 = vand.u32 2147483647, %v5453
    %vm5464 = vcmp.eq.f32.partialorder %v5463, 8.507059e+37
    %v5465 = vand.u32 %v5453, 2147483648
    %v5466 = vor.u32 1.1754944e-38, %v5465
    %v5467 = vsel %vm5464, %v5466, %v5462
    %v5468 = vmul.f32 1.0, %v5467
    %vm5469 = vcmask 25600
    %5470 = vst.msk [vmem:[#allocation6] sm:$0x3] %vm5469, %v5468
    // Predicated region
    $region110: #{vae_forward.1} parent=1 // pred_check
      _
    $region111: #{vae_forward.1} parent=1 // pred_check_branch
      %5472 = sbr.rel (0) target = $region113
    $region112: #{vae_forward.1} parent=1 // pred_region
      %5474 = vsyncadd [#allocation3], 0
      %s5476 = sshll.u32 [#allocation2], 4
      %s5477 = int_to_ptr.vmem [resolvable:$true] %s5476
      %s5478 = sshll.u32 %s55, 4
      %s5479 = int_to_ptr.hbm [resolvable:$true] %s5478
      %5481 = dma.vmem_to_hbm [thread:$0]  %s5477, 32, %s5479, [#allocation3]
    $region113: #{vae_forward.1} parent=1 // pred_fallthru
      _
    // Predicated region
    $region114: #{vae_forward.1} parent=1 // pred_check
      _
    $region115: #{vae_forward.1} parent=1 // pred_check_branch
      %5483 = sbr.rel (0) target = $region117
    $region116: #{vae_forward.1} parent=1 // pred_region
      %5485 = vsyncadd [#allocation5], 0
      %s5487 = sshll.u32 [#allocation4], 4
      %s5488 = int_to_ptr.vmem [resolvable:$true] %s5487
      %s5489 = sshll.u32 %s57, 4
      %s5490 = int_to_ptr.hbm [resolvable:$true] %s5489
      %5492 = dma.vmem_to_hbm [thread:$0]  %s5488, 32, %s5490, [#allocation5]
    $region117: #{vae_forward.1} parent=1 // pred_fallthru
      _
    // Predicated region
    $region118: #{vae_forward.1} parent=1 // pred_check
      _
    $region119: #{vae_forward.1} parent=1 // pred_check_branch
      %5494 = sbr.rel (0) target = $region121
    $region120: #{vae_forward.1} parent=1 // pred_region
      _
    $region121: #{vae_forward.1} parent=1 // pred_fallthru
      _
    // Predicated region
    $region122: #{vae_forward.1} parent=1 // pred_check
      _
    $region123: #{vae_forward.1} parent=1 // pred_check_branch
      %5496 = sbr.rel (0) target = $region125
    $region124: #{vae_forward.1} parent=1 // pred_region
      %5498 = vsyncadd [#allocation5], 0
      %s5500 = sshll.u32 [#allocation6], 4
      %s5501 = int_to_ptr.vmem [resolvable:$true] %s5500
      %s5502 = sshll.u32 %s61, 4
      %s5503 = int_to_ptr.hbm [resolvable:$true] %s5502
      %5505 = dma.vmem_to_hbm [thread:$0]  %s5501, 32, %s5503, [#allocation5]
    $region125: #{vae_forward.1} parent=1 // pred_fallthru
      _
    // Predicated region
    $region126: #{vae_forward.1} parent=1 // pred_check
      _
    $region127: #{vae_forward.1} parent=1 // pred_check_branch
      %5507 = sbr.rel (0) target = $region129
    $region128: #{vae_forward.1} parent=1 // pred_region
      %5509 = dma.done [#allocation3], 32
    $region129: #{vae_forward.1} parent=1 // pred_fallthru
      _
    // Predicated region
    $region130: #{vae_forward.1} parent=1 // pred_check
      _
    $region131: #{vae_forward.1} parent=1 // pred_check_branch
      %5511 = sbr.rel (0) target = $region133
    $region132: #{vae_forward.1} parent=1 // pred_region
      %5513 = dma.done [#allocation5], 32
    $region133: #{vae_forward.1} parent=1 // pred_fallthru
      _
    // Predicated region
    $region134: #{vae_forward.1} parent=1 // pred_check
      _
    $region135: #{vae_forward.1} parent=1 // pred_check_branch
      %5515 = sbr.rel (0) target = $region137
    $region136: #{vae_forward.1} parent=1 // pred_region
      _
    $region137: #{vae_forward.1} parent=1 // pred_fallthru
      _
    // Predicated region
    $region138: #{vae_forward.1} parent=1 // pred_check
      _
    $region139: #{vae_forward.1} parent=1 // pred_check_branch
      %5517 = sbr.rel (0) target = $region141
    $region140: #{vae_forward.1} parent=1 // pred_region
      %5519 = dma.done [#allocation5], 32
    $region141: #{vae_forward.1} parent=1 // pred_fallthru
      _
    %5520 = vsyncpa [#allocation3], 1
    %5521 = vsyncpa [#allocation5], 1

</llo_original>
